<compile_context>
chip_gen: v7x
topology: tpu7x:2x2x1
jax: 0.10.0
libtpu: 0.0.40
codegen_flags: <defaults>
</compile_context>

<pallas_src>
import functools

import jax
import jax.numpy as jnp
from jax.experimental import pallas as pl
from jax.experimental.pallas import tpu as pltpu


# --------------------------------------------------------------------------
# 2->1 KxK cross-correlation on a row-padded plane, as banded MXU matmuls.
#   pad_ref : (2, pad_top + R + p, S) VMEM scratch; rows [pad_top, pad_top+R) hold the
#             pooled map, the p rows just above/below are zero.
#   band_ref: (2*K, S, S) banded weight matrices (column zero-padding folded in).
# out[r, s] = bias + sum_{ch, a} (pad[ch, pad_top-p+a : pad_top-p+a+R, :] @ band[ch*K+a])[r, s]
# --------------------------------------------------------------------------
def _conv_gate(pad_ref, band_ref, bias, R, S, K, pad_top):
    p = (K - 1) // 2
    acc = jnp.full((R, S), bias, dtype=jnp.float32)
    for ch in range(2):
        for a in range(K):
            r0 = pad_top - p + a
            band = pad_ref[ch, r0:r0 + R, :]                     # (R, S) static slice
            acc = acc + jnp.dot(band, band_ref[ch * K + a],
                                preferred_element_type=jnp.float32)
    return acc


# --------------------------------------------------------------------------
# Fused TripletAttention kernel (one batch element per grid step).
#   out[c,h,w] = x[c,h,w] * ( sig(conv_gs(pool_C))[h,w]
#                           + sig(conv_gh(pool_H))[c,w]
#                           + sig(conv_gw(pool_W))[h,c] ) / 3
# --------------------------------------------------------------------------
def _triplet_attention_kernel(x_ref, bgh_ref, bgw_ref, bgs_ref, b_ref, o_ref,
                              pad_gh, pad_gw, pad_gs, *, K, CT, num_tiles, pad_top):
    _, C, H, W = x_ref.shape
    p = (K - 1) // 2
    f32 = jnp.float32

    # ---- zero only the border strips of the row-padded conv planes (interiors are
    #      fully overwritten below; re-zeroed each step so megacore partitioning stays safe).
    pad_gh[:, pad_top - p:pad_top, :] = jnp.zeros((2, p, W), f32)
    pad_gh[:, pad_top + C:pad_top + C + p, :] = jnp.zeros((2, p, W), f32)
    pad_gw[:, pad_top - p:pad_top, :] = jnp.zeros((2, p, H), f32)
    pad_gw[:, pad_top + C:pad_top + C + p, :] = jnp.zeros((2, p, H), f32)
    pad_gs[:, pad_top - p:pad_top, :] = jnp.zeros((2, p, W), f32)
    pad_gs[:, pad_top + H:pad_top + H + p, :] = jnp.zeros((2, p, W), f32)

    # ---- pass 1: ChannelPool for the three branches, one channel tile at a time.
    def pool_tile(i, carry):
        run_max, run_sum = carry
        c0 = pl.multiple_of(i * CT, CT)
        xt = x_ref[0, pl.ds(c0, CT)]                              # (CT, H, W)
        # SpatialGate branch: running pool over C.
        run_max = jnp.maximum(run_max, jnp.max(xt, axis=0))
        run_sum = run_sum + jnp.sum(xt, axis=0)
        # ChannelGateH branch: pool over H -> rows of the (C, W) plane (lane-dense block store).
        pad_gh[0, pl.ds(pad_top + c0, CT), :] = jnp.max(xt, axis=1)
        pad_gh[1, pl.ds(pad_top + c0, CT), :] = jnp.mean(xt, axis=1)
        # ChannelGateW branch: pool over W, kept TRANSPOSED as rows of a (C, H) plane
        # (eliminates the (H,1) single-lane column scatters).
        pad_gw[0, pl.ds(pad_top + c0, CT), :] = jnp.max(xt, axis=2)
        pad_gw[1, pl.ds(pad_top + c0, CT), :] = jnp.mean(xt, axis=2)
        return run_max, run_sum

    init = (jnp.full((H, W), -jnp.inf, f32), jnp.zeros((H, W), f32))
    run_max, run_sum = jax.lax.fori_loop(0, num_tiles, pool_tile, init,
                                         unroll=min(8, num_tiles))
    pad_gs[0, pad_top:pad_top + H, :] = run_max
    pad_gs[1, pad_top:pad_top + H, :] = run_sum * f32(1.0 / C)

    # ---- small 2->1 KxK convs (eval-mode BN folded) as banded MXU matmuls + sigmoid.
    third = f32(1.0 / 3.0)
    s_gh3 = jax.nn.sigmoid(_conv_gate(pad_gh, bgh_ref, b_ref[0], C, W, K, pad_top)) * third   # (C, W)
    s_gwT3 = jax.nn.sigmoid(_conv_gate(pad_gw, bgw_ref, b_ref[1], C, H, K, pad_top)) * third  # (C, H)
    s_gs3 = jax.nn.sigmoid(_conv_gate(pad_gs, bgs_ref, b_ref[2], H, W, K, pad_top)) * third   # (H, W)

    # Re-orient the ChannelGateW scale (C, H) -> (H, C) ONCE on the MXU
    # (identity @ rhs^T, i.e. a transposed-rhs dot), instead of per-channel lane work.
    rows = jax.lax.broadcasted_iota(jnp.int32, (H, H), 0)
    cols = jax.lax.broadcasted_iota(jnp.int32, (H, H), 1)
    eye_h = (rows == cols).astype(f32)
    s_gw3 = jax.lax.dot_general(eye_h, s_gwT3, (((1,), (1,)), ((), ())),
                                preferred_element_type=f32)        # (H, C)

    # ---- pass 2: rescale + 1/3 average (full-slab stores per channel).
    # TODO(synk): tile over channels + lane-dense (B, C, H*W) output layout for production sizes.
    for c in range(C):
        xc = x_ref[0, c]                                           # (H, W)
        o_ref[0, c] = xc * (s_gs3 + s_gh3[c:c + 1, :] + s_gw3[:, c:c + 1])


def triplet_attention(x, params, K=7):
    B, C, H, W = x.shape
    p = (K - 1) // 2
    assert p <= 8, "kernel assumes K <= 17"
    pad_top = 8                                   # aligned top padding (>= p)
    CT = 8 if C % 8 == 0 else C                   # channel tile for pass 1
    num_tiles = C // CT

    # Banded weight matrices: M[ch*K + a][j, s] = w_eff[ch, a, j - s + p] (0 elsewhere),
    # so  band_rows @ M  == the KxK conv with column zero-padding folded in.
    def banded(w_flat, S, transpose_spatial=False):
        w = w_flat.reshape(2, K, K).astype(jnp.float32)
        if transpose_spatial:
            w = jnp.transpose(w, (0, 2, 1))
        j = jnp.arange(S)[:, None]
        s = jnp.arange(S)[None, :]
        tap = j - s + p
        valid = ((tap >= 0) & (tap < K)).astype(jnp.float32)
        m = w[:, :, jnp.clip(tap, 0, K - 1)] * valid[None, None]
        return m.reshape(2 * K, S, S)

    band_gh = banded(params["gh_w"], W)                               # (C, W) plane
    band_gw = banded(params["gw_w"], H, transpose_spatial=True)       # transposed (C, H) plane
    band_gs = banded(params["gs_w"], W)                               # (H, W) plane
    bias = jnp.concatenate([params["gh_b"], params["gw_b"], params["gs_b"]])  # (3,)

    # Explicit VMEM budget (review item): double-buffered in/out blocks + planes + bands.
    blk = C * H * W * 4
    planes = 4 * 2 * ((pad_top + C + p) * W + (pad_top + C + p) * H + (pad_top + H + p) * W)
    bands = 4 * 2 * K * (2 * W * W + H * H)
    vmem_limit = max(32 << 20, min(int(4 * blk + 2 * bands + planes + (4 << 20)), 96 << 20))

    cost = pl.CostEstimate(
        flops=int(2 * B * 2 * K * (C * W * W + C * H * H + H * W * W) + 12 * B * C * H * W),
        transcendentals=int(B * (C * W + C * H + H * W)),
        bytes_accessed=int(4 * (2 * B * C * H * W + 2 * K * (2 * W * W + H * H) + 3)),
    )

    return pl.pallas_call(
        functools.partial(_triplet_attention_kernel, K=K, CT=CT,
                          num_tiles=num_tiles, pad_top=pad_top),
        out_shape=jax.ShapeDtypeStruct((B, C, H, W), jnp.float32),
        grid_spec=pltpu.PrefetchScalarGridSpec(
            num_scalar_prefetch=0,
            grid=(B,),
            in_specs=[
                pl.BlockSpec((1, C, H, W), lambda b: (b, 0, 0, 0)),          # x
                pl.BlockSpec((2 * K, W, W), lambda b: (0, 0, 0)),            # gh banded weights
                pl.BlockSpec((2 * K, H, H), lambda b: (0, 0, 0)),            # gw banded weights (transposed)
                pl.BlockSpec((2 * K, W, W), lambda b: (0, 0, 0)),            # gs banded weights
                pl.BlockSpec(memory_space=pltpu.MemorySpace.SMEM),           # folded biases (3,)
            ],
            out_specs=pl.BlockSpec((1, C, H, W), lambda b: (b, 0, 0, 0)),
            scratch_shapes=[
                pltpu.VMEM((2, pad_top + C + p, W), jnp.float32),  # ChannelGateH plane (C, W)
                pltpu.VMEM((2, pad_top + C + p, H), jnp.float32),  # ChannelGateW plane (C, H) transposed
                pltpu.VMEM((2, pad_top + H + p, W), jnp.float32),  # SpatialGate  plane (H, W)
            ],
        ),
        compiler_params=pltpu.CompilerParams(
            dimension_semantics=("parallel",),
            vmem_limit_bytes=vmem_limit,
        ),
        cost_estimate=cost,
        input_output_aliases={0: 0},   # output is a pure rescale of x; per-step blocks disjoint
    )(x, band_gh, band_gw, band_gs, bias)


# --------------------------------------------------------------------------
# Deterministic parameters: Conv2d(2->1, KxK, bias=False) + eval-mode BatchNorm
# folded into a flat weight vector and a scalar bias per gate.
# --------------------------------------------------------------------------
def make_params(key, K=7):
    def gate_params(k):
        k1, k2, k3 = jax.random.split(k, 3)
        conv_w = jax.random.normal(k1, (2, K, K), jnp.float32) * 0.2
        gamma = 1.0 + 0.1 * jax.random.normal(k2, (1,), jnp.float32)
        beta = 0.1 * jax.random.normal(k3, (1,), jnp.float32)
        running_mean = jnp.zeros((1,), jnp.float32)
        running_var = jnp.ones((1,), jnp.float32)
        s = gamma / jnp.sqrt(running_var + 1e-5)                 # fold eval-mode BN
        return (conv_w * s).reshape(-1), beta - running_mean * s

    kh, kw, ks = jax.random.split(key, 3)
    gh_w, gh_b = gate_params(kh)
    gw_w, gw_b = gate_params(kw)
    gs_w, gs_b = gate_params(ks)
    return dict(gh_w=gh_w, gh_b=gh_b, gw_w=gw_w, gw_b=gw_b, gs_w=gs_w, gs_b=gs_b)


# --------------------------------------------------------------------------
# Pure-JAX reference (mirrors TripletAttention.forward, no_spatial=False).
# --------------------------------------------------------------------------
def reference(x, params, K=7):
    p = (K - 1) // 2

    def gate(t, w_flat, b):
        w = w_flat.reshape(1, 2, K, K)
        comp = jnp.stack([jnp.max(t, axis=1), jnp.mean(t, axis=1)], axis=1)
        conv = jax.lax.conv_general_dilated(
            comp, w, (1, 1), [(p, p), (p, p)],
            dimension_numbers=("NCHW", "OIHW", "NCHW"),
            precision=jax.lax.Precision.HIGHEST)
        return t * jax.nn.sigmoid(conv + b.reshape(1, 1, 1, 1))

    o11 = jnp.transpose(
        gate(jnp.transpose(x, (0, 2, 1, 3)), params["gh_w"], params["gh_b"]),
        (0, 2, 1, 3))
    o21 = jnp.transpose(
        gate(jnp.transpose(x, (0, 3, 2, 1)), params["gw_w"], params["gw_b"]),
        (0, 3, 2, 1))
    o3 = gate(x, params["gs_w"], params["gs_b"])
    return (o3 + o11 + o21) / 3.0


if __name__ == "__main__":
    B, C, H, W, K = 2, 4, 16, 16, 7

    key = jax.random.PRNGKey(0)
    kx, kp = jax.random.split(key)
    x = jax.random.normal(kx, (B, C, H, W), jnp.float32)
    params = make_params(kp, K)

    # Reference is computed before the (input-aliased) kernel call.
    ref = reference(x, params, K)

    out = triplet_attention(x, params, K)
    out = jax.block_until_ready(out)

    assert out.shape == (B, C, H, W)
    assert bool(jnp.allclose(out, ref, rtol=1e-3, atol=1e-3)), "mismatch vs reference"

    print("KERNEL_OK")
</pallas_src>

<mosaic_0001>
module attributes {stable_mosaic.version = 11 : i64} {
  func.func @_triplet_attention_kernel(%arg0: i32, %arg1: memref<1x4x16x16xf32, #tpu.memory_space<vmem>>, %arg2: memref<14x16x16xf32, #tpu.memory_space<vmem>>, %arg3: memref<14x16x16xf32, #tpu.memory_space<vmem>>, %arg4: memref<14x16x16xf32, #tpu.memory_space<vmem>>, %arg5: memref<3xf32, #tpu.memory_space<smem>>, %arg6: memref<1x4x16x16xf32, #tpu.memory_space<vmem>>, %arg7: memref<2x15x16xf32, #tpu.memory_space<vmem>>, %arg8: memref<2x15x16xf32, #tpu.memory_space<vmem>>, %arg9: memref<2x27x16xf32, #tpu.memory_space<vmem>>) attributes {dimension_semantics = [#tpu.dimension_semantics<parallel>], iteration_bounds = array<i64: 2>, scalar_prefetch = 0 : i64, scratch_operands = 3 : i64, tpu.core_type = #tpu.core_type<tc>, window_params = [{transform_indices = @transform_0, window_bounds = array<i64: 1, 4, 16, 16>}, {pipeline_mode = #tpu.pipeline_mode<synchronous>, transform_indices = @transform_1, window_bounds = array<i64: 14, 16, 16>}, {pipeline_mode = #tpu.pipeline_mode<synchronous>, transform_indices = @transform_2, window_bounds = array<i64: 14, 16, 16>}, {pipeline_mode = #tpu.pipeline_mode<synchronous>, transform_indices = @transform_3, window_bounds = array<i64: 14, 16, 16>}, {transform_indices = @transform_4, window_bounds = array<i64: 3>}, {transform_indices = @transform_5, window_bounds = array<i64: 1, 4, 16, 16>}]} {
    %cst = arith.constant 0.000000e+00 : f32
    %0 = vector.broadcast %cst : f32 to vector<2x3x16xf32>
    %c0 = arith.constant 0 : index
    %c5 = arith.constant 5 : index
    %c0_0 = arith.constant 0 : index
    %1 = vector.load %arg7[%c0, %c5, %c0_0] : memref<2x15x16xf32, #tpu.memory_space<vmem>>, vector<2x3x16xf32>
    tpu.vector_store %arg7[%c0, %c5, %c0_0], %0 {strides = array<i32>} : memref<2x15x16xf32, #tpu.memory_space<vmem>>, vector<2x3x16xf32>,
    %cst_1 = arith.constant 0.000000e+00 : f32
    %2 = vector.broadcast %cst_1 : f32 to vector<2x3x16xf32>
    %c0_2 = arith.constant 0 : index
    %c12 = arith.constant 12 : index
    %c0_3 = arith.constant 0 : index
    %3 = vector.load %arg7[%c0_2, %c12, %c0_3] : memref<2x15x16xf32, #tpu.memory_space<vmem>>, vector<2x3x16xf32>
    tpu.vector_store %arg7[%c0_2, %c12, %c0_3], %2 {strides = array<i32>} : memref<2x15x16xf32, #tpu.memory_space<vmem>>, vector<2x3x16xf32>,
    %cst_4 = arith.constant 0.000000e+00 : f32
    %4 = vector.broadcast %cst_4 : f32 to vector<2x3x16xf32>
    %c0_5 = arith.constant 0 : index
    %c5_6 = arith.constant 5 : index
    %c0_7 = arith.constant 0 : index
    %5 = vector.load %arg8[%c0_5, %c5_6, %c0_7] : memref<2x15x16xf32, #tpu.memory_space<vmem>>, vector<2x3x16xf32>
    tpu.vector_store %arg8[%c0_5, %c5_6, %c0_7], %4 {strides = array<i32>} : memref<2x15x16xf32, #tpu.memory_space<vmem>>, vector<2x3x16xf32>,
    %cst_8 = arith.constant 0.000000e+00 : f32
    %6 = vector.broadcast %cst_8 : f32 to vector<2x3x16xf32>
    %c0_9 = arith.constant 0 : index
    %c12_10 = arith.constant 12 : index
    %c0_11 = arith.constant 0 : index
    %7 = vector.load %arg8[%c0_9, %c12_10, %c0_11] : memref<2x15x16xf32, #tpu.memory_space<vmem>>, vector<2x3x16xf32>
    tpu.vector_store %arg8[%c0_9, %c12_10, %c0_11], %6 {strides = array<i32>} : memref<2x15x16xf32, #tpu.memory_space<vmem>>, vector<2x3x16xf32>,
    %cst_12 = arith.constant 0.000000e+00 : f32
    %8 = vector.broadcast %cst_12 : f32 to vector<2x3x16xf32>
    %c0_13 = arith.constant 0 : index
    %c5_14 = arith.constant 5 : index
    %c0_15 = arith.constant 0 : index
    %9 = vector.load %arg9[%c0_13, %c5_14, %c0_15] : memref<2x27x16xf32, #tpu.memory_space<vmem>>, vector<2x3x16xf32>
    tpu.vector_store %arg9[%c0_13, %c5_14, %c0_15], %8 {strides = array<i32>} : memref<2x27x16xf32, #tpu.memory_space<vmem>>, vector<2x3x16xf32>,
    %cst_16 = arith.constant 0.000000e+00 : f32
    %10 = vector.broadcast %cst_16 : f32 to vector<2x3x16xf32>
    %c0_17 = arith.constant 0 : index
    %c24 = arith.constant 24 : index
    %c0_18 = arith.constant 0 : index
    %11 = vector.load %arg9[%c0_17, %c24, %c0_18] : memref<2x27x16xf32, #tpu.memory_space<vmem>>, vector<2x3x16xf32>
    tpu.vector_store %arg9[%c0_17, %c24, %c0_18], %10 {strides = array<i32>} : memref<2x27x16xf32, #tpu.memory_space<vmem>>, vector<2x3x16xf32>,
    %cst_19 = arith.constant 0xFF800000 : f32
    %12 = vector.broadcast %cst_19 : f32 to vector<16x16xf32>
    %cst_20 = arith.constant 0.000000e+00 : f32
    %13 = vector.broadcast %cst_20 : f32 to vector<16x16xf32>
    %c0_i32 = arith.constant 0 : i32
    %c4_i32 = arith.constant 4 : i32
    %14 = arith.muli %c0_i32, %c4_i32 : i32
    %15 = tpu.assume_multiple %14, 4 : i32
    %c0_21 = arith.constant 0 : index
    %16 = arith.index_cast %15 : i32 to index
    %c0_22 = arith.constant 0 : index
    %c0_23 = arith.constant 0 : index
    %17 = vector.load %arg1[%c0_21, %16, %c0_22, %c0_23] : memref<1x4x16x16xf32, #tpu.memory_space<vmem>>, vector<1x4x16x16xf32>
    %18 = vector.shape_cast %17 : vector<1x4x16x16xf32> to vector<4x16x16xf32>
    %cst_24 = arith.constant dense<0xFF800000> : vector<16x16xf32>
    %19 = vector.multi_reduction <maximumf>, %18, %cst_24 [0] : vector<4x16x16xf32> to vector<16x16xf32>
    %20 = arith.maximumf %12, %19 : vector<16x16xf32>
    %cst_25 = arith.constant dense<0.000000e+00> : vector<16x16xf32>
    %21 = vector.multi_reduction <add>, %18, %cst_25 [0] : vector<4x16x16xf32> to vector<16x16xf32>
    %22 = arith.addf %13, %21 : vector<16x16xf32>
    %cst_26 = arith.constant dense<0xFF800000> : vector<4x16xf32>
    %23 = vector.multi_reduction <maximumf>, %18, %cst_26 [1] : vector<4x16x16xf32> to vector<4x16xf32>
    %c8_i32 = arith.constant 8 : i32
    %24 = arith.addi %c8_i32, %15 : i32
    %c0_27 = arith.constant 0 : index
    %25 = arith.index_cast %24 : i32 to index
    %c0_28 = arith.constant 0 : index
    %26 = vector.load %arg7[%c0_27, %25, %c0_28] : memref<2x15x16xf32, #tpu.memory_space<vmem>>, vector<1x4x16xf32>
    %27 = vector.shape_cast %26 : vector<1x4x16xf32> to vector<4x16xf32>
    %28 = vector.shape_cast %23 : vector<4x16xf32> to vector<1x4x16xf32>
    tpu.vector_store %arg7[%c0_27, %25, %c0_28], %28 {strides = array<i32>} : memref<2x15x16xf32, #tpu.memory_space<vmem>>, vector<1x4x16xf32>,
    %cst_29 = arith.constant dense<0.000000e+00> : vector<4x16xf32>
    %29 = vector.multi_reduction <add>, %18, %cst_29 [1] : vector<4x16x16xf32> to vector<4x16xf32>
    %cst_30 = arith.constant 1.600000e+01 : f32
    %30 = vector.broadcast %cst_30 : f32 to vector<4x16xf32>
    %31 = arith.divf %29, %30 : vector<4x16xf32>
    %c8_i32_31 = arith.constant 8 : i32
    %32 = arith.addi %c8_i32_31, %15 : i32
    %c1 = arith.constant 1 : index
    %33 = arith.index_cast %32 : i32 to index
    %c0_32 = arith.constant 0 : index
    %34 = vector.load %arg7[%c1, %33, %c0_32] : memref<2x15x16xf32, #tpu.memory_space<vmem>>, vector<1x4x16xf32>
    %35 = vector.shape_cast %34 : vector<1x4x16xf32> to vector<4x16xf32>
    %36 = vector.shape_cast %31 : vector<4x16xf32> to vector<1x4x16xf32>
    tpu.vector_store %arg7[%c1, %33, %c0_32], %36 {strides = array<i32>} : memref<2x15x16xf32, #tpu.memory_space<vmem>>, vector<1x4x16xf32>,
    %cst_33 = arith.constant dense<0xFF800000> : vector<4x16xf32>
    %37 = vector.multi_reduction <maximumf>, %18, %cst_33 [2] : vector<4x16x16xf32> to vector<4x16xf32>
    %c8_i32_34 = arith.constant 8 : i32
    %38 = arith.addi %c8_i32_34, %15 : i32
    %c0_35 = arith.constant 0 : index
    %39 = arith.index_cast %38 : i32 to index
    %c0_36 = arith.constant 0 : index
    %40 = vector.load %arg8[%c0_35, %39, %c0_36] : memref<2x15x16xf32, #tpu.memory_space<vmem>>, vector<1x4x16xf32>
    %41 = vector.shape_cast %40 : vector<1x4x16xf32> to vector<4x16xf32>
    %42 = vector.shape_cast %37 : vector<4x16xf32> to vector<1x4x16xf32>
    tpu.vector_store %arg8[%c0_35, %39, %c0_36], %42 {strides = array<i32>} : memref<2x15x16xf32, #tpu.memory_space<vmem>>, vector<1x4x16xf32>,
    %cst_37 = arith.constant dense<0.000000e+00> : vector<4x16xf32>
    %43 = vector.multi_reduction <add>, %18, %cst_37 [2] : vector<4x16x16xf32> to vector<4x16xf32>
    %cst_38 = arith.constant 1.600000e+01 : f32
    %44 = vector.broadcast %cst_38 : f32 to vector<4x16xf32>
    %45 = arith.divf %43, %44 : vector<4x16xf32>
    %c8_i32_39 = arith.constant 8 : i32
    %46 = arith.addi %c8_i32_39, %15 : i32
    %c1_40 = arith.constant 1 : index
    %47 = arith.index_cast %46 : i32 to index
    %c0_41 = arith.constant 0 : index
    %48 = vector.load %arg8[%c1_40, %47, %c0_41] : memref<2x15x16xf32, #tpu.memory_space<vmem>>, vector<1x4x16xf32>
    %49 = vector.shape_cast %48 : vector<1x4x16xf32> to vector<4x16xf32>
    %50 = vector.shape_cast %45 : vector<4x16xf32> to vector<1x4x16xf32>
    tpu.vector_store %arg8[%c1_40, %47, %c0_41], %50 {strides = array<i32>} : memref<2x15x16xf32, #tpu.memory_space<vmem>>, vector<1x4x16xf32>,
    %c1_i32 = arith.constant 1 : i32
    %c0_42 = arith.constant 0 : index
    %c8 = arith.constant 8 : index
    %c0_43 = arith.constant 0 : index
    %51 = vector.load %arg9[%c0_42, %c8, %c0_43] : memref<2x27x16xf32, #tpu.memory_space<vmem>>, vector<1x16x16xf32>
    %52 = vector.shape_cast %51 : vector<1x16x16xf32> to vector<16x16xf32>
    %53 = vector.shape_cast %20 : vector<16x16xf32> to vector<1x16x16xf32>
    tpu.vector_store %arg9[%c0_42, %c8, %c0_43], %53 {strides = array<i32>} : memref<2x27x16xf32, #tpu.memory_space<vmem>>, vector<1x16x16xf32>,
    %cst_44 = arith.constant 2.500000e-01 : f32
    %54 = vector.broadcast %cst_44 : f32 to vector<16x16xf32>
    %55 = arith.mulf %22, %54 : vector<16x16xf32>
    %c1_45 = arith.constant 1 : index
    %c8_46 = arith.constant 8 : index
    %c0_47 = arith.constant 0 : index
    %56 = vector.load %arg9[%c1_45, %c8_46, %c0_47] : memref<2x27x16xf32, #tpu.memory_space<vmem>>, vector<1x16x16xf32>
    %57 = vector.shape_cast %56 : vector<1x16x16xf32> to vector<16x16xf32>
    %58 = vector.shape_cast %55 : vector<16x16xf32> to vector<1x16x16xf32>
    tpu.vector_store %arg9[%c1_45, %c8_46, %c0_47], %58 {strides = array<i32>} : memref<2x27x16xf32, #tpu.memory_space<vmem>>, vector<1x16x16xf32>,
    %c0_48 = arith.constant 0 : index
    %59 = memref.load %arg5[%c0_48] : memref<3xf32, #tpu.memory_space<smem>>
    %60 = vector.broadcast %59 : f32 to vector<4x16xf32>
    %c0_49 = arith.constant 0 : index
    %c5_50 = arith.constant 5 : index
    %c0_51 = arith.constant 0 : index
    %61 = vector.load %arg7[%c0_49, %c5_50, %c0_51] : memref<2x15x16xf32, #tpu.memory_space<vmem>>, vector<1x4x16xf32>
    %62 = vector.shape_cast %61 : vector<1x4x16xf32> to vector<4x16xf32>
    %c0_52 = arith.constant 0 : index
    %c0_53 = arith.constant 0 : index
    %c0_54 = arith.constant 0 : index
    %63 = vector.load %arg2[%c0_52, %c0_53, %c0_54] : memref<14x16x16xf32, #tpu.memory_space<vmem>>, vector<1x16x16xf32>
    %64 = vector.shape_cast %63 : vector<1x16x16xf32> to vector<16x16xf32>
    %cst_55 = arith.constant dense<0.000000e+00> : vector<4x16xf32>
    %65 = tpu.matmul %62, %64, %cst_55 {dimension_numbers = #tpu.dot_dimension_numbers<[1], [0], [0], [1], [0, 0, 1, 1], [], []>} : vector<4x16xf32>, vector<16x16xf32>, vector<4x16xf32> -> vector<4x16xf32>
    %66 = arith.addf %60, %65 : vector<4x16xf32>
    %c0_56 = arith.constant 0 : index
    %c6 = arith.constant 6 : index
    %c0_57 = arith.constant 0 : index
    %67 = vector.load %arg7[%c0_56, %c6, %c0_57] : memref<2x15x16xf32, #tpu.memory_space<vmem>>, vector<1x4x16xf32>
    %68 = vector.shape_cast %67 : vector<1x4x16xf32> to vector<4x16xf32>
    %c1_58 = arith.constant 1 : index
    %c0_59 = arith.constant 0 : index
    %c0_60 = arith.constant 0 : index
    %69 = vector.load %arg2[%c1_58, %c0_59, %c0_60] : memref<14x16x16xf32, #tpu.memory_space<vmem>>, vector<1x16x16xf32>
    %70 = vector.shape_cast %69 : vector<1x16x16xf32> to vector<16x16xf32>
    %cst_61 = arith.constant dense<0.000000e+00> : vector<4x16xf32>
    %71 = tpu.matmul %68, %70, %cst_61 {dimension_numbers = #tpu.dot_dimension_numbers<[1], [0], [0], [1], [0, 0, 1, 1], [], []>} : vector<4x16xf32>, vector<16x16xf32>, vector<4x16xf32> -> vector<4x16xf32>
    %72 = arith.addf %66, %71 : vector<4x16xf32>
    %c0_62 = arith.constant 0 : index
    %c7 = arith.constant 7 : index
    %c0_63 = arith.constant 0 : index
    %73 = vector.load %arg7[%c0_62, %c7, %c0_63] : memref<2x15x16xf32, #tpu.memory_space<vmem>>, vector<1x4x16xf32>
    %74 = vector.shape_cast %73 : vector<1x4x16xf32> to vector<4x16xf32>
    %c2 = arith.constant 2 : index
    %c0_64 = arith.constant 0 : index
    %c0_65 = arith.constant 0 : index
    %75 = vector.load %arg2[%c2, %c0_64, %c0_65] : memref<14x16x16xf32, #tpu.memory_space<vmem>>, vector<1x16x16xf32>
    %76 = vector.shape_cast %75 : vector<1x16x16xf32> to vector<16x16xf32>
    %cst_66 = arith.constant dense<0.000000e+00> : vector<4x16xf32>
    %77 = tpu.matmul %74, %76, %cst_66 {dimension_numbers = #tpu.dot_dimension_numbers<[1], [0], [0], [1], [0, 0, 1, 1], [], []>} : vector<4x16xf32>, vector<16x16xf32>, vector<4x16xf32> -> vector<4x16xf32>
    %78 = arith.addf %72, %77 : vector<4x16xf32>
    %c0_67 = arith.constant 0 : index
    %c8_68 = arith.constant 8 : index
    %c0_69 = arith.constant 0 : index
    %79 = vector.load %arg7[%c0_67, %c8_68, %c0_69] : memref<2x15x16xf32, #tpu.memory_space<vmem>>, vector<1x4x16xf32>
    %80 = vector.shape_cast %79 : vector<1x4x16xf32> to vector<4x16xf32>
    %c3 = arith.constant 3 : index
    %c0_70 = arith.constant 0 : index
    %c0_71 = arith.constant 0 : index
    %81 = vector.load %arg2[%c3, %c0_70, %c0_71] : memref<14x16x16xf32, #tpu.memory_space<vmem>>, vector<1x16x16xf32>
    %82 = vector.shape_cast %81 : vector<1x16x16xf32> to vector<16x16xf32>
    %cst_72 = arith.constant dense<0.000000e+00> : vector<4x16xf32>
    %83 = tpu.matmul %80, %82, %cst_72 {dimension_numbers = #tpu.dot_dimension_numbers<[1], [0], [0], [1], [0, 0, 1, 1], [], []>} : vector<4x16xf32>, vector<16x16xf32>, vector<4x16xf32> -> vector<4x16xf32>
    %84 = arith.addf %78, %83 : vector<4x16xf32>
    %c0_73 = arith.constant 0 : index
    %c9 = arith.constant 9 : index
    %c0_74 = arith.constant 0 : index
    %85 = vector.load %arg7[%c0_73, %c9, %c0_74] : memref<2x15x16xf32, #tpu.memory_space<vmem>>, vector<1x4x16xf32>
    %86 = vector.shape_cast %85 : vector<1x4x16xf32> to vector<4x16xf32>
    %c4 = arith.constant 4 : index
    %c0_75 = arith.constant 0 : index
    %c0_76 = arith.constant 0 : index
    %87 = vector.load %arg2[%c4, %c0_75, %c0_76] : memref<14x16x16xf32, #tpu.memory_space<vmem>>, vector<1x16x16xf32>
    %88 = vector.shape_cast %87 : vector<1x16x16xf32> to vector<16x16xf32>
    %cst_77 = arith.constant dense<0.000000e+00> : vector<4x16xf32>
    %89 = tpu.matmul %86, %88, %cst_77 {dimension_numbers = #tpu.dot_dimension_numbers<[1], [0], [0], [1], [0, 0, 1, 1], [], []>} : vector<4x16xf32>, vector<16x16xf32>, vector<4x16xf32> -> vector<4x16xf32>
    %90 = arith.addf %84, %89 : vector<4x16xf32>
    %c0_78 = arith.constant 0 : index
    %c10 = arith.constant 10 : index
    %c0_79 = arith.constant 0 : index
    %91 = vector.load %arg7[%c0_78, %c10, %c0_79] : memref<2x15x16xf32, #tpu.memory_space<vmem>>, vector<1x4x16xf32>
    %92 = vector.shape_cast %91 : vector<1x4x16xf32> to vector<4x16xf32>
    %c5_80 = arith.constant 5 : index
    %c0_81 = arith.constant 0 : index
    %c0_82 = arith.constant 0 : index
    %93 = vector.load %arg2[%c5_80, %c0_81, %c0_82] : memref<14x16x16xf32, #tpu.memory_space<vmem>>, vector<1x16x16xf32>
    %94 = vector.shape_cast %93 : vector<1x16x16xf32> to vector<16x16xf32>
    %cst_83 = arith.constant dense<0.000000e+00> : vector<4x16xf32>
    %95 = tpu.matmul %92, %94, %cst_83 {dimension_numbers = #tpu.dot_dimension_numbers<[1], [0], [0], [1], [0, 0, 1, 1], [], []>} : vector<4x16xf32>, vector<16x16xf32>, vector<4x16xf32> -> vector<4x16xf32>
    %96 = arith.addf %90, %95 : vector<4x16xf32>
    %c0_84 = arith.constant 0 : index
    %c11 = arith.constant 11 : index
    %c0_85 = arith.constant 0 : index
    %97 = vector.load %arg7[%c0_84, %c11, %c0_85] : memref<2x15x16xf32, #tpu.memory_space<vmem>>, vector<1x4x16xf32>
    %98 = vector.shape_cast %97 : vector<1x4x16xf32> to vector<4x16xf32>
    %c6_86 = arith.constant 6 : index
    %c0_87 = arith.constant 0 : index
    %c0_88 = arith.constant 0 : index
    %99 = vector.load %arg2[%c6_86, %c0_87, %c0_88] : memref<14x16x16xf32, #tpu.memory_space<vmem>>, vector<1x16x16xf32>
    %100 = vector.shape_cast %99 : vector<1x16x16xf32> to vector<16x16xf32>
    %cst_89 = arith.constant dense<0.000000e+00> : vector<4x16xf32>
    %101 = tpu.matmul %98, %100, %cst_89 {dimension_numbers = #tpu.dot_dimension_numbers<[1], [0], [0], [1], [0, 0, 1, 1], [], []>} : vector<4x16xf32>, vector<16x16xf32>, vector<4x16xf32> -> vector<4x16xf32>
    %102 = arith.addf %96, %101 : vector<4x16xf32>
    %c1_90 = arith.constant 1 : index
    %c5_91 = arith.constant 5 : index
    %c0_92 = arith.constant 0 : index
    %103 = vector.load %arg7[%c1_90, %c5_91, %c0_92] : memref<2x15x16xf32, #tpu.memory_space<vmem>>, vector<1x4x16xf32>
    %104 = vector.shape_cast %103 : vector<1x4x16xf32> to vector<4x16xf32>
    %c7_93 = arith.constant 7 : index
    %c0_94 = arith.constant 0 : index
    %c0_95 = arith.constant 0 : index
    %105 = vector.load %arg2[%c7_93, %c0_94, %c0_95] : memref<14x16x16xf32, #tpu.memory_space<vmem>>, vector<1x16x16xf32>
    %106 = vector.shape_cast %105 : vector<1x16x16xf32> to vector<16x16xf32>
    %cst_96 = arith.constant dense<0.000000e+00> : vector<4x16xf32>
    %107 = tpu.matmul %104, %106, %cst_96 {dimension_numbers = #tpu.dot_dimension_numbers<[1], [0], [0], [1], [0, 0, 1, 1], [], []>} : vector<4x16xf32>, vector<16x16xf32>, vector<4x16xf32> -> vector<4x16xf32>
    %108 = arith.addf %102, %107 : vector<4x16xf32>
    %c1_97 = arith.constant 1 : index
    %c6_98 = arith.constant 6 : index
    %c0_99 = arith.constant 0 : index
    %109 = vector.load %arg7[%c1_97, %c6_98, %c0_99] : memref<2x15x16xf32, #tpu.memory_space<vmem>>, vector<1x4x16xf32>
    %110 = vector.shape_cast %109 : vector<1x4x16xf32> to vector<4x16xf32>
    %c8_100 = arith.constant 8 : index
    %c0_101 = arith.constant 0 : index
    %c0_102 = arith.constant 0 : index
    %111 = vector.load %arg2[%c8_100, %c0_101, %c0_102] : memref<14x16x16xf32, #tpu.memory_space<vmem>>, vector<1x16x16xf32>
    %112 = vector.shape_cast %111 : vector<1x16x16xf32> to vector<16x16xf32>
    %cst_103 = arith.constant dense<0.000000e+00> : vector<4x16xf32>
    %113 = tpu.matmul %110, %112, %cst_103 {dimension_numbers = #tpu.dot_dimension_numbers<[1], [0], [0], [1], [0, 0, 1, 1], [], []>} : vector<4x16xf32>, vector<16x16xf32>, vector<4x16xf32> -> vector<4x16xf32>
    %114 = arith.addf %108, %113 : vector<4x16xf32>
    %c1_104 = arith.constant 1 : index
    %c7_105 = arith.constant 7 : index
    %c0_106 = arith.constant 0 : index
    %115 = vector.load %arg7[%c1_104, %c7_105, %c0_106] : memref<2x15x16xf32, #tpu.memory_space<vmem>>, vector<1x4x16xf32>
    %116 = vector.shape_cast %115 : vector<1x4x16xf32> to vector<4x16xf32>
    %c9_107 = arith.constant 9 : index
    %c0_108 = arith.constant 0 : index
    %c0_109 = arith.constant 0 : index
    %117 = vector.load %arg2[%c9_107, %c0_108, %c0_109] : memref<14x16x16xf32, #tpu.memory_space<vmem>>, vector<1x16x16xf32>
    %118 = vector.shape_cast %117 : vector<1x16x16xf32> to vector<16x16xf32>
    %cst_110 = arith.constant dense<0.000000e+00> : vector<4x16xf32>
    %119 = tpu.matmul %116, %118, %cst_110 {dimension_numbers = #tpu.dot_dimension_numbers<[1], [0], [0], [1], [0, 0, 1, 1], [], []>} : vector<4x16xf32>, vector<16x16xf32>, vector<4x16xf32> -> vector<4x16xf32>
    %120 = arith.addf %114, %119 : vector<4x16xf32>
    %c1_111 = arith.constant 1 : index
    %c8_112 = arith.constant 8 : index
    %c0_113 = arith.constant 0 : index
    %121 = vector.load %arg7[%c1_111, %c8_112, %c0_113] : memref<2x15x16xf32, #tpu.memory_space<vmem>>, vector<1x4x16xf32>
    %122 = vector.shape_cast %121 : vector<1x4x16xf32> to vector<4x16xf32>
    %c10_114 = arith.constant 10 : index
    %c0_115 = arith.constant 0 : index
    %c0_116 = arith.constant 0 : index
    %123 = vector.load %arg2[%c10_114, %c0_115, %c0_116] : memref<14x16x16xf32, #tpu.memory_space<vmem>>, vector<1x16x16xf32>
    %124 = vector.shape_cast %123 : vector<1x16x16xf32> to vector<16x16xf32>
    %cst_117 = arith.constant dense<0.000000e+00> : vector<4x16xf32>
    %125 = tpu.matmul %122, %124, %cst_117 {dimension_numbers = #tpu.dot_dimension_numbers<[1], [0], [0], [1], [0, 0, 1, 1], [], []>} : vector<4x16xf32>, vector<16x16xf32>, vector<4x16xf32> -> vector<4x16xf32>
    %126 = arith.addf %120, %125 : vector<4x16xf32>
    %c1_118 = arith.constant 1 : index
    %c9_119 = arith.constant 9 : index
    %c0_120 = arith.constant 0 : index
    %127 = vector.load %arg7[%c1_118, %c9_119, %c0_120] : memref<2x15x16xf32, #tpu.memory_space<vmem>>, vector<1x4x16xf32>
    %128 = vector.shape_cast %127 : vector<1x4x16xf32> to vector<4x16xf32>
    %c11_121 = arith.constant 11 : index
    %c0_122 = arith.constant 0 : index
    %c0_123 = arith.constant 0 : index
    %129 = vector.load %arg2[%c11_121, %c0_122, %c0_123] : memref<14x16x16xf32, #tpu.memory_space<vmem>>, vector<1x16x16xf32>
    %130 = vector.shape_cast %129 : vector<1x16x16xf32> to vector<16x16xf32>
    %cst_124 = arith.constant dense<0.000000e+00> : vector<4x16xf32>
    %131 = tpu.matmul %128, %130, %cst_124 {dimension_numbers = #tpu.dot_dimension_numbers<[1], [0], [0], [1], [0, 0, 1, 1], [], []>} : vector<4x16xf32>, vector<16x16xf32>, vector<4x16xf32> -> vector<4x16xf32>
    %132 = arith.addf %126, %131 : vector<4x16xf32>
    %c1_125 = arith.constant 1 : index
    %c10_126 = arith.constant 10 : index
    %c0_127 = arith.constant 0 : index
    %133 = vector.load %arg7[%c1_125, %c10_126, %c0_127] : memref<2x15x16xf32, #tpu.memory_space<vmem>>, vector<1x4x16xf32>
    %134 = vector.shape_cast %133 : vector<1x4x16xf32> to vector<4x16xf32>
    %c12_128 = arith.constant 12 : index
    %c0_129 = arith.constant 0 : index
    %c0_130 = arith.constant 0 : index
    %135 = vector.load %arg2[%c12_128, %c0_129, %c0_130] : memref<14x16x16xf32, #tpu.memory_space<vmem>>, vector<1x16x16xf32>
    %136 = vector.shape_cast %135 : vector<1x16x16xf32> to vector<16x16xf32>
    %cst_131 = arith.constant dense<0.000000e+00> : vector<4x16xf32>
    %137 = tpu.matmul %134, %136, %cst_131 {dimension_numbers = #tpu.dot_dimension_numbers<[1], [0], [0], [1], [0, 0, 1, 1], [], []>} : vector<4x16xf32>, vector<16x16xf32>, vector<4x16xf32> -> vector<4x16xf32>
    %138 = arith.addf %132, %137 : vector<4x16xf32>
    %c1_132 = arith.constant 1 : index
    %c11_133 = arith.constant 11 : index
    %c0_134 = arith.constant 0 : index
    %139 = vector.load %arg7[%c1_132, %c11_133, %c0_134] : memref<2x15x16xf32, #tpu.memory_space<vmem>>, vector<1x4x16xf32>
    %140 = vector.shape_cast %139 : vector<1x4x16xf32> to vector<4x16xf32>
    %c13 = arith.constant 13 : index
    %c0_135 = arith.constant 0 : index
    %c0_136 = arith.constant 0 : index
    %141 = vector.load %arg2[%c13, %c0_135, %c0_136] : memref<14x16x16xf32, #tpu.memory_space<vmem>>, vector<1x16x16xf32>
    %142 = vector.shape_cast %141 : vector<1x16x16xf32> to vector<16x16xf32>
    %cst_137 = arith.constant dense<0.000000e+00> : vector<4x16xf32>
    %143 = tpu.matmul %140, %142, %cst_137 {dimension_numbers = #tpu.dot_dimension_numbers<[1], [0], [0], [1], [0, 0, 1, 1], [], []>} : vector<4x16xf32>, vector<16x16xf32>, vector<4x16xf32> -> vector<4x16xf32>
    %144 = arith.addf %138, %143 : vector<4x16xf32>
    %145 = arith.negf %144 : vector<4x16xf32>
    %146 = math.exp %145 : vector<4x16xf32>
    %cst_138 = arith.constant 1.000000e+00 : f32
    %147 = vector.broadcast %cst_138 : f32 to vector<4x16xf32>
    %148 = arith.addf %147, %146 : vector<4x16xf32>
    %149 = arith.divf %147, %148 : vector<4x16xf32>
    %cst_139 = arith.constant 0.333333343 : f32
    %150 = vector.broadcast %cst_139 : f32 to vector<4x16xf32>
    %151 = arith.mulf %149, %150 : vector<4x16xf32>
    %c1_140 = arith.constant 1 : index
    %152 = memref.load %arg5[%c1_140] : memref<3xf32, #tpu.memory_space<smem>>
    %153 = vector.broadcast %152 : f32 to vector<4x16xf32>
    %c0_141 = arith.constant 0 : index
    %c5_142 = arith.constant 5 : index
    %c0_143 = arith.constant 0 : index
    %154 = vector.load %arg8[%c0_141, %c5_142, %c0_143] : memref<2x15x16xf32, #tpu.memory_space<vmem>>, vector<1x4x16xf32>
    %155 = vector.shape_cast %154 : vector<1x4x16xf32> to vector<4x16xf32>
    %c0_144 = arith.constant 0 : index
    %c0_145 = arith.constant 0 : index
    %c0_146 = arith.constant 0 : index
    %156 = vector.load %arg3[%c0_144, %c0_145, %c0_146] : memref<14x16x16xf32, #tpu.memory_space<vmem>>, vector<1x16x16xf32>
    %157 = vector.shape_cast %156 : vector<1x16x16xf32> to vector<16x16xf32>
    %cst_147 = arith.constant dense<0.000000e+00> : vector<4x16xf32>
    %158 = tpu.matmul %155, %157, %cst_147 {dimension_numbers = #tpu.dot_dimension_numbers<[1], [0], [0], [1], [0, 0, 1, 1], [], []>} : vector<4x16xf32>, vector<16x16xf32>, vector<4x16xf32> -> vector<4x16xf32>
    %159 = arith.addf %153, %158 : vector<4x16xf32>
    %c0_148 = arith.constant 0 : index
    %c6_149 = arith.constant 6 : index
    %c0_150 = arith.constant 0 : index
    %160 = vector.load %arg8[%c0_148, %c6_149, %c0_150] : memref<2x15x16xf32, #tpu.memory_space<vmem>>, vector<1x4x16xf32>
    %161 = vector.shape_cast %160 : vector<1x4x16xf32> to vector<4x16xf32>
    %c1_151 = arith.constant 1 : index
    %c0_152 = arith.constant 0 : index
    %c0_153 = arith.constant 0 : index
    %162 = vector.load %arg3[%c1_151, %c0_152, %c0_153] : memref<14x16x16xf32, #tpu.memory_space<vmem>>, vector<1x16x16xf32>
    %163 = vector.shape_cast %162 : vector<1x16x16xf32> to vector<16x16xf32>
    %cst_154 = arith.constant dense<0.000000e+00> : vector<4x16xf32>
    %164 = tpu.matmul %161, %163, %cst_154 {dimension_numbers = #tpu.dot_dimension_numbers<[1], [0], [0], [1], [0, 0, 1, 1], [], []>} : vector<4x16xf32>, vector<16x16xf32>, vector<4x16xf32> -> vector<4x16xf32>
    %165 = arith.addf %159, %164 : vector<4x16xf32>
    %c0_155 = arith.constant 0 : index
    %c7_156 = arith.constant 7 : index
    %c0_157 = arith.constant 0 : index
    %166 = vector.load %arg8[%c0_155, %c7_156, %c0_157] : memref<2x15x16xf32, #tpu.memory_space<vmem>>, vector<1x4x16xf32>
    %167 = vector.shape_cast %166 : vector<1x4x16xf32> to vector<4x16xf32>
    %c2_158 = arith.constant 2 : index
    %c0_159 = arith.constant 0 : index
    %c0_160 = arith.constant 0 : index
    %168 = vector.load %arg3[%c2_158, %c0_159, %c0_160] : memref<14x16x16xf32, #tpu.memory_space<vmem>>, vector<1x16x16xf32>
    %169 = vector.shape_cast %168 : vector<1x16x16xf32> to vector<16x16xf32>
    %cst_161 = arith.constant dense<0.000000e+00> : vector<4x16xf32>
    %170 = tpu.matmul %167, %169, %cst_161 {dimension_numbers = #tpu.dot_dimension_numbers<[1], [0], [0], [1], [0, 0, 1, 1], [], []>} : vector<4x16xf32>, vector<16x16xf32>, vector<4x16xf32> -> vector<4x16xf32>
    %171 = arith.addf %165, %170 : vector<4x16xf32>
    %c0_162 = arith.constant 0 : index
    %c8_163 = arith.constant 8 : index
    %c0_164 = arith.constant 0 : index
    %172 = vector.load %arg8[%c0_162, %c8_163, %c0_164] : memref<2x15x16xf32, #tpu.memory_space<vmem>>, vector<1x4x16xf32>
    %173 = vector.shape_cast %172 : vector<1x4x16xf32> to vector<4x16xf32>
    %c3_165 = arith.constant 3 : index
    %c0_166 = arith.constant 0 : index
    %c0_167 = arith.constant 0 : index
    %174 = vector.load %arg3[%c3_165, %c0_166, %c0_167] : memref<14x16x16xf32, #tpu.memory_space<vmem>>, vector<1x16x16xf32>
    %175 = vector.shape_cast %174 : vector<1x16x16xf32> to vector<16x16xf32>
    %cst_168 = arith.constant dense<0.000000e+00> : vector<4x16xf32>
    %176 = tpu.matmul %173, %175, %cst_168 {dimension_numbers = #tpu.dot_dimension_numbers<[1], [0], [0], [1], [0, 0, 1, 1], [], []>} : vector<4x16xf32>, vector<16x16xf32>, vector<4x16xf32> -> vector<4x16xf32>
    %177 = arith.addf %171, %176 : vector<4x16xf32>
    %c0_169 = arith.constant 0 : index
    %c9_170 = arith.constant 9 : index
    %c0_171 = arith.constant 0 : index
    %178 = vector.load %arg8[%c0_169, %c9_170, %c0_171] : memref<2x15x16xf32, #tpu.memory_space<vmem>>, vector<1x4x16xf32>
    %179 = vector.shape_cast %178 : vector<1x4x16xf32> to vector<4x16xf32>
    %c4_172 = arith.constant 4 : index
    %c0_173 = arith.constant 0 : index
    %c0_174 = arith.constant 0 : index
    %180 = vector.load %arg3[%c4_172, %c0_173, %c0_174] : memref<14x16x16xf32, #tpu.memory_space<vmem>>, vector<1x16x16xf32>
    %181 = vector.shape_cast %180 : vector<1x16x16xf32> to vector<16x16xf32>
    %cst_175 = arith.constant dense<0.000000e+00> : vector<4x16xf32>
    %182 = tpu.matmul %179, %181, %cst_175 {dimension_numbers = #tpu.dot_dimension_numbers<[1], [0], [0], [1], [0, 0, 1, 1], [], []>} : vector<4x16xf32>, vector<16x16xf32>, vector<4x16xf32> -> vector<4x16xf32>
    %183 = arith.addf %177, %182 : vector<4x16xf32>
    %c0_176 = arith.constant 0 : index
    %c10_177 = arith.constant 10 : index
    %c0_178 = arith.constant 0 : index
    %184 = vector.load %arg8[%c0_176, %c10_177, %c0_178] : memref<2x15x16xf32, #tpu.memory_space<vmem>>, vector<1x4x16xf32>
    %185 = vector.shape_cast %184 : vector<1x4x16xf32> to vector<4x16xf32>
    %c5_179 = arith.constant 5 : index
    %c0_180 = arith.constant 0 : index
    %c0_181 = arith.constant 0 : index
    %186 = vector.load %arg3[%c5_179, %c0_180, %c0_181] : memref<14x16x16xf32, #tpu.memory_space<vmem>>, vector<1x16x16xf32>
    %187 = vector.shape_cast %186 : vector<1x16x16xf32> to vector<16x16xf32>
    %cst_182 = arith.constant dense<0.000000e+00> : vector<4x16xf32>
    %188 = tpu.matmul %185, %187, %cst_182 {dimension_numbers = #tpu.dot_dimension_numbers<[1], [0], [0], [1], [0, 0, 1, 1], [], []>} : vector<4x16xf32>, vector<16x16xf32>, vector<4x16xf32> -> vector<4x16xf32>
    %189 = arith.addf %183, %188 : vector<4x16xf32>
    %c0_183 = arith.constant 0 : index
    %c11_184 = arith.constant 11 : index
    %c0_185 = arith.constant 0 : index
    %190 = vector.load %arg8[%c0_183, %c11_184, %c0_185] : memref<2x15x16xf32, #tpu.memory_space<vmem>>, vector<1x4x16xf32>
    %191 = vector.shape_cast %190 : vector<1x4x16xf32> to vector<4x16xf32>
    %c6_186 = arith.constant 6 : index
    %c0_187 = arith.constant 0 : index
    %c0_188 = arith.constant 0 : index
    %192 = vector.load %arg3[%c6_186, %c0_187, %c0_188] : memref<14x16x16xf32, #tpu.memory_space<vmem>>, vector<1x16x16xf32>
    %193 = vector.shape_cast %192 : vector<1x16x16xf32> to vector<16x16xf32>
    %cst_189 = arith.constant dense<0.000000e+00> : vector<4x16xf32>
    %194 = tpu.matmul %191, %193, %cst_189 {dimension_numbers = #tpu.dot_dimension_numbers<[1], [0], [0], [1], [0, 0, 1, 1], [], []>} : vector<4x16xf32>, vector<16x16xf32>, vector<4x16xf32> -> vector<4x16xf32>
    %195 = arith.addf %189, %194 : vector<4x16xf32>
    %c1_190 = arith.constant 1 : index
    %c5_191 = arith.constant 5 : index
    %c0_192 = arith.constant 0 : index
    %196 = vector.load %arg8[%c1_190, %c5_191, %c0_192] : memref<2x15x16xf32, #tpu.memory_space<vmem>>, vector<1x4x16xf32>
    %197 = vector.shape_cast %196 : vector<1x4x16xf32> to vector<4x16xf32>
    %c7_193 = arith.constant 7 : index
    %c0_194 = arith.constant 0 : index
    %c0_195 = arith.constant 0 : index
    %198 = vector.load %arg3[%c7_193, %c0_194, %c0_195] : memref<14x16x16xf32, #tpu.memory_space<vmem>>, vector<1x16x16xf32>
    %199 = vector.shape_cast %198 : vector<1x16x16xf32> to vector<16x16xf32>
    %cst_196 = arith.constant dense<0.000000e+00> : vector<4x16xf32>
    %200 = tpu.matmul %197, %199, %cst_196 {dimension_numbers = #tpu.dot_dimension_numbers<[1], [0], [0], [1], [0, 0, 1, 1], [], []>} : vector<4x16xf32>, vector<16x16xf32>, vector<4x16xf32> -> vector<4x16xf32>
    %201 = arith.addf %195, %200 : vector<4x16xf32>
    %c1_197 = arith.constant 1 : index
    %c6_198 = arith.constant 6 : index
    %c0_199 = arith.constant 0 : index
    %202 = vector.load %arg8[%c1_197, %c6_198, %c0_199] : memref<2x15x16xf32, #tpu.memory_space<vmem>>, vector<1x4x16xf32>
    %203 = vector.shape_cast %202 : vector<1x4x16xf32> to vector<4x16xf32>
    %c8_200 = arith.constant 8 : index
    %c0_201 = arith.constant 0 : index
    %c0_202 = arith.constant 0 : index
    %204 = vector.load %arg3[%c8_200, %c0_201, %c0_202] : memref<14x16x16xf32, #tpu.memory_space<vmem>>, vector<1x16x16xf32>
    %205 = vector.shape_cast %204 : vector<1x16x16xf32> to vector<16x16xf32>
    %cst_203 = arith.constant dense<0.000000e+00> : vector<4x16xf32>
    %206 = tpu.matmul %203, %205, %cst_203 {dimension_numbers = #tpu.dot_dimension_numbers<[1], [0], [0], [1], [0, 0, 1, 1], [], []>} : vector<4x16xf32>, vector<16x16xf32>, vector<4x16xf32> -> vector<4x16xf32>
    %207 = arith.addf %201, %206 : vector<4x16xf32>
    %c1_204 = arith.constant 1 : index
    %c7_205 = arith.constant 7 : index
    %c0_206 = arith.constant 0 : index
    %208 = vector.load %arg8[%c1_204, %c7_205, %c0_206] : memref<2x15x16xf32, #tpu.memory_space<vmem>>, vector<1x4x16xf32>
    %209 = vector.shape_cast %208 : vector<1x4x16xf32> to vector<4x16xf32>
    %c9_207 = arith.constant 9 : index
    %c0_208 = arith.constant 0 : index
    %c0_209 = arith.constant 0 : index
    %210 = vector.load %arg3[%c9_207, %c0_208, %c0_209] : memref<14x16x16xf32, #tpu.memory_space<vmem>>, vector<1x16x16xf32>
    %211 = vector.shape_cast %210 : vector<1x16x16xf32> to vector<16x16xf32>
    %cst_210 = arith.constant dense<0.000000e+00> : vector<4x16xf32>
    %212 = tpu.matmul %209, %211, %cst_210 {dimension_numbers = #tpu.dot_dimension_numbers<[1], [0], [0], [1], [0, 0, 1, 1], [], []>} : vector<4x16xf32>, vector<16x16xf32>, vector<4x16xf32> -> vector<4x16xf32>
    %213 = arith.addf %207, %212 : vector<4x16xf32>
    %c1_211 = arith.constant 1 : index
    %c8_212 = arith.constant 8 : index
    %c0_213 = arith.constant 0 : index
    %214 = vector.load %arg8[%c1_211, %c8_212, %c0_213] : memref<2x15x16xf32, #tpu.memory_space<vmem>>, vector<1x4x16xf32>
    %215 = vector.shape_cast %214 : vector<1x4x16xf32> to vector<4x16xf32>
    %c10_214 = arith.constant 10 : index
    %c0_215 = arith.constant 0 : index
    %c0_216 = arith.constant 0 : index
    %216 = vector.load %arg3[%c10_214, %c0_215, %c0_216] : memref<14x16x16xf32, #tpu.memory_space<vmem>>, vector<1x16x16xf32>
    %217 = vector.shape_cast %216 : vector<1x16x16xf32> to vector<16x16xf32>
    %cst_217 = arith.constant dense<0.000000e+00> : vector<4x16xf32>
    %218 = tpu.matmul %215, %217, %cst_217 {dimension_numbers = #tpu.dot_dimension_numbers<[1], [0], [0], [1], [0, 0, 1, 1], [], []>} : vector<4x16xf32>, vector<16x16xf32>, vector<4x16xf32> -> vector<4x16xf32>
    %219 = arith.addf %213, %218 : vector<4x16xf32>
    %c1_218 = arith.constant 1 : index
    %c9_219 = arith.constant 9 : index
    %c0_220 = arith.constant 0 : index
    %220 = vector.load %arg8[%c1_218, %c9_219, %c0_220] : memref<2x15x16xf32, #tpu.memory_space<vmem>>, vector<1x4x16xf32>
    %221 = vector.shape_cast %220 : vector<1x4x16xf32> to vector<4x16xf32>
    %c11_221 = arith.constant 11 : index
    %c0_222 = arith.constant 0 : index
    %c0_223 = arith.constant 0 : index
    %222 = vector.load %arg3[%c11_221, %c0_222, %c0_223] : memref<14x16x16xf32, #tpu.memory_space<vmem>>, vector<1x16x16xf32>
    %223 = vector.shape_cast %222 : vector<1x16x16xf32> to vector<16x16xf32>
    %cst_224 = arith.constant dense<0.000000e+00> : vector<4x16xf32>
    %224 = tpu.matmul %221, %223, %cst_224 {dimension_numbers = #tpu.dot_dimension_numbers<[1], [0], [0], [1], [0, 0, 1, 1], [], []>} : vector<4x16xf32>, vector<16x16xf32>, vector<4x16xf32> -> vector<4x16xf32>
    %225 = arith.addf %219, %224 : vector<4x16xf32>
    %c1_225 = arith.constant 1 : index
    %c10_226 = arith.constant 10 : index
    %c0_227 = arith.constant 0 : index
    %226 = vector.load %arg8[%c1_225, %c10_226, %c0_227] : memref<2x15x16xf32, #tpu.memory_space<vmem>>, vector<1x4x16xf32>
    %227 = vector.shape_cast %226 : vector<1x4x16xf32> to vector<4x16xf32>
    %c12_228 = arith.constant 12 : index
    %c0_229 = arith.constant 0 : index
    %c0_230 = arith.constant 0 : index
    %228 = vector.load %arg3[%c12_228, %c0_229, %c0_230] : memref<14x16x16xf32, #tpu.memory_space<vmem>>, vector<1x16x16xf32>
    %229 = vector.shape_cast %228 : vector<1x16x16xf32> to vector<16x16xf32>
    %cst_231 = arith.constant dense<0.000000e+00> : vector<4x16xf32>
    %230 = tpu.matmul %227, %229, %cst_231 {dimension_numbers = #tpu.dot_dimension_numbers<[1], [0], [0], [1], [0, 0, 1, 1], [], []>} : vector<4x16xf32>, vector<16x16xf32>, vector<4x16xf32> -> vector<4x16xf32>
    %231 = arith.addf %225, %230 : vector<4x16xf32>
    %c1_232 = arith.constant 1 : index
    %c11_233 = arith.constant 11 : index
    %c0_234 = arith.constant 0 : index
    %232 = vector.load %arg8[%c1_232, %c11_233, %c0_234] : memref<2x15x16xf32, #tpu.memory_space<vmem>>, vector<1x4x16xf32>
    %233 = vector.shape_cast %232 : vector<1x4x16xf32> to vector<4x16xf32>
    %c13_235 = arith.constant 13 : index
    %c0_236 = arith.constant 0 : index
    %c0_237 = arith.constant 0 : index
    %234 = vector.load %arg3[%c13_235, %c0_236, %c0_237] : memref<14x16x16xf32, #tpu.memory_space<vmem>>, vector<1x16x16xf32>
    %235 = vector.shape_cast %234 : vector<1x16x16xf32> to vector<16x16xf32>
    %cst_238 = arith.constant dense<0.000000e+00> : vector<4x16xf32>
    %236 = tpu.matmul %233, %235, %cst_238 {dimension_numbers = #tpu.dot_dimension_numbers<[1], [0], [0], [1], [0, 0, 1, 1], [], []>} : vector<4x16xf32>, vector<16x16xf32>, vector<4x16xf32> -> vector<4x16xf32>
    %237 = arith.addf %231, %236 : vector<4x16xf32>
    %238 = arith.negf %237 : vector<4x16xf32>
    %239 = math.exp %238 : vector<4x16xf32>
    %cst_239 = arith.constant 1.000000e+00 : f32
    %240 = vector.broadcast %cst_239 : f32 to vector<4x16xf32>
    %241 = arith.addf %240, %239 : vector<4x16xf32>
    %242 = arith.divf %240, %241 : vector<4x16xf32>
    %cst_240 = arith.constant 0.333333343 : f32
    %243 = vector.broadcast %cst_240 : f32 to vector<4x16xf32>
    %244 = arith.mulf %242, %243 : vector<4x16xf32>
    %c2_241 = arith.constant 2 : index
    %245 = memref.load %arg5[%c2_241] : memref<3xf32, #tpu.memory_space<smem>>
    %246 = vector.broadcast %245 : f32 to vector<16x16xf32>
    %c0_242 = arith.constant 0 : index
    %c5_243 = arith.constant 5 : index
    %c0_244 = arith.constant 0 : index
    %247 = vector.load %arg9[%c0_242, %c5_243, %c0_244] : memref<2x27x16xf32, #tpu.memory_space<vmem>>, vector<1x16x16xf32>
    %248 = vector.shape_cast %247 : vector<1x16x16xf32> to vector<16x16xf32>
    %c0_245 = arith.constant 0 : index
    %c0_246 = arith.constant 0 : index
    %c0_247 = arith.constant 0 : index
    %249 = vector.load %arg4[%c0_245, %c0_246, %c0_247] : memref<14x16x16xf32, #tpu.memory_space<vmem>>, vector<1x16x16xf32>
    %250 = vector.shape_cast %249 : vector<1x16x16xf32> to vector<16x16xf32>
    %cst_248 = arith.constant dense<0.000000e+00> : vector<16x16xf32>
    %251 = tpu.matmul %248, %250, %cst_248 {dimension_numbers = #tpu.dot_dimension_numbers<[1], [0], [0], [1], [0, 0, 1, 1], [], []>} : vector<16x16xf32>, vector<16x16xf32>, vector<16x16xf32> -> vector<16x16xf32>
    %252 = arith.addf %246, %251 : vector<16x16xf32>
    %c0_249 = arith.constant 0 : index
    %c6_250 = arith.constant 6 : index
    %c0_251 = arith.constant 0 : index
    %253 = vector.load %arg9[%c0_249, %c6_250, %c0_251] : memref<2x27x16xf32, #tpu.memory_space<vmem>>, vector<1x16x16xf32>
    %254 = vector.shape_cast %253 : vector<1x16x16xf32> to vector<16x16xf32>
    %c1_252 = arith.constant 1 : index
    %c0_253 = arith.constant 0 : index
    %c0_254 = arith.constant 0 : index
    %255 = vector.load %arg4[%c1_252, %c0_253, %c0_254] : memref<14x16x16xf32, #tpu.memory_space<vmem>>, vector<1x16x16xf32>
    %256 = vector.shape_cast %255 : vector<1x16x16xf32> to vector<16x16xf32>
    %cst_255 = arith.constant dense<0.000000e+00> : vector<16x16xf32>
    %257 = tpu.matmul %254, %256, %cst_255 {dimension_numbers = #tpu.dot_dimension_numbers<[1], [0], [0], [1], [0, 0, 1, 1], [], []>} : vector<16x16xf32>, vector<16x16xf32>, vector<16x16xf32> -> vector<16x16xf32>
    %258 = arith.addf %252, %257 : vector<16x16xf32>
    %c0_256 = arith.constant 0 : index
    %c7_257 = arith.constant 7 : index
    %c0_258 = arith.constant 0 : index
    %259 = vector.load %arg9[%c0_256, %c7_257, %c0_258] : memref<2x27x16xf32, #tpu.memory_space<vmem>>, vector<1x16x16xf32>
    %260 = vector.shape_cast %259 : vector<1x16x16xf32> to vector<16x16xf32>
    %c2_259 = arith.constant 2 : index
    %c0_260 = arith.constant 0 : index
    %c0_261 = arith.constant 0 : index
    %261 = vector.load %arg4[%c2_259, %c0_260, %c0_261] : memref<14x16x16xf32, #tpu.memory_space<vmem>>, vector<1x16x16xf32>
    %262 = vector.shape_cast %261 : vector<1x16x16xf32> to vector<16x16xf32>
    %cst_262 = arith.constant dense<0.000000e+00> : vector<16x16xf32>
    %263 = tpu.matmul %260, %262, %cst_262 {dimension_numbers = #tpu.dot_dimension_numbers<[1], [0], [0], [1], [0, 0, 1, 1], [], []>} : vector<16x16xf32>, vector<16x16xf32>, vector<16x16xf32> -> vector<16x16xf32>
    %264 = arith.addf %258, %263 : vector<16x16xf32>
    %c0_263 = arith.constant 0 : index
    %c8_264 = arith.constant 8 : index
    %c0_265 = arith.constant 0 : index
    %265 = vector.load %arg9[%c0_263, %c8_264, %c0_265] : memref<2x27x16xf32, #tpu.memory_space<vmem>>, vector<1x16x16xf32>
    %266 = vector.shape_cast %265 : vector<1x16x16xf32> to vector<16x16xf32>
    %c3_266 = arith.constant 3 : index
    %c0_267 = arith.constant 0 : index
    %c0_268 = arith.constant 0 : index
    %267 = vector.load %arg4[%c3_266, %c0_267, %c0_268] : memref<14x16x16xf32, #tpu.memory_space<vmem>>, vector<1x16x16xf32>
    %268 = vector.shape_cast %267 : vector<1x16x16xf32> to vector<16x16xf32>
    %cst_269 = arith.constant dense<0.000000e+00> : vector<16x16xf32>
    %269 = tpu.matmul %266, %268, %cst_269 {dimension_numbers = #tpu.dot_dimension_numbers<[1], [0], [0], [1], [0, 0, 1, 1], [], []>} : vector<16x16xf32>, vector<16x16xf32>, vector<16x16xf32> -> vector<16x16xf32>
    %270 = arith.addf %264, %269 : vector<16x16xf32>
    %c0_270 = arith.constant 0 : index
    %c9_271 = arith.constant 9 : index
    %c0_272 = arith.constant 0 : index
    %271 = vector.load %arg9[%c0_270, %c9_271, %c0_272] : memref<2x27x16xf32, #tpu.memory_space<vmem>>, vector<1x16x16xf32>
    %272 = vector.shape_cast %271 : vector<1x16x16xf32> to vector<16x16xf32>
    %c4_273 = arith.constant 4 : index
    %c0_274 = arith.constant 0 : index
    %c0_275 = arith.constant 0 : index
    %273 = vector.load %arg4[%c4_273, %c0_274, %c0_275] : memref<14x16x16xf32, #tpu.memory_space<vmem>>, vector<1x16x16xf32>
    %274 = vector.shape_cast %273 : vector<1x16x16xf32> to vector<16x16xf32>
    %cst_276 = arith.constant dense<0.000000e+00> : vector<16x16xf32>
    %275 = tpu.matmul %272, %274, %cst_276 {dimension_numbers = #tpu.dot_dimension_numbers<[1], [0], [0], [1], [0, 0, 1, 1], [], []>} : vector<16x16xf32>, vector<16x16xf32>, vector<16x16xf32> -> vector<16x16xf32>
    %276 = arith.addf %270, %275 : vector<16x16xf32>
    %c0_277 = arith.constant 0 : index
    %c10_278 = arith.constant 10 : index
    %c0_279 = arith.constant 0 : index
    %277 = vector.load %arg9[%c0_277, %c10_278, %c0_279] : memref<2x27x16xf32, #tpu.memory_space<vmem>>, vector<1x16x16xf32>
    %278 = vector.shape_cast %277 : vector<1x16x16xf32> to vector<16x16xf32>
    %c5_280 = arith.constant 5 : index
    %c0_281 = arith.constant 0 : index
    %c0_282 = arith.constant 0 : index
    %279 = vector.load %arg4[%c5_280, %c0_281, %c0_282] : memref<14x16x16xf32, #tpu.memory_space<vmem>>, vector<1x16x16xf32>
    %280 = vector.shape_cast %279 : vector<1x16x16xf32> to vector<16x16xf32>
    %cst_283 = arith.constant dense<0.000000e+00> : vector<16x16xf32>
    %281 = tpu.matmul %278, %280, %cst_283 {dimension_numbers = #tpu.dot_dimension_numbers<[1], [0], [0], [1], [0, 0, 1, 1], [], []>} : vector<16x16xf32>, vector<16x16xf32>, vector<16x16xf32> -> vector<16x16xf32>
    %282 = arith.addf %276, %281 : vector<16x16xf32>
    %c0_284 = arith.constant 0 : index
    %c11_285 = arith.constant 11 : index
    %c0_286 = arith.constant 0 : index
    %283 = vector.load %arg9[%c0_284, %c11_285, %c0_286] : memref<2x27x16xf32, #tpu.memory_space<vmem>>, vector<1x16x16xf32>
    %284 = vector.shape_cast %283 : vector<1x16x16xf32> to vector<16x16xf32>
    %c6_287 = arith.constant 6 : index
    %c0_288 = arith.constant 0 : index
    %c0_289 = arith.constant 0 : index
    %285 = vector.load %arg4[%c6_287, %c0_288, %c0_289] : memref<14x16x16xf32, #tpu.memory_space<vmem>>, vector<1x16x16xf32>
    %286 = vector.shape_cast %285 : vector<1x16x16xf32> to vector<16x16xf32>
    %cst_290 = arith.constant dense<0.000000e+00> : vector<16x16xf32>
    %287 = tpu.matmul %284, %286, %cst_290 {dimension_numbers = #tpu.dot_dimension_numbers<[1], [0], [0], [1], [0, 0, 1, 1], [], []>} : vector<16x16xf32>, vector<16x16xf32>, vector<16x16xf32> -> vector<16x16xf32>
    %288 = arith.addf %282, %287 : vector<16x16xf32>
    %c1_291 = arith.constant 1 : index
    %c5_292 = arith.constant 5 : index
    %c0_293 = arith.constant 0 : index
    %289 = vector.load %arg9[%c1_291, %c5_292, %c0_293] : memref<2x27x16xf32, #tpu.memory_space<vmem>>, vector<1x16x16xf32>
    %290 = vector.shape_cast %289 : vector<1x16x16xf32> to vector<16x16xf32>
    %c7_294 = arith.constant 7 : index
    %c0_295 = arith.constant 0 : index
    %c0_296 = arith.constant 0 : index
    %291 = vector.load %arg4[%c7_294, %c0_295, %c0_296] : memref<14x16x16xf32, #tpu.memory_space<vmem>>, vector<1x16x16xf32>
    %292 = vector.shape_cast %291 : vector<1x16x16xf32> to vector<16x16xf32>
    %cst_297 = arith.constant dense<0.000000e+00> : vector<16x16xf32>
    %293 = tpu.matmul %290, %292, %cst_297 {dimension_numbers = #tpu.dot_dimension_numbers<[1], [0], [0], [1], [0, 0, 1, 1], [], []>} : vector<16x16xf32>, vector<16x16xf32>, vector<16x16xf32> -> vector<16x16xf32>
    %294 = arith.addf %288, %293 : vector<16x16xf32>
    %c1_298 = arith.constant 1 : index
    %c6_299 = arith.constant 6 : index
    %c0_300 = arith.constant 0 : index
    %295 = vector.load %arg9[%c1_298, %c6_299, %c0_300] : memref<2x27x16xf32, #tpu.memory_space<vmem>>, vector<1x16x16xf32>
    %296 = vector.shape_cast %295 : vector<1x16x16xf32> to vector<16x16xf32>
    %c8_301 = arith.constant 8 : index
    %c0_302 = arith.constant 0 : index
    %c0_303 = arith.constant 0 : index
    %297 = vector.load %arg4[%c8_301, %c0_302, %c0_303] : memref<14x16x16xf32, #tpu.memory_space<vmem>>, vector<1x16x16xf32>
    %298 = vector.shape_cast %297 : vector<1x16x16xf32> to vector<16x16xf32>
    %cst_304 = arith.constant dense<0.000000e+00> : vector<16x16xf32>
    %299 = tpu.matmul %296, %298, %cst_304 {dimension_numbers = #tpu.dot_dimension_numbers<[1], [0], [0], [1], [0, 0, 1, 1], [], []>} : vector<16x16xf32>, vector<16x16xf32>, vector<16x16xf32> -> vector<16x16xf32>
    %300 = arith.addf %294, %299 : vector<16x16xf32>
    %c1_305 = arith.constant 1 : index
    %c7_306 = arith.constant 7 : index
    %c0_307 = arith.constant 0 : index
    %301 = vector.load %arg9[%c1_305, %c7_306, %c0_307] : memref<2x27x16xf32, #tpu.memory_space<vmem>>, vector<1x16x16xf32>
    %302 = vector.shape_cast %301 : vector<1x16x16xf32> to vector<16x16xf32>
    %c9_308 = arith.constant 9 : index
    %c0_309 = arith.constant 0 : index
    %c0_310 = arith.constant 0 : index
    %303 = vector.load %arg4[%c9_308, %c0_309, %c0_310] : memref<14x16x16xf32, #tpu.memory_space<vmem>>, vector<1x16x16xf32>
    %304 = vector.shape_cast %303 : vector<1x16x16xf32> to vector<16x16xf32>
    %cst_311 = arith.constant dense<0.000000e+00> : vector<16x16xf32>
    %305 = tpu.matmul %302, %304, %cst_311 {dimension_numbers = #tpu.dot_dimension_numbers<[1], [0], [0], [1], [0, 0, 1, 1], [], []>} : vector<16x16xf32>, vector<16x16xf32>, vector<16x16xf32> -> vector<16x16xf32>
    %306 = arith.addf %300, %305 : vector<16x16xf32>
    %c1_312 = arith.constant 1 : index
    %c8_313 = arith.constant 8 : index
    %c0_314 = arith.constant 0 : index
    %307 = vector.load %arg9[%c1_312, %c8_313, %c0_314] : memref<2x27x16xf32, #tpu.memory_space<vmem>>, vector<1x16x16xf32>
    %308 = vector.shape_cast %307 : vector<1x16x16xf32> to vector<16x16xf32>
    %c10_315 = arith.constant 10 : index
    %c0_316 = arith.constant 0 : index
    %c0_317 = arith.constant 0 : index
    %309 = vector.load %arg4[%c10_315, %c0_316, %c0_317] : memref<14x16x16xf32, #tpu.memory_space<vmem>>, vector<1x16x16xf32>
    %310 = vector.shape_cast %309 : vector<1x16x16xf32> to vector<16x16xf32>
    %cst_318 = arith.constant dense<0.000000e+00> : vector<16x16xf32>
    %311 = tpu.matmul %308, %310, %cst_318 {dimension_numbers = #tpu.dot_dimension_numbers<[1], [0], [0], [1], [0, 0, 1, 1], [], []>} : vector<16x16xf32>, vector<16x16xf32>, vector<16x16xf32> -> vector<16x16xf32>
    %312 = arith.addf %306, %311 : vector<16x16xf32>
    %c1_319 = arith.constant 1 : index
    %c9_320 = arith.constant 9 : index
    %c0_321 = arith.constant 0 : index
    %313 = vector.load %arg9[%c1_319, %c9_320, %c0_321] : memref<2x27x16xf32, #tpu.memory_space<vmem>>, vector<1x16x16xf32>
    %314 = vector.shape_cast %313 : vector<1x16x16xf32> to vector<16x16xf32>
    %c11_322 = arith.constant 11 : index
    %c0_323 = arith.constant 0 : index
    %c0_324 = arith.constant 0 : index
    %315 = vector.load %arg4[%c11_322, %c0_323, %c0_324] : memref<14x16x16xf32, #tpu.memory_space<vmem>>, vector<1x16x16xf32>
    %316 = vector.shape_cast %315 : vector<1x16x16xf32> to vector<16x16xf32>
    %cst_325 = arith.constant dense<0.000000e+00> : vector<16x16xf32>
    %317 = tpu.matmul %314, %316, %cst_325 {dimension_numbers = #tpu.dot_dimension_numbers<[1], [0], [0], [1], [0, 0, 1, 1], [], []>} : vector<16x16xf32>, vector<16x16xf32>, vector<16x16xf32> -> vector<16x16xf32>
    %318 = arith.addf %312, %317 : vector<16x16xf32>
    %c1_326 = arith.constant 1 : index
    %c10_327 = arith.constant 10 : index
    %c0_328 = arith.constant 0 : index
    %319 = vector.load %arg9[%c1_326, %c10_327, %c0_328] : memref<2x27x16xf32, #tpu.memory_space<vmem>>, vector<1x16x16xf32>
    %320 = vector.shape_cast %319 : vector<1x16x16xf32> to vector<16x16xf32>
    %c12_329 = arith.constant 12 : index
    %c0_330 = arith.constant 0 : index
    %c0_331 = arith.constant 0 : index
    %321 = vector.load %arg4[%c12_329, %c0_330, %c0_331] : memref<14x16x16xf32, #tpu.memory_space<vmem>>, vector<1x16x16xf32>
    %322 = vector.shape_cast %321 : vector<1x16x16xf32> to vector<16x16xf32>
    %cst_332 = arith.constant dense<0.000000e+00> : vector<16x16xf32>
    %323 = tpu.matmul %320, %322, %cst_332 {dimension_numbers = #tpu.dot_dimension_numbers<[1], [0], [0], [1], [0, 0, 1, 1], [], []>} : vector<16x16xf32>, vector<16x16xf32>, vector<16x16xf32> -> vector<16x16xf32>
    %324 = arith.addf %318, %323 : vector<16x16xf32>
    %c1_333 = arith.constant 1 : index
    %c11_334 = arith.constant 11 : index
    %c0_335 = arith.constant 0 : index
    %325 = vector.load %arg9[%c1_333, %c11_334, %c0_335] : memref<2x27x16xf32, #tpu.memory_space<vmem>>, vector<1x16x16xf32>
    %326 = vector.shape_cast %325 : vector<1x16x16xf32> to vector<16x16xf32>
    %c13_336 = arith.constant 13 : index
    %c0_337 = arith.constant 0 : index
    %c0_338 = arith.constant 0 : index
    %327 = vector.load %arg4[%c13_336, %c0_337, %c0_338] : memref<14x16x16xf32, #tpu.memory_space<vmem>>, vector<1x16x16xf32>
    %328 = vector.shape_cast %327 : vector<1x16x16xf32> to vector<16x16xf32>
    %cst_339 = arith.constant dense<0.000000e+00> : vector<16x16xf32>
    %329 = tpu.matmul %326, %328, %cst_339 {dimension_numbers = #tpu.dot_dimension_numbers<[1], [0], [0], [1], [0, 0, 1, 1], [], []>} : vector<16x16xf32>, vector<16x16xf32>, vector<16x16xf32> -> vector<16x16xf32>
    %330 = arith.addf %324, %329 : vector<16x16xf32>
    %331 = arith.negf %330 : vector<16x16xf32>
    %332 = math.exp %331 : vector<16x16xf32>
    %cst_340 = arith.constant 1.000000e+00 : f32
    %333 = vector.broadcast %cst_340 : f32 to vector<16x16xf32>
    %334 = arith.addf %333, %332 : vector<16x16xf32>
    %335 = arith.divf %333, %334 : vector<16x16xf32>
    %cst_341 = arith.constant 0.333333343 : f32
    %336 = vector.broadcast %cst_341 : f32 to vector<16x16xf32>
    %337 = arith.mulf %335, %336 : vector<16x16xf32>
    %338 = tpu.iota {dimensions = array<i32: 0>} : vector<16x16xi32>
    %339 = tpu.iota {dimensions = array<i32: 1>} : vector<16x16xi32>
    %340 = arith.cmpi eq, %338, %339 : vector<16x16xi32>
    %341 = arith.extui %340 : vector<16x16xi1> to vector<16x16xi32>
    %342 = arith.sitofp %341 : vector<16x16xi32> to vector<16x16xf32>
    %cst_342 = arith.constant dense<0.000000e+00> : vector<16x4xf32>
    %343 = tpu.matmul %342, %244, %cst_342 {dimension_numbers = #tpu.dot_dimension_numbers<[1], [1], [0], [0], [0, 0, 1, 0], [], []>} : vector<16x16xf32>, vector<4x16xf32>, vector<16x4xf32> -> vector<16x4xf32>
    %c0_343 = arith.constant 0 : index
    %c0_344 = arith.constant 0 : index
    %c0_345 = arith.constant 0 : index
    %c0_346 = arith.constant 0 : index
    %344 = vector.load %arg1[%c0_343, %c0_344, %c0_345, %c0_346] : memref<1x4x16x16xf32, #tpu.memory_space<vmem>>, vector<1x1x16x16xf32>
    %345 = vector.shape_cast %344 : vector<1x1x16x16xf32> to vector<16x16xf32>
    %346 = vector.extract_strided_slice %151 {offsets = [0, 0], sizes = [1, 16], strides = [1, 1]} : vector<4x16xf32> to vector<1x16xf32>
    %347 = vector.broadcast %346 : vector<1x16xf32> to vector<16x16xf32>
    %348 = arith.addf %337, %347 : vector<16x16xf32>
    %349 = vector.extract_strided_slice %343 {offsets = [0, 0], sizes = [16, 1], strides = [1, 1]} : vector<16x4xf32> to vector<16x1xf32>
    %350 = vector.broadcast %349 : vector<16x1xf32> to vector<16x16xf32>
    %351 = arith.addf %348, %350 : vector<16x16xf32>
    %352 = arith.mulf %345, %351 : vector<16x16xf32>
    %c0_347 = arith.constant 0 : index
    %c0_348 = arith.constant 0 : index
    %c0_349 = arith.constant 0 : index
    %c0_350 = arith.constant 0 : index
    %353 = vector.load %arg6[%c0_347, %c0_348, %c0_349, %c0_350] : memref<1x4x16x16xf32, #tpu.memory_space<vmem>>, vector<1x1x16x16xf32>
    %354 = vector.shape_cast %353 : vector<1x1x16x16xf32> to vector<16x16xf32>
    %355 = vector.shape_cast %352 : vector<16x16xf32> to vector<1x1x16x16xf32>
    tpu.vector_store %arg6[%c0_347, %c0_348, %c0_349, %c0_350], %355 {strides = array<i32>} : memref<1x4x16x16xf32, #tpu.memory_space<vmem>>, vector<1x1x16x16xf32>,
    %c0_351 = arith.constant 0 : index
    %c1_352 = arith.constant 1 : index
    %c0_353 = arith.constant 0 : index
    %c0_354 = arith.constant 0 : index
    %356 = vector.load %arg1[%c0_351, %c1_352, %c0_353, %c0_354] : memref<1x4x16x16xf32, #tpu.memory_space<vmem>>, vector<1x1x16x16xf32>
    %357 = vector.shape_cast %356 : vector<1x1x16x16xf32> to vector<16x16xf32>
    %358 = vector.extract_strided_slice %151 {offsets = [1, 0], sizes = [1, 16], strides = [1, 1]} : vector<4x16xf32> to vector<1x16xf32>
    %359 = vector.broadcast %358 : vector<1x16xf32> to vector<16x16xf32>
    %360 = arith.addf %337, %359 : vector<16x16xf32>
    %361 = vector.extract_strided_slice %343 {offsets = [0, 1], sizes = [16, 1], strides = [1, 1]} : vector<16x4xf32> to vector<16x1xf32>
    %362 = vector.broadcast %361 : vector<16x1xf32> to vector<16x16xf32>
    %363 = arith.addf %360, %362 : vector<16x16xf32>
    %364 = arith.mulf %357, %363 : vector<16x16xf32>
    %c0_355 = arith.constant 0 : index
    %c1_356 = arith.constant 1 : index
    %c0_357 = arith.constant 0 : index
    %c0_358 = arith.constant 0 : index
    %365 = vector.load %arg6[%c0_355, %c1_356, %c0_357, %c0_358] : memref<1x4x16x16xf32, #tpu.memory_space<vmem>>, vector<1x1x16x16xf32>
    %366 = vector.shape_cast %365 : vector<1x1x16x16xf32> to vector<16x16xf32>
    %367 = vector.shape_cast %364 : vector<16x16xf32> to vector<1x1x16x16xf32>
    tpu.vector_store %arg6[%c0_355, %c1_356, %c0_357, %c0_358], %367 {strides = array<i32>} : memref<1x4x16x16xf32, #tpu.memory_space<vmem>>, vector<1x1x16x16xf32>,
    %c0_359 = arith.constant 0 : index
    %c2_360 = arith.constant 2 : index
    %c0_361 = arith.constant 0 : index
    %c0_362 = arith.constant 0 : index
    %368 = vector.load %arg1[%c0_359, %c2_360, %c0_361, %c0_362] : memref<1x4x16x16xf32, #tpu.memory_space<vmem>>, vector<1x1x16x16xf32>
    %369 = vector.shape_cast %368 : vector<1x1x16x16xf32> to vector<16x16xf32>
    %370 = vector.extract_strided_slice %151 {offsets = [2, 0], sizes = [1, 16], strides = [1, 1]} : vector<4x16xf32> to vector<1x16xf32>
    %371 = vector.broadcast %370 : vector<1x16xf32> to vector<16x16xf32>
    %372 = arith.addf %337, %371 : vector<16x16xf32>
    %373 = vector.extract_strided_slice %343 {offsets = [0, 2], sizes = [16, 1], strides = [1, 1]} : vector<16x4xf32> to vector<16x1xf32>
    %374 = vector.broadcast %373 : vector<16x1xf32> to vector<16x16xf32>
    %375 = arith.addf %372, %374 : vector<16x16xf32>
    %376 = arith.mulf %369, %375 : vector<16x16xf32>
    %c0_363 = arith.constant 0 : index
    %c2_364 = arith.constant 2 : index
    %c0_365 = arith.constant 0 : index
    %c0_366 = arith.constant 0 : index
    %377 = vector.load %arg6[%c0_363, %c2_364, %c0_365, %c0_366] : memref<1x4x16x16xf32, #tpu.memory_space<vmem>>, vector<1x1x16x16xf32>
    %378 = vector.shape_cast %377 : vector<1x1x16x16xf32> to vector<16x16xf32>
    %379 = vector.shape_cast %376 : vector<16x16xf32> to vector<1x1x16x16xf32>
    tpu.vector_store %arg6[%c0_363, %c2_364, %c0_365, %c0_366], %379 {strides = array<i32>} : memref<1x4x16x16xf32, #tpu.memory_space<vmem>>, vector<1x1x16x16xf32>,
    %c0_367 = arith.constant 0 : index
    %c3_368 = arith.constant 3 : index
    %c0_369 = arith.constant 0 : index
    %c0_370 = arith.constant 0 : index
    %380 = vector.load %arg1[%c0_367, %c3_368, %c0_369, %c0_370] : memref<1x4x16x16xf32, #tpu.memory_space<vmem>>, vector<1x1x16x16xf32>
    %381 = vector.shape_cast %380 : vector<1x1x16x16xf32> to vector<16x16xf32>
    %382 = vector.extract_strided_slice %151 {offsets = [3, 0], sizes = [1, 16], strides = [1, 1]} : vector<4x16xf32> to vector<1x16xf32>
    %383 = vector.broadcast %382 : vector<1x16xf32> to vector<16x16xf32>
    %384 = arith.addf %337, %383 : vector<16x16xf32>
    %385 = vector.extract_strided_slice %343 {offsets = [0, 3], sizes = [16, 1], strides = [1, 1]} : vector<16x4xf32> to vector<16x1xf32>
    %386 = vector.broadcast %385 : vector<16x1xf32> to vector<16x16xf32>
    %387 = arith.addf %384, %386 : vector<16x16xf32>
    %388 = arith.mulf %381, %387 : vector<16x16xf32>
    %c0_371 = arith.constant 0 : index
    %c3_372 = arith.constant 3 : index
    %c0_373 = arith.constant 0 : index
    %c0_374 = arith.constant 0 : index
    %389 = vector.load %arg6[%c0_371, %c3_372, %c0_373, %c0_374] : memref<1x4x16x16xf32, #tpu.memory_space<vmem>>, vector<1x1x16x16xf32>
    %390 = vector.shape_cast %389 : vector<1x1x16x16xf32> to vector<16x16xf32>
    %391 = vector.shape_cast %388 : vector<16x16xf32> to vector<1x1x16x16xf32>
    tpu.vector_store %arg6[%c0_371, %c3_372, %c0_373, %c0_374], %391 {strides = array<i32>} : memref<1x4x16x16xf32, #tpu.memory_space<vmem>>, vector<1x1x16x16xf32>,
    return
  }
  func.func @transform_0(%arg0: i32) -> (i32, i32, i32, i32) {
    %c0_i32 = arith.constant 0 : i32
    %c0_i32_0 = arith.constant 0 : i32
    %c0_i32_1 = arith.constant 0 : i32
    %c0_i32_2 = arith.constant 0 : i32
    return %arg0, %c0_i32, %c0_i32_0, %c0_i32_1 : i32, i32, i32, i32
  }
  func.func @transform_1(%arg0: i32) -> (i32, i32, i32) {
    %c0_i32 = arith.constant 0 : i32
    %c0_i32_0 = arith.constant 0 : i32
    %c0_i32_1 = arith.constant 0 : i32
    %c0_i32_2 = arith.constant 0 : i32
    return %c0_i32, %c0_i32_0, %c0_i32_1 : i32, i32, i32
  }
  func.func @transform_2(%arg0: i32) -> (i32, i32, i32) {
    %c0_i32 = arith.constant 0 : i32
    %c0_i32_0 = arith.constant 0 : i32
    %c0_i32_1 = arith.constant 0 : i32
    %c0_i32_2 = arith.constant 0 : i32
    return %c0_i32, %c0_i32_0, %c0_i32_1 : i32, i32, i32
  }
  func.func @transform_3(%arg0: i32) -> (i32, i32, i32) {
    %c0_i32 = arith.constant 0 : i32
    %c0_i32_0 = arith.constant 0 : i32
    %c0_i32_1 = arith.constant 0 : i32
    %c0_i32_2 = arith.constant 0 : i32
    return %c0_i32, %c0_i32_0, %c0_i32_1 : i32, i32, i32
  }
  func.func @transform_4(%arg0: i32) -> i32 {
    %c0_i32 = arith.constant 0 : i32
    %c0_i32_0 = arith.constant 0 : i32
    return %c0_i32 : i32
  }
  func.func @transform_5(%arg0: i32) -> (i32, i32, i32, i32) {
    %c0_i32 = arith.constant 0 : i32
    %c0_i32_0 = arith.constant 0 : i32
    %c0_i32_1 = arith.constant 0 : i32
    %c0_i32_2 = arith.constant 0 : i32
    return %arg0, %c0_i32, %c0_i32_0, %c0_i32_1 : i32, i32, i32, i32
  }
}

</mosaic_0001>

<llo_original>
// kernel: tpu_custom_call.1
$region0: #{tpu_custom_call.1}
  #allocation0 [shape = 'u32[]', space=smem, size = 0x4, offset = 0x4, fixed_abs, tag = 'smem constant byte address 0x4 - core index']
  #allocation1 [shape = 'u32[144,128]{1,0:T(1,128)}', space=vmem, size = 0x12000, scoped, tag = 'internal scratch']
  #allocation2 [shape = 'f32[2,15,16]{2,1,0:T(8,128)}', space=vmem, size = 0x4000, scoped, tag = 'scratch operand']
  #allocation3 [shape = 'f32[2,15,16]{2,1,0:T(8,128)}', space=vmem, size = 0x4000, scoped, tag = 'scratch operand']
  #allocation4 [shape = 'f32[2,27,16]{2,1,0:T(8,128)}', space=vmem, size = 0x8000, scoped, tag = 'scratch operand']
  %s0 = inlined_call_operand.hbm [shape: f32[2,4,16,16], index: 0, kind: input, shape index: {}, may-alias: {0,5}]
  %s1 = inlined_call_operand.vmem [shape: f32[14,16,16], index: 1, kind: input, shape index: {}]
  %s2 = inlined_call_operand.hbm [shape: f32[14,16,16], index: 2, kind: input, shape index: {}]
  %s3 = inlined_call_operand.hbm [shape: f32[14,16,16], index: 3, kind: input, shape index: {}]
  %s4 = inlined_call_operand.vmem [shape: f32[3], index: 4, kind: input, shape index: {}]
  %s5 = inlined_call_operand.hbm [shape: f32[2,4,16,16], index: 5, kind: output, shape index: {}, may-alias: {0,5}]
  %s6 = sld [smem:[#allocation0]]
  $region69: #{tpu_custom_call.1} parent=0
    _
  %s8 = ssub.s32 1, %s6
  %s9 = scalar_select 0, %s8, %s6
  $region1: #{tpu_custom_call.1} parent=0
    #allocation5 [shape = 'u8[65536]{0}', space=vmem, size = 0x10000, scoped, tag = 'input window, operand 0']
    #allocation6 [shape = 's32[2]{0}', space=sflag, size = 0x8, scoped, tag = 'scoped memory for tpu_custom_call.1']
    #allocation7 [shape = 's32[2]{0}', space=sflag, size = 0x8, scoped, tag = 'scoped memory for tpu_custom_call.1']
    #allocation8 [shape = 's32[2]{0}', space=sflag, size = 0x8, scoped, tag = 'scoped memory for tpu_custom_call.1']
    #allocation9 [shape = 'u8[114688]{0}', space=vmem, size = 0x1c000, scoped, tag = 'input window, operand 2, single buffered']
    #allocation10 [shape = 's32[1]{0}', space=sflag, size = 0x4, scoped, tag = 'scoped memory for tpu_custom_call.1']
    #allocation11 [shape = 'u8[114688]{0}', space=vmem, size = 0x1c000, scoped, tag = 'input window, operand 3, single buffered']
    #allocation12 [shape = 'u8[512]{0}', space=smem, size = 0x200, scoped, tag = 'input window, operand 4, single buffered']
    #allocation13 [shape = 'u8[65536]{0}', space=vmem, size = 0x10000, scoped, tag = 'output window, operand 0']
    %10 = vsyncpa [#allocation6], 0
    %s11 = scalar_lea.sflag [#allocation6], 1
    %12 = vsyncpa %s11, 0
    %13 = vsyncpa [#allocation10], 0
    %14 = vsyncpa [#allocation8], 0
    %15 = vsyncpa [#allocation7], 0
    %s16 = scalar_lea.sflag [#allocation7], 1
    %17 = vsyncpa %s16, 0
    loop: start=0, step=1, limit=4
    $region2: #{tpu_custom_call.1} parent=1 // loop_pre_header
      _
    $region3: #{tpu_custom_call.1} parent=1 // loop_header
      %s19 = sphi 0, %s23
      %p20 = scmp.ge.s32.totalorder %s19, 4
      %s29 = sphi 0, %s31
      %s32 = sphi 0, %s29
      %s33 = sphi 0, %s32
      %s49 = sphi 0, %s33
      %s53 = sphi 0, %s53
      %s55 = sphi 0, %s53
      %s56 = sphi 0, %s55
      %s70 = sphi 0, %s56
      %s74 = sphi 0, %s74
      %s76 = sphi 0, %s74
      %s77 = sphi 0, %s76
      %s91 = sphi 0, %s77
      %s95 = sphi 0, %s95
      %s97 = sphi 0, %s95
      %s98 = sphi 0, %s97
      %s112 = sphi 0, %s98
      %s116 = sphi 0, %s116
      %s118 = sphi 0, %s116
      %s119 = sphi 0, %s118
      %s133 = sphi 0, %s119
      %s139 = sphi 0, %s141
      %s142 = sphi 0, %s139
      %s143 = sphi 0, %s142
      %s159 = sphi 0, %s143
    $region4: #{tpu_custom_call.1} parent=1 // loop_header_branch
      %22 = sbr.rel (%p20) target = $region8
    $region5: #{tpu_custom_call.1} parent=1 // loop_body
      %s24 = ssub.s32 %s19, 1
      %s25 = ssub.s32 %s19, 2
      %s26 = sadd.s32 %s19, 1
      %s27 = ssub.s32 %s19, %s26
      %p28 = scmp.eq.s32.totalorder %s27, 0
      %s30 = sadd.s32 %s29, 1
      %s31 = scalar_select %p28, %s29, %s30
      %p34 = pneg %p28
      %p35 = scmp.eq.s32.totalorder %s19, 1
      %p36 = por %p34, %p35
      %p37 = scmp.ne.s32.totalorder %s29, %s32
      %p38 = scmp.eq.s32.totalorder %s19, 0
      %p39 = por %p37, %p38
      %p40 = scmp.ne.s32.totalorder %s29, %s32
      %p41 = scmp.eq.s32.totalorder %s24, 1
      %p42 = por %p40, %p41
      %p43 = scmp.ne.s32.totalorder %s32, %s33
      %p44 = scmp.eq.s32.totalorder %s24, 0
      %p45 = por %p43, %p44
      %p46 = scmp.ne.s32.totalorder %s32, %s33
      %p47 = scmp.eq.s32.totalorder %s25, 1
      %p48 = por %p46, %p47
      %p50 = scmp.ne.s32.totalorder %s33, %s49
      %p51 = scmp.eq.s32.totalorder %s25, 0
      %p52 = por %p50, %p51
      %s54 = sadd.s32 %s53, 1
      %p57 = scmp.eq.s32.totalorder %s19, 1
      %p58 = scmp.ne.s32.totalorder %s53, %s55
      %p59 = scmp.eq.s32.totalorder %s19, 0
      %p60 = por %p58, %p59
      %p61 = scmp.ne.s32.totalorder %s53, %s55
      %p62 = scmp.eq.s32.totalorder %s24, 1
      %p63 = por %p61, %p62
      %p64 = scmp.ne.s32.totalorder %s55, %s56
      %p65 = scmp.eq.s32.totalorder %s24, 0
      %p66 = por %p64, %p65
      %p67 = scmp.ne.s32.totalorder %s55, %s56
      %p68 = scmp.eq.s32.totalorder %s25, 1
      %p69 = por %p67, %p68
      %p71 = scmp.ne.s32.totalorder %s56, %s70
      %p72 = scmp.eq.s32.totalorder %s25, 0
      %p73 = por %p71, %p72
      %s75 = sadd.s32 %s74, 1
      %p78 = scmp.eq.s32.totalorder %s19, 1
      %p79 = scmp.ne.s32.totalorder %s74, %s76
      %p80 = scmp.eq.s32.totalorder %s19, 0
      %p81 = por %p79, %p80
      %p82 = scmp.ne.s32.totalorder %s74, %s76
      %p83 = scmp.eq.s32.totalorder %s24, 1
      %p84 = por %p82, %p83
      %p85 = scmp.ne.s32.totalorder %s76, %s77
      %p86 = scmp.eq.s32.totalorder %s24, 0
      %p87 = por %p85, %p86
      %p88 = scmp.ne.s32.totalorder %s76, %s77
      %p89 = scmp.eq.s32.totalorder %s25, 1
      %p90 = por %p88, %p89
      %p92 = scmp.ne.s32.totalorder %s77, %s91
      %p93 = scmp.eq.s32.totalorder %s25, 0
      %p94 = por %p92, %p93
      %s96 = sadd.s32 %s95, 1
      %p99 = scmp.eq.s32.totalorder %s19, 1
      %p100 = scmp.ne.s32.totalorder %s95, %s97
      %p101 = scmp.eq.s32.totalorder %s19, 0
      %p102 = por %p100, %p101
      %p103 = scmp.ne.s32.totalorder %s95, %s97
      %p104 = scmp.eq.s32.totalorder %s24, 1
      %p105 = por %p103, %p104
      %p106 = scmp.ne.s32.totalorder %s97, %s98
      %p107 = scmp.eq.s32.totalorder %s24, 0
      %p108 = por %p106, %p107
      %p109 = scmp.ne.s32.totalorder %s97, %s98
      %p110 = scmp.eq.s32.totalorder %s25, 1
      %p111 = por %p109, %p110
      %p113 = scmp.ne.s32.totalorder %s98, %s112
      %p114 = scmp.eq.s32.totalorder %s25, 0
      %p115 = por %p113, %p114
      %s117 = sadd.s32 %s116, 1
      %p120 = scmp.eq.s32.totalorder %s19, 1
      %p121 = scmp.ne.s32.totalorder %s116, %s118
      %p122 = scmp.eq.s32.totalorder %s19, 0
      %p123 = por %p121, %p122
      %p124 = scmp.ne.s32.totalorder %s116, %s118
      %p125 = scmp.eq.s32.totalorder %s24, 1
      %p126 = por %p124, %p125
      %p127 = scmp.ne.s32.totalorder %s118, %s119
      %p128 = scmp.eq.s32.totalorder %s24, 0
      %p129 = por %p127, %p128
      %p130 = scmp.ne.s32.totalorder %s118, %s119
      %p131 = scmp.eq.s32.totalorder %s25, 1
      %p132 = por %p130, %p131
      %p134 = scmp.ne.s32.totalorder %s119, %s133
      %p135 = scmp.eq.s32.totalorder %s25, 0
      %p136 = por %p134, %p135
      %s137 = ssub.s32 %s19, %s26
      %p138 = scmp.eq.s32.totalorder %s137, 0
      %s140 = sadd.s32 %s139, 1
      %s141 = scalar_select %p138, %s139, %s140
      %p144 = pneg %p138
      %p145 = scmp.eq.s32.totalorder %s19, 1
      %p146 = por %p144, %p145
      %p147 = scmp.ne.s32.totalorder %s139, %s142
      %p148 = scmp.eq.s32.totalorder %s19, 0
      %p149 = por %p147, %p148
      %p150 = scmp.ne.s32.totalorder %s139, %s142
      %p151 = scmp.eq.s32.totalorder %s24, 1
      %p152 = por %p150, %p151
      %p153 = scmp.ne.s32.totalorder %s142, %s143
      %p154 = scmp.eq.s32.totalorder %s24, 0
      %p155 = por %p153, %p154
      %p156 = scmp.ne.s32.totalorder %s142, %s143
      %p157 = scmp.eq.s32.totalorder %s25, 1
      %p158 = por %p156, %p157
      %p160 = scmp.ne.s32.totalorder %s143, %s159
      %p161 = scmp.eq.s32.totalorder %s25, 0
      %p162 = por %p160, %p161
      %p163 = scmp.le.s32.totalorder 1, %s19
      %p164 = scmp.lt.s32.totalorder %s19, 3
      %p165 = pnand %p163, %p164
      %p166 = pneg %p165
      // Predicated region
      $region9: #{tpu_custom_call.1} parent=5 // pred_check
        _
      $region10: #{tpu_custom_call.1} parent=5 // pred_check_branch
        %168 = sbr.rel (%p165) target = $region12
      $region11: #{tpu_custom_call.1} parent=5 // pred_region
        %s169 = ssub.s32 %s19, 1
        // Predicated region
        $region13: #{tpu_custom_call.1} parent=11 // pred_check
          %p170 = pneg %p66
        $region14: #{tpu_custom_call.1} parent=11 // pred_check_branch
          %172 = sbr.rel (%p170) target = $region16
        $region15: #{tpu_custom_call.1} parent=11 // pred_region
          _
        $region16: #{tpu_custom_call.1} parent=11 // pred_fallthru
          _
        // Predicated region
        $region17: #{tpu_custom_call.1} parent=11 // pred_check
          %p173 = pneg %p87
        $region18: #{tpu_custom_call.1} parent=11 // pred_check_branch
          %175 = sbr.rel (%p173) target = $region20
        $region19: #{tpu_custom_call.1} parent=11 // pred_region
          %s177 = ssub.s32 3584, 3584
          %178 = vsyncadd [#allocation10], %s177
          %s179 = sshll.u32 [#allocation9], 4
          %s180 = int_to_ptr.vmem [resolvable:$true] %s179
          %185 = dma.hbm_to_vmem [thread:$0]  %s2, 3584, %s180, [#allocation10], 128, 128, 8
        $region20: #{tpu_custom_call.1} parent=11 // pred_fallthru
          _
        // Predicated region
        $region21: #{tpu_custom_call.1} parent=11 // pred_check
          %p186 = pneg %p108
        $region22: #{tpu_custom_call.1} parent=11 // pred_check_branch
          %188 = sbr.rel (%p186) target = $region24
        $region23: #{tpu_custom_call.1} parent=11 // pred_region
          %s190 = ssub.s32 3584, 3584
          %191 = vsyncadd [#allocation10], %s190
          %s192 = sshll.u32 [#allocation11], 4
          %s193 = int_to_ptr.vmem [resolvable:$true] %s192
          %198 = dma.hbm_to_vmem [thread:$0]  %s3, 3584, %s193, [#allocation10], 128, 128, 8
        $region24: #{tpu_custom_call.1} parent=11 // pred_fallthru
          _
        // Predicated region
        $region25: #{tpu_custom_call.1} parent=11 // pred_check
          %p199 = pneg %p129
        $region26: #{tpu_custom_call.1} parent=11 // pred_check_branch
          %201 = sbr.rel (%p199) target = $region28
        $region27: #{tpu_custom_call.1} parent=11 // pred_region
          %s203 = ssub.s32 16, 16
          %204 = vsyncadd [#allocation8], %s203
          %s206 = sshll.u32 %s4, 4
          %s207 = int_to_ptr.vmem [resolvable:$true] %s206
          %209 = dma.vmem_to_smem %s207, 16, [#allocation12], [#allocation8]
        $region28: #{tpu_custom_call.1} parent=11 // pred_fallthru
          _
      $region12: #{tpu_custom_call.1} parent=5 // pred_fallthru
        _
      %p210 = scmp.lt.s32.totalorder %s19, 2
      // Predicated region
      $region29: #{tpu_custom_call.1} parent=5 // pred_check
        %p211 = pneg %p210
      $region30: #{tpu_custom_call.1} parent=5 // pred_check_branch
        %213 = sbr.rel (%p211) target = $region32
      $region31: #{tpu_custom_call.1} parent=5 // pred_region
        // Predicated region
        $region33: #{tpu_custom_call.1} parent=31 // pred_check
          %p214 = pneg %p39
        $region34: #{tpu_custom_call.1} parent=31 // pred_check_branch
          %216 = sbr.rel (%p214) target = $region36
        $region35: #{tpu_custom_call.1} parent=31 // pred_region
          %s217 = sand.u32 %s29, 1
          %s218 = scalar_lea.sflag [#allocation6], %s217
          %s219 = sand.u32 %s29, 1
          %s220 = smul.addr %s219, 64
          %s221 = scalar_lea.vmem [#allocation5], %s220
          %s223 = ssub.s32 1024, 1024
          %224 = vsyncadd %s218, %s223
          %s225 = smul.addr %s19, 8
          %s226 = smul.addr %s225, 128
          %s227 = scalar_lea.hbm %s0, %s226
          %s228 = sshll.u32 %s221, 4
          %s229 = int_to_ptr.vmem [resolvable:$true] %s228
          %234 = dma.hbm_to_vmem [thread:$0]  %s227, 1024, %s229, %s218, 128, 128, 8
        $region36: #{tpu_custom_call.1} parent=31 // pred_fallthru
          _
      $region32: #{tpu_custom_call.1} parent=5 // pred_fallthru
        _
      %p235 = scmp.le.s32.totalorder 1, %s19
      %p236 = scmp.lt.s32.totalorder %s19, 3
      %p237 = pnand %p235, %p236
      %p238 = pneg %p237
      // Predicated region
      $region37: #{tpu_custom_call.1} parent=5 // pred_check
        _
      $region38: #{tpu_custom_call.1} parent=5 // pred_check_branch
        %240 = sbr.rel (%p237) target = $region40
      $region39: #{tpu_custom_call.1} parent=5 // pred_region
        %s241 = ssub.s32 %s19, 1
        %s242 = sand.u32 %s32, 1
        %s243 = scalar_lea.sflag [#allocation6], %s242
        %s244 = sand.u32 %s32, 1
        %s245 = smul.addr %s244, 64
        %s246 = scalar_lea.vmem [#allocation5], %s245
        // Predicated region
        $region41: #{tpu_custom_call.1} parent=39 // pred_check
          %p247 = pneg %p45
        $region42: #{tpu_custom_call.1} parent=39 // pred_check_branch
          %249 = sbr.rel (%p247) target = $region44
        $region43: #{tpu_custom_call.1} parent=39 // pred_region
          %250 = dma.done %s243, 1024
        $region44: #{tpu_custom_call.1} parent=39 // pred_fallthru
          _
        // Predicated region
        $region45: #{tpu_custom_call.1} parent=39 // pred_check
          %p251 = pneg %p87
        $region46: #{tpu_custom_call.1} parent=39 // pred_check_branch
          %253 = sbr.rel (%p251) target = $region48
        $region47: #{tpu_custom_call.1} parent=39 // pred_region
          %254 = dma.done [#allocation10], 3584
        $region48: #{tpu_custom_call.1} parent=39 // pred_fallthru
          _
        // Predicated region
        $region49: #{tpu_custom_call.1} parent=39 // pred_check
          %p255 = pneg %p108
        $region50: #{tpu_custom_call.1} parent=39 // pred_check_branch
          %257 = sbr.rel (%p255) target = $region52
        $region51: #{tpu_custom_call.1} parent=39 // pred_region
          %258 = dma.done [#allocation10], 3584
        $region52: #{tpu_custom_call.1} parent=39 // pred_fallthru
          _
        // Predicated region
        $region53: #{tpu_custom_call.1} parent=39 // pred_check
          %p259 = pneg %p129
        $region54: #{tpu_custom_call.1} parent=39 // pred_check_branch
          %261 = sbr.rel (%p259) target = $region56
        $region55: #{tpu_custom_call.1} parent=39 // pred_region
          %262 = dma.done [#allocation8], 16
        $region56: #{tpu_custom_call.1} parent=39 // pred_fallthru
          _
        %263 = sfence
        %s264 = sand.u32 %s32, 1
        %s265 = scalar_lea.sflag [#allocation6], %s264
        %s266 = sand.u32 %s32, 1
        %s267 = smul.addr %s266, 64
        %s268 = scalar_lea.vmem [#allocation5], %s267
        %p269 = pneg %p45
        %p270 = pneg %p42
        %p271 = pneg %p66
        %p272 = pneg %p63
        %p273 = pneg %p87
        %p274 = pneg %p84
        %p275 = pneg %p108
        %p276 = pneg %p105
        %p277 = pneg %p129
        %p278 = pneg %p126
        %p279 = pneg %p155
        %p280 = pneg %p152
        %s281 = sand.u32 %s142, 1
        %s282 = scalar_lea.sflag [#allocation7], %s281
        %s283 = sand.u32 %s142, 1
        %s284 = smul.addr %s283, 64
        %s285 = scalar_lea.vmem [#allocation13], %s284
        %vm286 = vcmask 124928
        %287 = vst.msk [vmem:[#allocation2 + $0x5] sm:$0x7] %vm286, 0.0
        %288 = vst.msk [vmem:[#allocation2 + $0x15] sm:$0x7] %vm286, 0.0
        %289 = vst.msk [vmem:[#allocation2 + $0xc] sm:$0x7] %vm286, 0.0
        %290 = vst.msk [vmem:[#allocation2 + $0x1c] sm:$0x7] %vm286, 0.0
        %291 = vst.msk [vmem:[#allocation3 + $0x5] sm:$0x7] %vm286, 0.0
        %292 = vst.msk [vmem:[#allocation3 + $0x15] sm:$0x7] %vm286, 0.0
        %293 = vst.msk [vmem:[#allocation3 + $0xc] sm:$0x7] %vm286, 0.0
        %294 = vst.msk [vmem:[#allocation3 + $0x1c] sm:$0x7] %vm286, 0.0
        %295 = vst.msk [vmem:[#allocation4 + $0x5] sm:$0x7] %vm286, 0.0
        %296 = vst.msk [vmem:[#allocation4 + $0x25] sm:$0x7] %vm286, 0.0
        %297 = vst.msk [vmem:[#allocation4 + $0x18] sm:$0x7] %vm286, 0.0
        %298 = vst.msk [vmem:[#allocation4 + $0x38] sm:$0x7] %vm286, 0.0
        %s299 = smul.u32 0, 16
        %s300 = scalar_lea.vmem %s246, %s299 [#allocation5]
        %v301 = vld [vmem:[%s300] sm:$0xff]
        %v302 = vld [vmem:[%s300 + $0x8] sm:$0xff]
        %v303 = vld [vmem:[%s300 + $0x10] sm:$0xff]
        %v304 = vld [vmem:[%s300 + $0x18] sm:$0xff]
        %v305 = vld [vmem:[%s300 + $0x20] sm:$0xff]
        %v306 = vld [vmem:[%s300 + $0x28] sm:$0xff]
        %v307 = vld [vmem:[%s300 + $0x30] sm:$0xff]
        %v308 = vld [vmem:[%s300 + $0x38] sm:$0xff]
        %vm309 = vcmask 130048
        %v310 = vsel %vm309, %v301, -inf
        %v311 = vsel %vm309, %v303, -inf
        %v312 = vsel %vm309, %v305, -inf
        %v313 = vmax.f32 %v310, %v312
        %v314 = vsel %vm309, %v307, -inf
        %v315 = vmax.f32 %v311, %v314
        %v316 = vmax.f32 %v313, %v315
        %v317 = vsel %vm309, %v302, -inf
        %v318 = vsel %vm309, %v304, -inf
        %v319 = vsel %vm309, %v306, -inf
        %v320 = vmax.f32 %v317, %v319
        %v321 = vsel %vm309, %v308, -inf
        %v322 = vmax.f32 %v318, %v321
        %v323 = vmax.f32 %v320, %v322
        %v324 = vsel %vm309, %v301, 0.0
        %v325 = vsel %vm309, %v303, 0.0
        %v326 = vadd.f32 %v324, %v325
        %v327 = vsel %vm309, %v305, 0.0
        %v328 = vadd.f32 %v326, %v327
        %v329 = vsel %vm309, %v307, 0.0
        %v330 = vadd.f32 %v328, %v329
        %v331 = vsel %vm309, %v302, 0.0
        %v332 = vsel %vm309, %v304, 0.0
        %v333 = vadd.f32 %v331, %v332
        %v334 = vsel %vm309, %v306, 0.0
        %v335 = vadd.f32 %v333, %v334
        %v336 = vsel %vm309, %v308, 0.0
        %v337 = vadd.f32 %v335, %v336
        %v338 = vadd.f32 %v330, 0.0
        %v339 = vadd.f32 %v337, 0.0
        %v340 = vmax.f32 %v310, %v317
        %v341 = vrot.slane %v340, 4
        %v342 = vmax.f32 %v340, %v341
        %v343 = vrot.slane %v342, 2
        %v344 = vmax.f32 %v342, %v343
        %v345 = vrot.slane %v344, 1
        %v346 = vmax.f32 %v344, %v345
        %v347 = vmax.f32 %v311, %v318
        %v348 = vrot.slane %v347, 4
        %v349 = vmax.f32 %v347, %v348
        %v350 = vrot.slane %v349, 2
        %v351 = vmax.f32 %v349, %v350
        %v352 = vrot.slane %v351, 1
        %v353 = vmax.f32 %v351, %v352
        %v354 = vmax.f32 %v312, %v319
        %v355 = vrot.slane %v354, 4
        %v356 = vmax.f32 %v354, %v355
        %v357 = vrot.slane %v356, 2
        %v358 = vmax.f32 %v356, %v357
        %v359 = vrot.slane %v358, 1
        %v360 = vmax.f32 %v358, %v359
        %v361 = vmax.f32 %v314, %v321
        %v362 = vrot.slane %v361, 4
        %v363 = vmax.f32 %v361, %v362
        %v364 = vrot.slane %v363, 2
        %v365 = vmax.f32 %v363, %v364
        %v366 = vrot.slane %v365, 1
        %v367 = vmax.f32 %v365, %v366
        %s368 = sadd.s32 0, 8
        %vm373 = vcmask 1041409
        %v374 = vsel %vm373, %v353, %v346
        %vm375 = vcmask 1042434
        %v376 = vsel %vm375, %v360, %v374
        %vm377 = vcmask 1043459
        %v378 = vsel %vm377, %v367, %v376
        %s380 = scalar_lea.vmem [#allocation2], %s368
        %vm381 = vcmask 125952
        %382 = vst.msk [vmem:[%s380] sm:$0xf] %vm381, %v378
        %v383 = vadd.f32 %v324, %v331
        %v384 = vrot.slane %v383, 4
        %v385 = vadd.f32 %v383, %v384
        %v386 = vrot.slane %v385, 2
        %v387 = vadd.f32 %v385, %v386
        %v388 = vrot.slane %v387, 1
        %v389 = vadd.f32 %v387, %v388
        %v390 = vadd.f32 %v325, %v332
        %v391 = vrot.slane %v390, 4
        %v392 = vadd.f32 %v390, %v391
        %v393 = vrot.slane %v392, 2
        %v394 = vadd.f32 %v392, %v393
        %v395 = vrot.slane %v394, 1
        %v396 = vadd.f32 %v394, %v395
        %v397 = vadd.f32 %v327, %v334
        %v398 = vrot.slane %v397, 4
        %v399 = vadd.f32 %v397, %v398
        %v400 = vrot.slane %v399, 2
        %v401 = vadd.f32 %v399, %v400
        %v402 = vrot.slane %v401, 1
        %v403 = vadd.f32 %v401, %v402
        %v404 = vadd.f32 %v329, %v336
        %v405 = vrot.slane %v404, 4
        %v406 = vadd.f32 %v404, %v405
        %v407 = vrot.slane %v406, 2
        %v408 = vadd.f32 %v406, %v407
        %v409 = vrot.slane %v408, 1
        %v410 = vadd.f32 %v408, %v409
        %v411 = vrcp.pop 16.0
        %v412 = vmul.f32 %v389, %v411
        %v413 = vmul.f32 %v396, %v411
        %v414 = vmul.f32 %v403, %v411
        %v415 = vmul.f32 %v410, %v411
        %v420 = vsel %vm373, %v413, %v412
        %v421 = vsel %vm375, %v414, %v420
        %v422 = vsel %vm377, %v415, %v421
        %s424 = sadd.s32 %s368, 16
        %s425 = scalar_lea.vmem [#allocation2], %s424
        %426 = vst.msk [vmem:[%s425] sm:$0xf] %vm381, %v422
        %427 = vmax.xlane.f32.xlu0 %v310
        %v428 = vpop.xlane.xlu0 %427
        %429 = vmax.xlane.f32.xlu0 %v317
        %v430 = vpop.xlane.xlu0 %429
        %431 = vmax.xlane.f32.xlu0 %v311
        %v432 = vpop.xlane.xlu0 %431
        %433 = vmax.xlane.f32.xlu0 %v318
        %v434 = vpop.xlane.xlu0 %433
        %435 = vmax.xlane.f32.xlu0 %v312
        %v436 = vpop.xlane.xlu0 %435
        %437 = vmax.xlane.f32.xlu0 %v319
        %v438 = vpop.xlane.xlu0 %437
        %439 = vmax.xlane.f32.xlu0 %v314
        %v440 = vpop.xlane.xlu0 %439
        %441 = vmax.xlane.f32.xlu0 %v321
        %v442 = vpop.xlane.xlu0 %441
        %v451 = vlaneseq
        %v452 = vand.u32 %v451, 127
        %v453 = vlaneseq
        %v454 = vshrl.u32 %v453, 7
        %v455 = vsub.s32 %v452, %v454
        %v456 = vrot.slane %v428, %v455
        %v457 = vadd.s32 %v452, 4294967288
        %v458 = vlaneseq
        %v459 = vshrl.u32 %v458, 7
        %v460 = vsub.s32 %v457, %v459
        %v461 = vrot.slane %v430, %v460
        %vm462 = vcmask 130112
        %v463 = vsel %vm462, %v461, %v456
        %v464 = vlaneseq
        %v465 = vshrl.u32 %v464, 7
        %v466 = vsub.s32 %v452, %v465
        %v467 = vrot.slane %v432, %v466
        %v468 = vlaneseq
        %v469 = vshrl.u32 %v468, 7
        %v470 = vsub.s32 %v457, %v469
        %v471 = vrot.slane %v434, %v470
        %v472 = vsel %vm462, %v471, %v467
        %v473 = vlaneseq
        %v474 = vshrl.u32 %v473, 7
        %v475 = vsub.s32 %v452, %v474
        %v476 = vrot.slane %v436, %v475
        %v477 = vlaneseq
        %v478 = vshrl.u32 %v477, 7
        %v479 = vsub.s32 %v457, %v478
        %v480 = vrot.slane %v438, %v479
        %v481 = vsel %vm462, %v480, %v476
        %v482 = vlaneseq
        %v483 = vshrl.u32 %v482, 7
        %v484 = vsub.s32 %v452, %v483
        %v485 = vrot.slane %v440, %v484
        %v486 = vlaneseq
        %v487 = vshrl.u32 %v486, 7
        %v488 = vsub.s32 %v457, %v487
        %v489 = vrot.slane %v442, %v488
        %v490 = vsel %vm462, %v489, %v485
        %v491 = vsel %vm373, %v472, %v463
        %v492 = vsel %vm375, %v481, %v491
        %v493 = vsel %vm377, %v490, %v492
        %s495 = scalar_lea.vmem [#allocation3], %s368
        %496 = vst.msk [vmem:[%s495] sm:$0xf] %vm381, %v493
        %497 = vadd.xlane.f32.xlu0 %v324
        %v498 = vpop.xlane.xlu0 %497
        %499 = vadd.xlane.f32.xlu0 %v331
        %v500 = vpop.xlane.xlu0 %499
        %501 = vadd.xlane.f32.xlu0 %v325
        %v502 = vpop.xlane.xlu0 %501
        %503 = vadd.xlane.f32.xlu0 %v332
        %v504 = vpop.xlane.xlu0 %503
        %505 = vadd.xlane.f32.xlu0 %v327
        %v506 = vpop.xlane.xlu0 %505
        %507 = vadd.xlane.f32.xlu0 %v334
        %v508 = vpop.xlane.xlu0 %507
        %509 = vadd.xlane.f32.xlu0 %v329
        %v510 = vpop.xlane.xlu0 %509
        %511 = vadd.xlane.f32.xlu0 %v336
        %v512 = vpop.xlane.xlu0 %511
        %v513 = vmul.f32 %v498, %v411
        %v514 = vmul.f32 %v500, %v411
        %v515 = vmul.f32 %v502, %v411
        %v516 = vmul.f32 %v504, %v411
        %v517 = vmul.f32 %v506, %v411
        %v518 = vmul.f32 %v508, %v411
        %v519 = vmul.f32 %v510, %v411
        %v520 = vmul.f32 %v512, %v411
        %v529 = vlaneseq
        %v530 = vshrl.u32 %v529, 7
        %v531 = vsub.s32 %v452, %v530
        %v532 = vrot.slane %v513, %v531
        %v533 = vlaneseq
        %v534 = vshrl.u32 %v533, 7
        %v535 = vsub.s32 %v457, %v534
        %v536 = vrot.slane %v514, %v535
        %v537 = vsel %vm462, %v536, %v532
        %v538 = vlaneseq
        %v539 = vshrl.u32 %v538, 7
        %v540 = vsub.s32 %v452, %v539
        %v541 = vrot.slane %v515, %v540
        %v542 = vlaneseq
        %v543 = vshrl.u32 %v542, 7
        %v544 = vsub.s32 %v457, %v543
        %v545 = vrot.slane %v516, %v544
        %v546 = vsel %vm462, %v545, %v541
        %v547 = vlaneseq
        %v548 = vshrl.u32 %v547, 7
        %v549 = vsub.s32 %v452, %v548
        %v550 = vrot.slane %v517, %v549
        %v551 = vlaneseq
        %v552 = vshrl.u32 %v551, 7
        %v553 = vsub.s32 %v457, %v552
        %v554 = vrot.slane %v518, %v553
        %v555 = vsel %vm462, %v554, %v550
        %v556 = vlaneseq
        %v557 = vshrl.u32 %v556, 7
        %v558 = vsub.s32 %v452, %v557
        %v559 = vrot.slane %v519, %v558
        %v560 = vlaneseq
        %v561 = vshrl.u32 %v560, 7
        %v562 = vsub.s32 %v457, %v561
        %v563 = vrot.slane %v520, %v562
        %v564 = vsel %vm462, %v563, %v559
        %v565 = vsel %vm373, %v546, %v537
        %v566 = vsel %vm375, %v555, %v565
        %v567 = vsel %vm377, %v564, %v566
        %s569 = scalar_lea.vmem [#allocation3], %s424
        %570 = vst.msk [vmem:[%s569] sm:$0xf] %vm381, %v567
        %571 = vst.msk [vmem:[#allocation4 + $0x8] sm:$0xff] %vm309, %v316
        %572 = vst.msk [vmem:[#allocation4 + $0x10] sm:$0xff] %vm309, %v323
        %v573 = vmul.f32 %v338, 0.25
        %v574 = vmul.f32 %v339, 0.25
        %s575 = scalar_lea.vmem [#allocation4], 32
        %576 = vst.msk [vmem:[%s575 + $0x8] sm:$0xff] %vm309, %v573
        %577 = vst.msk [vmem:[%s575 + $0x10] sm:$0xff] %vm309, %v574
        %s578 = sld [smem:[#allocation12]]
        %v579 = vstv %s578
        %v580 = vld [vmem:[#allocation2 + $0x5] sm:$0xf]
        %v581 = vld [vmem:[%s1] sm:$0xff]
        %v582 = vld [vmem:[%s1 + $0x8] sm:$0xff]
        %v584 = vsel %vm309, %v580, 0
        %586 = vmatprep.subr.mxu0 0.0
        %587 = vmatpush1.msra.mxu0 %v581
        %588 = vmatprep.subr.mxu0 0.0
        %589 = vmatpush1.msra.mxu0 %v582
        %590 = vmatprep.subr.mxu0 0.0
        %591 = vmatpush1.msra.mxu0 0.0
        %592 = vmatprep.subr.mxu0 0.0
        %593 = vmatpush1.msra.mxu0 0.0
        %594 = vmatprep.subr.mxu0 0.0
        %595 = vmatpush1.msra.mxu0 0.0
        %596 = vmatprep.subr.mxu0 0.0
        %597 = vmatpush1.msra.mxu0 0.0
        %598 = vmatprep.subr.mxu0 0.0
        %599 = vmatpush1.msra.mxu0 0.0
        %600 = vmatprep.subr.mxu0 0.0
        %601 = vmatpush1.msra.mxu0 0.0
        %602 = vmatprep.subr.mxu0 0.0
        %603 = vmatpush1.msra.mxu0 0.0
        %604 = vmatprep.subr.mxu0 0.0
        %605 = vmatpush1.msra.mxu0 0.0
        %606 = vmatprep.subr.mxu0 0.0
        %607 = vmatpush1.msra.mxu0 0.0
        %608 = vmatprep.subr.mxu0 0.0
        %609 = vmatpush1.msra.mxu0 0.0
        %610 = vmatprep.subr.mxu0 0.0
        %611 = vmatpush1.msra.mxu0 0.0
        %612 = vmatprep.subr.mxu0 0.0
        %613 = vmatpush1.msra.mxu0 0.0
        %614 = vmatprep.subr.mxu0 0.0
        %615 = vmatpush1.msra.mxu0 0.0
        %616 = vmatprep.subr.mxu0 0.0
        %617 = vmatpush1.msra.mxu0 0.0
        %618 = vmatprep.subr.mxu0 0.0
        %619 = vmatpush1.msra.mxu0 0.0
        %620 = vmatprep.subr.mxu0 0.0
        %621 = vmatpush1.msra.mxu0 0.0
        %622 = vmatprep.subr.mxu0 0.0
        %623 = vmatpush1.msra.mxu0 0.0
        %624 = vmatprep.subr.mxu0 0.0
        %625 = vmatpush1.msra.mxu0 0.0
        %626 = vmatprep.subr.mxu0 0.0
        %627 = vmatpush1.msra.mxu0 0.0
        %628 = vmatprep.subr.mxu0 0.0
        %629 = vmatpush1.msra.mxu0 0.0
        %630 = vmatprep.subr.mxu0 0.0
        %631 = vmatpush1.msra.mxu0 0.0
        %632 = vmatprep.subr.mxu0 0.0
        %633 = vmatpush1.msra.mxu0 0.0
        %634 = vmatprep.subr.mxu0 0.0
        %635 = vmatpush1.msra.mxu0 0.0
        %636 = vmatprep.subr.mxu0 0.0
        %637 = vmatpush1.msra.mxu0 0.0
        %638 = vmatprep.subr.mxu0 0.0
        %639 = vmatpush1.msra.mxu0 0.0
        %640 = vmatprep.subr.mxu0 0.0
        %641 = vmatpush1.msra.mxu0 0.0
        %642 = vmatprep.subr.mxu0 0.0
        %643 = vmatpush1.msra.mxu0 0.0
        %644 = vmatprep.subr.mxu0 0.0
        %645 = vmatpush1.msra.mxu0 0.0
        %646 = vmatprep.subr.mxu0 0.0
        %647 = vmatpush1.msra.mxu0 0.0
        %648 = vmatprep.subr.mxu0 0.0
        %649 = vmatpush1.msra.mxu0 0.0
        %650 = vmatprep.mubr.f32.mxu0 0.0
        %651 = vmatmul.mubr.f32.gmra.mrb[0].mxu0 %v584
        %v652 = vpop.f32.mrb[0].mxu0
        %v653 = vadd.f32 0.0, %v652
        %v654 = vpop.f32.mrb[0].mxu0
        %655 = vdwg.mxu0
        %v656 = vadd.f32 %v579, %v653
        %v657 = vld [vmem:[#allocation2 + $0x6] sm:$0xf]
        %s658 = scalar_lea.vmem %s1, 16
        %v659 = vld [vmem:[%s658] sm:$0xff]
        %v660 = vld [vmem:[%s658 + $0x8] sm:$0xff]
        %v662 = vsel %vm309, %v657, 0
        %664 = vmatprep.subr.mxu0 0.0
        %665 = vmatpush1.msra.mxu0 %v659
        %666 = vmatprep.subr.mxu0 0.0
        %667 = vmatpush1.msra.mxu0 %v660
        %668 = vmatprep.subr.mxu0 0.0
        %669 = vmatpush1.msra.mxu0 0.0
        %670 = vmatprep.subr.mxu0 0.0
        %671 = vmatpush1.msra.mxu0 0.0
        %672 = vmatprep.subr.mxu0 0.0
        %673 = vmatpush1.msra.mxu0 0.0
        %674 = vmatprep.subr.mxu0 0.0
        %675 = vmatpush1.msra.mxu0 0.0
        %676 = vmatprep.subr.mxu0 0.0
        %677 = vmatpush1.msra.mxu0 0.0
        %678 = vmatprep.subr.mxu0 0.0
        %679 = vmatpush1.msra.mxu0 0.0
        %680 = vmatprep.subr.mxu0 0.0
        %681 = vmatpush1.msra.mxu0 0.0
        %682 = vmatprep.subr.mxu0 0.0
        %683 = vmatpush1.msra.mxu0 0.0
        %684 = vmatprep.subr.mxu0 0.0
        %685 = vmatpush1.msra.mxu0 0.0
        %686 = vmatprep.subr.mxu0 0.0
        %687 = vmatpush1.msra.mxu0 0.0
        %688 = vmatprep.subr.mxu0 0.0
        %689 = vmatpush1.msra.mxu0 0.0
        %690 = vmatprep.subr.mxu0 0.0
        %691 = vmatpush1.msra.mxu0 0.0
        %692 = vmatprep.subr.mxu0 0.0
        %693 = vmatpush1.msra.mxu0 0.0
        %694 = vmatprep.subr.mxu0 0.0
        %695 = vmatpush1.msra.mxu0 0.0
        %696 = vmatprep.subr.mxu0 0.0
        %697 = vmatpush1.msra.mxu0 0.0
        %698 = vmatprep.subr.mxu0 0.0
        %699 = vmatpush1.msra.mxu0 0.0
        %700 = vmatprep.subr.mxu0 0.0
        %701 = vmatpush1.msra.mxu0 0.0
        %702 = vmatprep.subr.mxu0 0.0
        %703 = vmatpush1.msra.mxu0 0.0
        %704 = vmatprep.subr.mxu0 0.0
        %705 = vmatpush1.msra.mxu0 0.0
        %706 = vmatprep.subr.mxu0 0.0
        %707 = vmatpush1.msra.mxu0 0.0
        %708 = vmatprep.subr.mxu0 0.0
        %709 = vmatpush1.msra.mxu0 0.0
        %710 = vmatprep.subr.mxu0 0.0
        %711 = vmatpush1.msra.mxu0 0.0
        %712 = vmatprep.subr.mxu0 0.0
        %713 = vmatpush1.msra.mxu0 0.0
        %714 = vmatprep.subr.mxu0 0.0
        %715 = vmatpush1.msra.mxu0 0.0
        %716 = vmatprep.subr.mxu0 0.0
        %717 = vmatpush1.msra.mxu0 0.0
        %718 = vmatprep.subr.mxu0 0.0
        %719 = vmatpush1.msra.mxu0 0.0
        %720 = vmatprep.subr.mxu0 0.0
        %721 = vmatpush1.msra.mxu0 0.0
        %722 = vmatprep.subr.mxu0 0.0
        %723 = vmatpush1.msra.mxu0 0.0
        %724 = vmatprep.subr.mxu0 0.0
        %725 = vmatpush1.msra.mxu0 0.0
        %726 = vmatprep.subr.mxu0 0.0
        %727 = vmatpush1.msra.mxu0 0.0
        %728 = vmatprep.mubr.f32.mxu0 0.0
        %729 = vmatmul.mubr.f32.gmra.mrb[0].mxu0 %v662
        %v730 = vpop.f32.mrb[0].mxu0
        %v731 = vadd.f32 0.0, %v730
        %v732 = vpop.f32.mrb[0].mxu0
        %733 = vdwg.mxu0
        %v734 = vadd.f32 %v656, %v731
        %v735 = vld [vmem:[#allocation2 + $0x7] sm:$0xf]
        %s736 = scalar_lea.vmem %s1, 32
        %v737 = vld [vmem:[%s736] sm:$0xff]
        %v738 = vld [vmem:[%s736 + $0x8] sm:$0xff]
        %v740 = vsel %vm309, %v735, 0
        %742 = vmatprep.subr.mxu0 0.0
        %743 = vmatpush1.msra.mxu0 %v737
        %744 = vmatprep.subr.mxu0 0.0
        %745 = vmatpush1.msra.mxu0 %v738
        %746 = vmatprep.subr.mxu0 0.0
        %747 = vmatpush1.msra.mxu0 0.0
        %748 = vmatprep.subr.mxu0 0.0
        %749 = vmatpush1.msra.mxu0 0.0
        %750 = vmatprep.subr.mxu0 0.0
        %751 = vmatpush1.msra.mxu0 0.0
        %752 = vmatprep.subr.mxu0 0.0
        %753 = vmatpush1.msra.mxu0 0.0
        %754 = vmatprep.subr.mxu0 0.0
        %755 = vmatpush1.msra.mxu0 0.0
        %756 = vmatprep.subr.mxu0 0.0
        %757 = vmatpush1.msra.mxu0 0.0
        %758 = vmatprep.subr.mxu0 0.0
        %759 = vmatpush1.msra.mxu0 0.0
        %760 = vmatprep.subr.mxu0 0.0
        %761 = vmatpush1.msra.mxu0 0.0
        %762 = vmatprep.subr.mxu0 0.0
        %763 = vmatpush1.msra.mxu0 0.0
        %764 = vmatprep.subr.mxu0 0.0
        %765 = vmatpush1.msra.mxu0 0.0
        %766 = vmatprep.subr.mxu0 0.0
        %767 = vmatpush1.msra.mxu0 0.0
        %768 = vmatprep.subr.mxu0 0.0
        %769 = vmatpush1.msra.mxu0 0.0
        %770 = vmatprep.subr.mxu0 0.0
        %771 = vmatpush1.msra.mxu0 0.0
        %772 = vmatprep.subr.mxu0 0.0
        %773 = vmatpush1.msra.mxu0 0.0
        %774 = vmatprep.subr.mxu0 0.0
        %775 = vmatpush1.msra.mxu0 0.0
        %776 = vmatprep.subr.mxu0 0.0
        %777 = vmatpush1.msra.mxu0 0.0
        %778 = vmatprep.subr.mxu0 0.0
        %779 = vmatpush1.msra.mxu0 0.0
        %780 = vmatprep.subr.mxu0 0.0
        %781 = vmatpush1.msra.mxu0 0.0
        %782 = vmatprep.subr.mxu0 0.0
        %783 = vmatpush1.msra.mxu0 0.0
        %784 = vmatprep.subr.mxu0 0.0
        %785 = vmatpush1.msra.mxu0 0.0
        %786 = vmatprep.subr.mxu0 0.0
        %787 = vmatpush1.msra.mxu0 0.0
        %788 = vmatprep.subr.mxu0 0.0
        %789 = vmatpush1.msra.mxu0 0.0
        %790 = vmatprep.subr.mxu0 0.0
        %791 = vmatpush1.msra.mxu0 0.0
        %792 = vmatprep.subr.mxu0 0.0
        %793 = vmatpush1.msra.mxu0 0.0
        %794 = vmatprep.subr.mxu0 0.0
        %795 = vmatpush1.msra.mxu0 0.0
        %796 = vmatprep.subr.mxu0 0.0
        %797 = vmatpush1.msra.mxu0 0.0
        %798 = vmatprep.subr.mxu0 0.0
        %799 = vmatpush1.msra.mxu0 0.0
        %800 = vmatprep.subr.mxu0 0.0
        %801 = vmatpush1.msra.mxu0 0.0
        %802 = vmatprep.subr.mxu0 0.0
        %803 = vmatpush1.msra.mxu0 0.0
        %804 = vmatprep.subr.mxu0 0.0
        %805 = vmatpush1.msra.mxu0 0.0
        %806 = vmatprep.mubr.f32.mxu0 0.0
        %807 = vmatmul.mubr.f32.gmra.mrb[0].mxu0 %v740
        %v808 = vpop.f32.mrb[0].mxu0
        %v809 = vadd.f32 0.0, %v808
        %v810 = vpop.f32.mrb[0].mxu0
        %811 = vdwg.mxu0
        %v812 = vadd.f32 %v734, %v809
        %v813 = vld [vmem:[#allocation2 + $0x8] sm:$0xf]
        %s814 = scalar_lea.vmem %s1, 48
        %v815 = vld [vmem:[%s814] sm:$0xff]
        %v816 = vld [vmem:[%s814 + $0x8] sm:$0xff]
        %v818 = vsel %vm309, %v813, 0
        %820 = vmatprep.subr.mxu0 0.0
        %821 = vmatpush1.msra.mxu0 %v815
        %822 = vmatprep.subr.mxu0 0.0
        %823 = vmatpush1.msra.mxu0 %v816
        %824 = vmatprep.subr.mxu0 0.0
        %825 = vmatpush1.msra.mxu0 0.0
        %826 = vmatprep.subr.mxu0 0.0
        %827 = vmatpush1.msra.mxu0 0.0
        %828 = vmatprep.subr.mxu0 0.0
        %829 = vmatpush1.msra.mxu0 0.0
        %830 = vmatprep.subr.mxu0 0.0
        %831 = vmatpush1.msra.mxu0 0.0
        %832 = vmatprep.subr.mxu0 0.0
        %833 = vmatpush1.msra.mxu0 0.0
        %834 = vmatprep.subr.mxu0 0.0
        %835 = vmatpush1.msra.mxu0 0.0
        %836 = vmatprep.subr.mxu0 0.0
        %837 = vmatpush1.msra.mxu0 0.0
        %838 = vmatprep.subr.mxu0 0.0
        %839 = vmatpush1.msra.mxu0 0.0
        %840 = vmatprep.subr.mxu0 0.0
        %841 = vmatpush1.msra.mxu0 0.0
        %842 = vmatprep.subr.mxu0 0.0
        %843 = vmatpush1.msra.mxu0 0.0
        %844 = vmatprep.subr.mxu0 0.0
        %845 = vmatpush1.msra.mxu0 0.0
        %846 = vmatprep.subr.mxu0 0.0
        %847 = vmatpush1.msra.mxu0 0.0
        %848 = vmatprep.subr.mxu0 0.0
        %849 = vmatpush1.msra.mxu0 0.0
        %850 = vmatprep.subr.mxu0 0.0
        %851 = vmatpush1.msra.mxu0 0.0
        %852 = vmatprep.subr.mxu0 0.0
        %853 = vmatpush1.msra.mxu0 0.0
        %854 = vmatprep.subr.mxu0 0.0
        %855 = vmatpush1.msra.mxu0 0.0
        %856 = vmatprep.subr.mxu0 0.0
        %857 = vmatpush1.msra.mxu0 0.0
        %858 = vmatprep.subr.mxu0 0.0
        %859 = vmatpush1.msra.mxu0 0.0
        %860 = vmatprep.subr.mxu0 0.0
        %861 = vmatpush1.msra.mxu0 0.0
        %862 = vmatprep.subr.mxu0 0.0
        %863 = vmatpush1.msra.mxu0 0.0
        %864 = vmatprep.subr.mxu0 0.0
        %865 = vmatpush1.msra.mxu0 0.0
        %866 = vmatprep.subr.mxu0 0.0
        %867 = vmatpush1.msra.mxu0 0.0
        %868 = vmatprep.subr.mxu0 0.0
        %869 = vmatpush1.msra.mxu0 0.0
        %870 = vmatprep.subr.mxu0 0.0
        %871 = vmatpush1.msra.mxu0 0.0
        %872 = vmatprep.subr.mxu0 0.0
        %873 = vmatpush1.msra.mxu0 0.0
        %874 = vmatprep.subr.mxu0 0.0
        %875 = vmatpush1.msra.mxu0 0.0
        %876 = vmatprep.subr.mxu0 0.0
        %877 = vmatpush1.msra.mxu0 0.0
        %878 = vmatprep.subr.mxu0 0.0
        %879 = vmatpush1.msra.mxu0 0.0
        %880 = vmatprep.subr.mxu0 0.0
        %881 = vmatpush1.msra.mxu0 0.0
        %882 = vmatprep.subr.mxu0 0.0
        %883 = vmatpush1.msra.mxu0 0.0
        %884 = vmatprep.mubr.f32.mxu0 0.0
        %885 = vmatmul.mubr.f32.gmra.mrb[0].mxu0 %v818
        %v886 = vpop.f32.mrb[0].mxu0
        %v887 = vadd.f32 0.0, %v886
        %v888 = vpop.f32.mrb[0].mxu0
        %889 = vdwg.mxu0
        %v890 = vadd.f32 %v812, %v887
        %v891 = vld [vmem:[#allocation2 + $0x9] sm:$0xf]
        %s892 = scalar_lea.vmem %s1, 64
        %v893 = vld [vmem:[%s892] sm:$0xff]
        %v894 = vld [vmem:[%s892 + $0x8] sm:$0xff]
        %v896 = vsel %vm309, %v891, 0
        %898 = vmatprep.subr.mxu0 0.0
        %899 = vmatpush1.msra.mxu0 %v893
        %900 = vmatprep.subr.mxu0 0.0
        %901 = vmatpush1.msra.mxu0 %v894
        %902 = vmatprep.subr.mxu0 0.0
        %903 = vmatpush1.msra.mxu0 0.0
        %904 = vmatprep.subr.mxu0 0.0
        %905 = vmatpush1.msra.mxu0 0.0
        %906 = vmatprep.subr.mxu0 0.0
        %907 = vmatpush1.msra.mxu0 0.0
        %908 = vmatprep.subr.mxu0 0.0
        %909 = vmatpush1.msra.mxu0 0.0
        %910 = vmatprep.subr.mxu0 0.0
        %911 = vmatpush1.msra.mxu0 0.0
        %912 = vmatprep.subr.mxu0 0.0
        %913 = vmatpush1.msra.mxu0 0.0
        %914 = vmatprep.subr.mxu0 0.0
        %915 = vmatpush1.msra.mxu0 0.0
        %916 = vmatprep.subr.mxu0 0.0
        %917 = vmatpush1.msra.mxu0 0.0
        %918 = vmatprep.subr.mxu0 0.0
        %919 = vmatpush1.msra.mxu0 0.0
        %920 = vmatprep.subr.mxu0 0.0
        %921 = vmatpush1.msra.mxu0 0.0
        %922 = vmatprep.subr.mxu0 0.0
        %923 = vmatpush1.msra.mxu0 0.0
        %924 = vmatprep.subr.mxu0 0.0
        %925 = vmatpush1.msra.mxu0 0.0
        %926 = vmatprep.subr.mxu0 0.0
        %927 = vmatpush1.msra.mxu0 0.0
        %928 = vmatprep.subr.mxu0 0.0
        %929 = vmatpush1.msra.mxu0 0.0
        %930 = vmatprep.subr.mxu0 0.0
        %931 = vmatpush1.msra.mxu0 0.0
        %932 = vmatprep.subr.mxu0 0.0
        %933 = vmatpush1.msra.mxu0 0.0
        %934 = vmatprep.subr.mxu0 0.0
        %935 = vmatpush1.msra.mxu0 0.0
        %936 = vmatprep.subr.mxu0 0.0
        %937 = vmatpush1.msra.mxu0 0.0
        %938 = vmatprep.subr.mxu0 0.0
        %939 = vmatpush1.msra.mxu0 0.0
        %940 = vmatprep.subr.mxu0 0.0
        %941 = vmatpush1.msra.mxu0 0.0
        %942 = vmatprep.subr.mxu0 0.0
        %943 = vmatpush1.msra.mxu0 0.0
        %944 = vmatprep.subr.mxu0 0.0
        %945 = vmatpush1.msra.mxu0 0.0
        %946 = vmatprep.subr.mxu0 0.0
        %947 = vmatpush1.msra.mxu0 0.0
        %948 = vmatprep.subr.mxu0 0.0
        %949 = vmatpush1.msra.mxu0 0.0
        %950 = vmatprep.subr.mxu0 0.0
        %951 = vmatpush1.msra.mxu0 0.0
        %952 = vmatprep.subr.mxu0 0.0
        %953 = vmatpush1.msra.mxu0 0.0
        %954 = vmatprep.subr.mxu0 0.0
        %955 = vmatpush1.msra.mxu0 0.0
        %956 = vmatprep.subr.mxu0 0.0
        %957 = vmatpush1.msra.mxu0 0.0
        %958 = vmatprep.subr.mxu0 0.0
        %959 = vmatpush1.msra.mxu0 0.0
        %960 = vmatprep.subr.mxu0 0.0
        %961 = vmatpush1.msra.mxu0 0.0
        %962 = vmatprep.mubr.f32.mxu0 0.0
        %963 = vmatmul.mubr.f32.gmra.mrb[0].mxu0 %v896
        %v964 = vpop.f32.mrb[0].mxu0
        %v965 = vadd.f32 0.0, %v964
        %v966 = vpop.f32.mrb[0].mxu0
        %967 = vdwg.mxu0
        %v968 = vadd.f32 %v890, %v965
        %v969 = vld [vmem:[#allocation2 + $0xa] sm:$0xf]
        %s970 = scalar_lea.vmem %s1, 80
        %v971 = vld [vmem:[%s970] sm:$0xff]
        %v972 = vld [vmem:[%s970 + $0x8] sm:$0xff]
        %v974 = vsel %vm309, %v969, 0
        %976 = vmatprep.subr.mxu0 0.0
        %977 = vmatpush1.msra.mxu0 %v971
        %978 = vmatprep.subr.mxu0 0.0
        %979 = vmatpush1.msra.mxu0 %v972
        %980 = vmatprep.subr.mxu0 0.0
        %981 = vmatpush1.msra.mxu0 0.0
        %982 = vmatprep.subr.mxu0 0.0
        %983 = vmatpush1.msra.mxu0 0.0
        %984 = vmatprep.subr.mxu0 0.0
        %985 = vmatpush1.msra.mxu0 0.0
        %986 = vmatprep.subr.mxu0 0.0
        %987 = vmatpush1.msra.mxu0 0.0
        %988 = vmatprep.subr.mxu0 0.0
        %989 = vmatpush1.msra.mxu0 0.0
        %990 = vmatprep.subr.mxu0 0.0
        %991 = vmatpush1.msra.mxu0 0.0
        %992 = vmatprep.subr.mxu0 0.0
        %993 = vmatpush1.msra.mxu0 0.0
        %994 = vmatprep.subr.mxu0 0.0
        %995 = vmatpush1.msra.mxu0 0.0
        %996 = vmatprep.subr.mxu0 0.0
        %997 = vmatpush1.msra.mxu0 0.0
        %998 = vmatprep.subr.mxu0 0.0
        %999 = vmatpush1.msra.mxu0 0.0
        %1000 = vmatprep.subr.mxu0 0.0
        %1001 = vmatpush1.msra.mxu0 0.0
        %1002 = vmatprep.subr.mxu0 0.0
        %1003 = vmatpush1.msra.mxu0 0.0
        %1004 = vmatprep.subr.mxu0 0.0
        %1005 = vmatpush1.msra.mxu0 0.0
        %1006 = vmatprep.subr.mxu0 0.0
        %1007 = vmatpush1.msra.mxu0 0.0
        %1008 = vmatprep.subr.mxu0 0.0
        %1009 = vmatpush1.msra.mxu0 0.0
        %1010 = vmatprep.subr.mxu0 0.0
        %1011 = vmatpush1.msra.mxu0 0.0
        %1012 = vmatprep.subr.mxu0 0.0
        %1013 = vmatpush1.msra.mxu0 0.0
        %1014 = vmatprep.subr.mxu0 0.0
        %1015 = vmatpush1.msra.mxu0 0.0
        %1016 = vmatprep.subr.mxu0 0.0
        %1017 = vmatpush1.msra.mxu0 0.0
        %1018 = vmatprep.subr.mxu0 0.0
        %1019 = vmatpush1.msra.mxu0 0.0
        %1020 = vmatprep.subr.mxu0 0.0
        %1021 = vmatpush1.msra.mxu0 0.0
        %1022 = vmatprep.subr.mxu0 0.0
        %1023 = vmatpush1.msra.mxu0 0.0
        %1024 = vmatprep.subr.mxu0 0.0
        %1025 = vmatpush1.msra.mxu0 0.0
        %1026 = vmatprep.subr.mxu0 0.0
        %1027 = vmatpush1.msra.mxu0 0.0
        %1028 = vmatprep.subr.mxu0 0.0
        %1029 = vmatpush1.msra.mxu0 0.0
        %1030 = vmatprep.subr.mxu0 0.0
        %1031 = vmatpush1.msra.mxu0 0.0
        %1032 = vmatprep.subr.mxu0 0.0
        %1033 = vmatpush1.msra.mxu0 0.0
        %1034 = vmatprep.subr.mxu0 0.0
        %1035 = vmatpush1.msra.mxu0 0.0
        %1036 = vmatprep.subr.mxu0 0.0
        %1037 = vmatpush1.msra.mxu0 0.0
        %1038 = vmatprep.subr.mxu0 0.0
        %1039 = vmatpush1.msra.mxu0 0.0
        %1040 = vmatprep.mubr.f32.mxu0 0.0
        %1041 = vmatmul.mubr.f32.gmra.mrb[0].mxu0 %v974
        %v1042 = vpop.f32.mrb[0].mxu0
        %v1043 = vadd.f32 0.0, %v1042
        %v1044 = vpop.f32.mrb[0].mxu0
        %1045 = vdwg.mxu0
        %v1046 = vadd.f32 %v968, %v1043
        %v1047 = vld [vmem:[#allocation2 + $0xb] sm:$0xf]
        %s1048 = scalar_lea.vmem %s1, 96
        %v1049 = vld [vmem:[%s1048] sm:$0xff]
        %v1050 = vld [vmem:[%s1048 + $0x8] sm:$0xff]
        %v1052 = vsel %vm309, %v1047, 0
        %1054 = vmatprep.subr.mxu0 0.0
        %1055 = vmatpush1.msra.mxu0 %v1049
        %1056 = vmatprep.subr.mxu0 0.0
        %1057 = vmatpush1.msra.mxu0 %v1050
        %1058 = vmatprep.subr.mxu0 0.0
        %1059 = vmatpush1.msra.mxu0 0.0
        %1060 = vmatprep.subr.mxu0 0.0
        %1061 = vmatpush1.msra.mxu0 0.0
        %1062 = vmatprep.subr.mxu0 0.0
        %1063 = vmatpush1.msra.mxu0 0.0
        %1064 = vmatprep.subr.mxu0 0.0
        %1065 = vmatpush1.msra.mxu0 0.0
        %1066 = vmatprep.subr.mxu0 0.0
        %1067 = vmatpush1.msra.mxu0 0.0
        %1068 = vmatprep.subr.mxu0 0.0
        %1069 = vmatpush1.msra.mxu0 0.0
        %1070 = vmatprep.subr.mxu0 0.0
        %1071 = vmatpush1.msra.mxu0 0.0
        %1072 = vmatprep.subr.mxu0 0.0
        %1073 = vmatpush1.msra.mxu0 0.0
        %1074 = vmatprep.subr.mxu0 0.0
        %1075 = vmatpush1.msra.mxu0 0.0
        %1076 = vmatprep.subr.mxu0 0.0
        %1077 = vmatpush1.msra.mxu0 0.0
        %1078 = vmatprep.subr.mxu0 0.0
        %1079 = vmatpush1.msra.mxu0 0.0
        %1080 = vmatprep.subr.mxu0 0.0
        %1081 = vmatpush1.msra.mxu0 0.0
        %1082 = vmatprep.subr.mxu0 0.0
        %1083 = vmatpush1.msra.mxu0 0.0
        %1084 = vmatprep.subr.mxu0 0.0
        %1085 = vmatpush1.msra.mxu0 0.0
        %1086 = vmatprep.subr.mxu0 0.0
        %1087 = vmatpush1.msra.mxu0 0.0
        %1088 = vmatprep.subr.mxu0 0.0
        %1089 = vmatpush1.msra.mxu0 0.0
        %1090 = vmatprep.subr.mxu0 0.0
        %1091 = vmatpush1.msra.mxu0 0.0
        %1092 = vmatprep.subr.mxu0 0.0
        %1093 = vmatpush1.msra.mxu0 0.0
        %1094 = vmatprep.subr.mxu0 0.0
        %1095 = vmatpush1.msra.mxu0 0.0
        %1096 = vmatprep.subr.mxu0 0.0
        %1097 = vmatpush1.msra.mxu0 0.0
        %1098 = vmatprep.subr.mxu0 0.0
        %1099 = vmatpush1.msra.mxu0 0.0
        %1100 = vmatprep.subr.mxu0 0.0
        %1101 = vmatpush1.msra.mxu0 0.0
        %1102 = vmatprep.subr.mxu0 0.0
        %1103 = vmatpush1.msra.mxu0 0.0
        %1104 = vmatprep.subr.mxu0 0.0
        %1105 = vmatpush1.msra.mxu0 0.0
        %1106 = vmatprep.subr.mxu0 0.0
        %1107 = vmatpush1.msra.mxu0 0.0
        %1108 = vmatprep.subr.mxu0 0.0
        %1109 = vmatpush1.msra.mxu0 0.0
        %1110 = vmatprep.subr.mxu0 0.0
        %1111 = vmatpush1.msra.mxu0 0.0
        %1112 = vmatprep.subr.mxu0 0.0
        %1113 = vmatpush1.msra.mxu0 0.0
        %1114 = vmatprep.subr.mxu0 0.0
        %1115 = vmatpush1.msra.mxu0 0.0
        %1116 = vmatprep.subr.mxu0 0.0
        %1117 = vmatpush1.msra.mxu0 0.0
        %1118 = vmatprep.mubr.f32.mxu0 0.0
        %1119 = vmatmul.mubr.f32.gmra.mrb[0].mxu0 %v1052
        %v1120 = vpop.f32.mrb[0].mxu0
        %v1121 = vadd.f32 0.0, %v1120
        %v1122 = vpop.f32.mrb[0].mxu0
        %1123 = vdwg.mxu0
        %v1124 = vadd.f32 %v1046, %v1121
        %s1125 = scalar_lea.vmem [#allocation2], 16
        %v1126 = vld [vmem:[%s1125 + $0x5] sm:$0xf]
        %s1127 = scalar_lea.vmem %s1, 112
        %v1128 = vld [vmem:[%s1127] sm:$0xff]
        %v1129 = vld [vmem:[%s1127 + $0x8] sm:$0xff]
        %v1131 = vsel %vm309, %v1126, 0
        %1133 = vmatprep.subr.mxu0 0.0
        %1134 = vmatpush1.msra.mxu0 %v1128
        %1135 = vmatprep.subr.mxu0 0.0
        %1136 = vmatpush1.msra.mxu0 %v1129
        %1137 = vmatprep.subr.mxu0 0.0
        %1138 = vmatpush1.msra.mxu0 0.0
        %1139 = vmatprep.subr.mxu0 0.0
        %1140 = vmatpush1.msra.mxu0 0.0
        %1141 = vmatprep.subr.mxu0 0.0
        %1142 = vmatpush1.msra.mxu0 0.0
        %1143 = vmatprep.subr.mxu0 0.0
        %1144 = vmatpush1.msra.mxu0 0.0
        %1145 = vmatprep.subr.mxu0 0.0
        %1146 = vmatpush1.msra.mxu0 0.0
        %1147 = vmatprep.subr.mxu0 0.0
        %1148 = vmatpush1.msra.mxu0 0.0
        %1149 = vmatprep.subr.mxu0 0.0
        %1150 = vmatpush1.msra.mxu0 0.0
        %1151 = vmatprep.subr.mxu0 0.0
        %1152 = vmatpush1.msra.mxu0 0.0
        %1153 = vmatprep.subr.mxu0 0.0
        %1154 = vmatpush1.msra.mxu0 0.0
        %1155 = vmatprep.subr.mxu0 0.0
        %1156 = vmatpush1.msra.mxu0 0.0
        %1157 = vmatprep.subr.mxu0 0.0
        %1158 = vmatpush1.msra.mxu0 0.0
        %1159 = vmatprep.subr.mxu0 0.0
        %1160 = vmatpush1.msra.mxu0 0.0
        %1161 = vmatprep.subr.mxu0 0.0
        %1162 = vmatpush1.msra.mxu0 0.0
        %1163 = vmatprep.subr.mxu0 0.0
        %1164 = vmatpush1.msra.mxu0 0.0
        %1165 = vmatprep.subr.mxu0 0.0
        %1166 = vmatpush1.msra.mxu0 0.0
        %1167 = vmatprep.subr.mxu0 0.0
        %1168 = vmatpush1.msra.mxu0 0.0
        %1169 = vmatprep.subr.mxu0 0.0
        %1170 = vmatpush1.msra.mxu0 0.0
        %1171 = vmatprep.subr.mxu0 0.0
        %1172 = vmatpush1.msra.mxu0 0.0
        %1173 = vmatprep.subr.mxu0 0.0
        %1174 = vmatpush1.msra.mxu0 0.0
        %1175 = vmatprep.subr.mxu0 0.0
        %1176 = vmatpush1.msra.mxu0 0.0
        %1177 = vmatprep.subr.mxu0 0.0
        %1178 = vmatpush1.msra.mxu0 0.0
        %1179 = vmatprep.subr.mxu0 0.0
        %1180 = vmatpush1.msra.mxu0 0.0
        %1181 = vmatprep.subr.mxu0 0.0
        %1182 = vmatpush1.msra.mxu0 0.0
        %1183 = vmatprep.subr.mxu0 0.0
        %1184 = vmatpush1.msra.mxu0 0.0
        %1185 = vmatprep.subr.mxu0 0.0
        %1186 = vmatpush1.msra.mxu0 0.0
        %1187 = vmatprep.subr.mxu0 0.0
        %1188 = vmatpush1.msra.mxu0 0.0
        %1189 = vmatprep.subr.mxu0 0.0
        %1190 = vmatpush1.msra.mxu0 0.0
        %1191 = vmatprep.subr.mxu0 0.0
        %1192 = vmatpush1.msra.mxu0 0.0
        %1193 = vmatprep.subr.mxu0 0.0
        %1194 = vmatpush1.msra.mxu0 0.0
        %1195 = vmatprep.subr.mxu0 0.0
        %1196 = vmatpush1.msra.mxu0 0.0
        %1197 = vmatprep.mubr.f32.mxu0 0.0
        %1198 = vmatmul.mubr.f32.gmra.mrb[0].mxu0 %v1131
        %v1199 = vpop.f32.mrb[0].mxu0
        %v1200 = vadd.f32 0.0, %v1199
        %v1201 = vpop.f32.mrb[0].mxu0
        %1202 = vdwg.mxu0
        %v1203 = vadd.f32 %v1124, %v1200
        %v1204 = vld [vmem:[%s1125 + $0x6] sm:$0xf]
        %s1205 = scalar_lea.vmem %s1, 128
        %v1206 = vld [vmem:[%s1205] sm:$0xff]
        %v1207 = vld [vmem:[%s1205 + $0x8] sm:$0xff]
        %v1209 = vsel %vm309, %v1204, 0
        %1211 = vmatprep.subr.mxu0 0.0
        %1212 = vmatpush1.msra.mxu0 %v1206
        %1213 = vmatprep.subr.mxu0 0.0
        %1214 = vmatpush1.msra.mxu0 %v1207
        %1215 = vmatprep.subr.mxu0 0.0
        %1216 = vmatpush1.msra.mxu0 0.0
        %1217 = vmatprep.subr.mxu0 0.0
        %1218 = vmatpush1.msra.mxu0 0.0
        %1219 = vmatprep.subr.mxu0 0.0
        %1220 = vmatpush1.msra.mxu0 0.0
        %1221 = vmatprep.subr.mxu0 0.0
        %1222 = vmatpush1.msra.mxu0 0.0
        %1223 = vmatprep.subr.mxu0 0.0
        %1224 = vmatpush1.msra.mxu0 0.0
        %1225 = vmatprep.subr.mxu0 0.0
        %1226 = vmatpush1.msra.mxu0 0.0
        %1227 = vmatprep.subr.mxu0 0.0
        %1228 = vmatpush1.msra.mxu0 0.0
        %1229 = vmatprep.subr.mxu0 0.0
        %1230 = vmatpush1.msra.mxu0 0.0
        %1231 = vmatprep.subr.mxu0 0.0
        %1232 = vmatpush1.msra.mxu0 0.0
        %1233 = vmatprep.subr.mxu0 0.0
        %1234 = vmatpush1.msra.mxu0 0.0
        %1235 = vmatprep.subr.mxu0 0.0
        %1236 = vmatpush1.msra.mxu0 0.0
        %1237 = vmatprep.subr.mxu0 0.0
        %1238 = vmatpush1.msra.mxu0 0.0
        %1239 = vmatprep.subr.mxu0 0.0
        %1240 = vmatpush1.msra.mxu0 0.0
        %1241 = vmatprep.subr.mxu0 0.0
        %1242 = vmatpush1.msra.mxu0 0.0
        %1243 = vmatprep.subr.mxu0 0.0
        %1244 = vmatpush1.msra.mxu0 0.0
        %1245 = vmatprep.subr.mxu0 0.0
        %1246 = vmatpush1.msra.mxu0 0.0
        %1247 = vmatprep.subr.mxu0 0.0
        %1248 = vmatpush1.msra.mxu0 0.0
        %1249 = vmatprep.subr.mxu0 0.0
        %1250 = vmatpush1.msra.mxu0 0.0
        %1251 = vmatprep.subr.mxu0 0.0
        %1252 = vmatpush1.msra.mxu0 0.0
        %1253 = vmatprep.subr.mxu0 0.0
        %1254 = vmatpush1.msra.mxu0 0.0
        %1255 = vmatprep.subr.mxu0 0.0
        %1256 = vmatpush1.msra.mxu0 0.0
        %1257 = vmatprep.subr.mxu0 0.0
        %1258 = vmatpush1.msra.mxu0 0.0
        %1259 = vmatprep.subr.mxu0 0.0
        %1260 = vmatpush1.msra.mxu0 0.0
        %1261 = vmatprep.subr.mxu0 0.0
        %1262 = vmatpush1.msra.mxu0 0.0
        %1263 = vmatprep.subr.mxu0 0.0
        %1264 = vmatpush1.msra.mxu0 0.0
        %1265 = vmatprep.subr.mxu0 0.0
        %1266 = vmatpush1.msra.mxu0 0.0
        %1267 = vmatprep.subr.mxu0 0.0
        %1268 = vmatpush1.msra.mxu0 0.0
        %1269 = vmatprep.subr.mxu0 0.0
        %1270 = vmatpush1.msra.mxu0 0.0
        %1271 = vmatprep.subr.mxu0 0.0
        %1272 = vmatpush1.msra.mxu0 0.0
        %1273 = vmatprep.subr.mxu0 0.0
        %1274 = vmatpush1.msra.mxu0 0.0
        %1275 = vmatprep.mubr.f32.mxu0 0.0
        %1276 = vmatmul.mubr.f32.gmra.mrb[0].mxu0 %v1209
        %v1277 = vpop.f32.mrb[0].mxu0
        %v1278 = vadd.f32 0.0, %v1277
        %v1279 = vpop.f32.mrb[0].mxu0
        %1280 = vdwg.mxu0
        %v1281 = vadd.f32 %v1203, %v1278
        %v1282 = vld [vmem:[%s1125 + $0x7] sm:$0xf]
        %s1283 = scalar_lea.vmem %s1, 144
        %v1284 = vld [vmem:[%s1283] sm:$0xff]
        %v1285 = vld [vmem:[%s1283 + $0x8] sm:$0xff]
        %v1287 = vsel %vm309, %v1282, 0
        %1289 = vmatprep.subr.mxu0 0.0
        %1290 = vmatpush1.msra.mxu0 %v1284
        %1291 = vmatprep.subr.mxu0 0.0
        %1292 = vmatpush1.msra.mxu0 %v1285
        %1293 = vmatprep.subr.mxu0 0.0
        %1294 = vmatpush1.msra.mxu0 0.0
        %1295 = vmatprep.subr.mxu0 0.0
        %1296 = vmatpush1.msra.mxu0 0.0
        %1297 = vmatprep.subr.mxu0 0.0
        %1298 = vmatpush1.msra.mxu0 0.0
        %1299 = vmatprep.subr.mxu0 0.0
        %1300 = vmatpush1.msra.mxu0 0.0
        %1301 = vmatprep.subr.mxu0 0.0
        %1302 = vmatpush1.msra.mxu0 0.0
        %1303 = vmatprep.subr.mxu0 0.0
        %1304 = vmatpush1.msra.mxu0 0.0
        %1305 = vmatprep.subr.mxu0 0.0
        %1306 = vmatpush1.msra.mxu0 0.0
        %1307 = vmatprep.subr.mxu0 0.0
        %1308 = vmatpush1.msra.mxu0 0.0
        %1309 = vmatprep.subr.mxu0 0.0
        %1310 = vmatpush1.msra.mxu0 0.0
        %1311 = vmatprep.subr.mxu0 0.0
        %1312 = vmatpush1.msra.mxu0 0.0
        %1313 = vmatprep.subr.mxu0 0.0
        %1314 = vmatpush1.msra.mxu0 0.0
        %1315 = vmatprep.subr.mxu0 0.0
        %1316 = vmatpush1.msra.mxu0 0.0
        %1317 = vmatprep.subr.mxu0 0.0
        %1318 = vmatpush1.msra.mxu0 0.0
        %1319 = vmatprep.subr.mxu0 0.0
        %1320 = vmatpush1.msra.mxu0 0.0
        %1321 = vmatprep.subr.mxu0 0.0
        %1322 = vmatpush1.msra.mxu0 0.0
        %1323 = vmatprep.subr.mxu0 0.0
        %1324 = vmatpush1.msra.mxu0 0.0
        %1325 = vmatprep.subr.mxu0 0.0
        %1326 = vmatpush1.msra.mxu0 0.0
        %1327 = vmatprep.subr.mxu0 0.0
        %1328 = vmatpush1.msra.mxu0 0.0
        %1329 = vmatprep.subr.mxu0 0.0
        %1330 = vmatpush1.msra.mxu0 0.0
        %1331 = vmatprep.subr.mxu0 0.0
        %1332 = vmatpush1.msra.mxu0 0.0
        %1333 = vmatprep.subr.mxu0 0.0
        %1334 = vmatpush1.msra.mxu0 0.0
        %1335 = vmatprep.subr.mxu0 0.0
        %1336 = vmatpush1.msra.mxu0 0.0
        %1337 = vmatprep.subr.mxu0 0.0
        %1338 = vmatpush1.msra.mxu0 0.0
        %1339 = vmatprep.subr.mxu0 0.0
        %1340 = vmatpush1.msra.mxu0 0.0
        %1341 = vmatprep.subr.mxu0 0.0
        %1342 = vmatpush1.msra.mxu0 0.0
        %1343 = vmatprep.subr.mxu0 0.0
        %1344 = vmatpush1.msra.mxu0 0.0
        %1345 = vmatprep.subr.mxu0 0.0
        %1346 = vmatpush1.msra.mxu0 0.0
        %1347 = vmatprep.subr.mxu0 0.0
        %1348 = vmatpush1.msra.mxu0 0.0
        %1349 = vmatprep.subr.mxu0 0.0
        %1350 = vmatpush1.msra.mxu0 0.0
        %1351 = vmatprep.subr.mxu0 0.0
        %1352 = vmatpush1.msra.mxu0 0.0
        %1353 = vmatprep.mubr.f32.mxu0 0.0
        %1354 = vmatmul.mubr.f32.gmra.mrb[0].mxu0 %v1287
        %v1355 = vpop.f32.mrb[0].mxu0
        %v1356 = vadd.f32 0.0, %v1355
        %v1357 = vpop.f32.mrb[0].mxu0
        %1358 = vdwg.mxu0
        %v1359 = vadd.f32 %v1281, %v1356
        %v1360 = vld [vmem:[%s1125 + $0x8] sm:$0xf]
        %s1361 = scalar_lea.vmem %s1, 160
        %v1362 = vld [vmem:[%s1361] sm:$0xff]
        %v1363 = vld [vmem:[%s1361 + $0x8] sm:$0xff]
        %v1365 = vsel %vm309, %v1360, 0
        %1367 = vmatprep.subr.mxu0 0.0
        %1368 = vmatpush1.msra.mxu0 %v1362
        %1369 = vmatprep.subr.mxu0 0.0
        %1370 = vmatpush1.msra.mxu0 %v1363
        %1371 = vmatprep.subr.mxu0 0.0
        %1372 = vmatpush1.msra.mxu0 0.0
        %1373 = vmatprep.subr.mxu0 0.0
        %1374 = vmatpush1.msra.mxu0 0.0
        %1375 = vmatprep.subr.mxu0 0.0
        %1376 = vmatpush1.msra.mxu0 0.0
        %1377 = vmatprep.subr.mxu0 0.0
        %1378 = vmatpush1.msra.mxu0 0.0
        %1379 = vmatprep.subr.mxu0 0.0
        %1380 = vmatpush1.msra.mxu0 0.0
        %1381 = vmatprep.subr.mxu0 0.0
        %1382 = vmatpush1.msra.mxu0 0.0
        %1383 = vmatprep.subr.mxu0 0.0
        %1384 = vmatpush1.msra.mxu0 0.0
        %1385 = vmatprep.subr.mxu0 0.0
        %1386 = vmatpush1.msra.mxu0 0.0
        %1387 = vmatprep.subr.mxu0 0.0
        %1388 = vmatpush1.msra.mxu0 0.0
        %1389 = vmatprep.subr.mxu0 0.0
        %1390 = vmatpush1.msra.mxu0 0.0
        %1391 = vmatprep.subr.mxu0 0.0
        %1392 = vmatpush1.msra.mxu0 0.0
        %1393 = vmatprep.subr.mxu0 0.0
        %1394 = vmatpush1.msra.mxu0 0.0
        %1395 = vmatprep.subr.mxu0 0.0
        %1396 = vmatpush1.msra.mxu0 0.0
        %1397 = vmatprep.subr.mxu0 0.0
        %1398 = vmatpush1.msra.mxu0 0.0
        %1399 = vmatprep.subr.mxu0 0.0
        %1400 = vmatpush1.msra.mxu0 0.0
        %1401 = vmatprep.subr.mxu0 0.0
        %1402 = vmatpush1.msra.mxu0 0.0
        %1403 = vmatprep.subr.mxu0 0.0
        %1404 = vmatpush1.msra.mxu0 0.0
        %1405 = vmatprep.subr.mxu0 0.0
        %1406 = vmatpush1.msra.mxu0 0.0
        %1407 = vmatprep.subr.mxu0 0.0
        %1408 = vmatpush1.msra.mxu0 0.0
        %1409 = vmatprep.subr.mxu0 0.0
        %1410 = vmatpush1.msra.mxu0 0.0
        %1411 = vmatprep.subr.mxu0 0.0
        %1412 = vmatpush1.msra.mxu0 0.0
        %1413 = vmatprep.subr.mxu0 0.0
        %1414 = vmatpush1.msra.mxu0 0.0
        %1415 = vmatprep.subr.mxu0 0.0
        %1416 = vmatpush1.msra.mxu0 0.0
        %1417 = vmatprep.subr.mxu0 0.0
        %1418 = vmatpush1.msra.mxu0 0.0
        %1419 = vmatprep.subr.mxu0 0.0
        %1420 = vmatpush1.msra.mxu0 0.0
        %1421 = vmatprep.subr.mxu0 0.0
        %1422 = vmatpush1.msra.mxu0 0.0
        %1423 = vmatprep.subr.mxu0 0.0
        %1424 = vmatpush1.msra.mxu0 0.0
        %1425 = vmatprep.subr.mxu0 0.0
        %1426 = vmatpush1.msra.mxu0 0.0
        %1427 = vmatprep.subr.mxu0 0.0
        %1428 = vmatpush1.msra.mxu0 0.0
        %1429 = vmatprep.subr.mxu0 0.0
        %1430 = vmatpush1.msra.mxu0 0.0
        %1431 = vmatprep.mubr.f32.mxu0 0.0
        %1432 = vmatmul.mubr.f32.gmra.mrb[0].mxu0 %v1365
        %v1433 = vpop.f32.mrb[0].mxu0
        %v1434 = vadd.f32 0.0, %v1433
        %v1435 = vpop.f32.mrb[0].mxu0
        %1436 = vdwg.mxu0
        %v1437 = vadd.f32 %v1359, %v1434
        %v1438 = vld [vmem:[%s1125 + $0x9] sm:$0xf]
        %s1439 = scalar_lea.vmem %s1, 176
        %v1440 = vld [vmem:[%s1439] sm:$0xff]
        %v1441 = vld [vmem:[%s1439 + $0x8] sm:$0xff]
        %v1443 = vsel %vm309, %v1438, 0
        %1445 = vmatprep.subr.mxu0 0.0
        %1446 = vmatpush1.msra.mxu0 %v1440
        %1447 = vmatprep.subr.mxu0 0.0
        %1448 = vmatpush1.msra.mxu0 %v1441
        %1449 = vmatprep.subr.mxu0 0.0
        %1450 = vmatpush1.msra.mxu0 0.0
        %1451 = vmatprep.subr.mxu0 0.0
        %1452 = vmatpush1.msra.mxu0 0.0
        %1453 = vmatprep.subr.mxu0 0.0
        %1454 = vmatpush1.msra.mxu0 0.0
        %1455 = vmatprep.subr.mxu0 0.0
        %1456 = vmatpush1.msra.mxu0 0.0
        %1457 = vmatprep.subr.mxu0 0.0
        %1458 = vmatpush1.msra.mxu0 0.0
        %1459 = vmatprep.subr.mxu0 0.0
        %1460 = vmatpush1.msra.mxu0 0.0
        %1461 = vmatprep.subr.mxu0 0.0
        %1462 = vmatpush1.msra.mxu0 0.0
        %1463 = vmatprep.subr.mxu0 0.0
        %1464 = vmatpush1.msra.mxu0 0.0
        %1465 = vmatprep.subr.mxu0 0.0
        %1466 = vmatpush1.msra.mxu0 0.0
        %1467 = vmatprep.subr.mxu0 0.0
        %1468 = vmatpush1.msra.mxu0 0.0
        %1469 = vmatprep.subr.mxu0 0.0
        %1470 = vmatpush1.msra.mxu0 0.0
        %1471 = vmatprep.subr.mxu0 0.0
        %1472 = vmatpush1.msra.mxu0 0.0
        %1473 = vmatprep.subr.mxu0 0.0
        %1474 = vmatpush1.msra.mxu0 0.0
        %1475 = vmatprep.subr.mxu0 0.0
        %1476 = vmatpush1.msra.mxu0 0.0
        %1477 = vmatprep.subr.mxu0 0.0
        %1478 = vmatpush1.msra.mxu0 0.0
        %1479 = vmatprep.subr.mxu0 0.0
        %1480 = vmatpush1.msra.mxu0 0.0
        %1481 = vmatprep.subr.mxu0 0.0
        %1482 = vmatpush1.msra.mxu0 0.0
        %1483 = vmatprep.subr.mxu0 0.0
        %1484 = vmatpush1.msra.mxu0 0.0
        %1485 = vmatprep.subr.mxu0 0.0
        %1486 = vmatpush1.msra.mxu0 0.0
        %1487 = vmatprep.subr.mxu0 0.0
        %1488 = vmatpush1.msra.mxu0 0.0
        %1489 = vmatprep.subr.mxu0 0.0
        %1490 = vmatpush1.msra.mxu0 0.0
        %1491 = vmatprep.subr.mxu0 0.0
        %1492 = vmatpush1.msra.mxu0 0.0
        %1493 = vmatprep.subr.mxu0 0.0
        %1494 = vmatpush1.msra.mxu0 0.0
        %1495 = vmatprep.subr.mxu0 0.0
        %1496 = vmatpush1.msra.mxu0 0.0
        %1497 = vmatprep.subr.mxu0 0.0
        %1498 = vmatpush1.msra.mxu0 0.0
        %1499 = vmatprep.subr.mxu0 0.0
        %1500 = vmatpush1.msra.mxu0 0.0
        %1501 = vmatprep.subr.mxu0 0.0
        %1502 = vmatpush1.msra.mxu0 0.0
        %1503 = vmatprep.subr.mxu0 0.0
        %1504 = vmatpush1.msra.mxu0 0.0
        %1505 = vmatprep.subr.mxu0 0.0
        %1506 = vmatpush1.msra.mxu0 0.0
        %1507 = vmatprep.subr.mxu0 0.0
        %1508 = vmatpush1.msra.mxu0 0.0
        %1509 = vmatprep.mubr.f32.mxu0 0.0
        %1510 = vmatmul.mubr.f32.gmra.mrb[0].mxu0 %v1443
        %v1511 = vpop.f32.mrb[0].mxu0
        %v1512 = vadd.f32 0.0, %v1511
        %v1513 = vpop.f32.mrb[0].mxu0
        %1514 = vdwg.mxu0
        %v1515 = vadd.f32 %v1437, %v1512
        %v1516 = vld [vmem:[%s1125 + $0xa] sm:$0xf]
        %s1517 = scalar_lea.vmem %s1, 192
        %v1518 = vld [vmem:[%s1517] sm:$0xff]
        %v1519 = vld [vmem:[%s1517 + $0x8] sm:$0xff]
        %v1521 = vsel %vm309, %v1516, 0
        %1523 = vmatprep.subr.mxu0 0.0
        %1524 = vmatpush1.msra.mxu0 %v1518
        %1525 = vmatprep.subr.mxu0 0.0
        %1526 = vmatpush1.msra.mxu0 %v1519
        %1527 = vmatprep.subr.mxu0 0.0
        %1528 = vmatpush1.msra.mxu0 0.0
        %1529 = vmatprep.subr.mxu0 0.0
        %1530 = vmatpush1.msra.mxu0 0.0
        %1531 = vmatprep.subr.mxu0 0.0
        %1532 = vmatpush1.msra.mxu0 0.0
        %1533 = vmatprep.subr.mxu0 0.0
        %1534 = vmatpush1.msra.mxu0 0.0
        %1535 = vmatprep.subr.mxu0 0.0
        %1536 = vmatpush1.msra.mxu0 0.0
        %1537 = vmatprep.subr.mxu0 0.0
        %1538 = vmatpush1.msra.mxu0 0.0
        %1539 = vmatprep.subr.mxu0 0.0
        %1540 = vmatpush1.msra.mxu0 0.0
        %1541 = vmatprep.subr.mxu0 0.0
        %1542 = vmatpush1.msra.mxu0 0.0
        %1543 = vmatprep.subr.mxu0 0.0
        %1544 = vmatpush1.msra.mxu0 0.0
        %1545 = vmatprep.subr.mxu0 0.0
        %1546 = vmatpush1.msra.mxu0 0.0
        %1547 = vmatprep.subr.mxu0 0.0
        %1548 = vmatpush1.msra.mxu0 0.0
        %1549 = vmatprep.subr.mxu0 0.0
        %1550 = vmatpush1.msra.mxu0 0.0
        %1551 = vmatprep.subr.mxu0 0.0
        %1552 = vmatpush1.msra.mxu0 0.0
        %1553 = vmatprep.subr.mxu0 0.0
        %1554 = vmatpush1.msra.mxu0 0.0
        %1555 = vmatprep.subr.mxu0 0.0
        %1556 = vmatpush1.msra.mxu0 0.0
        %1557 = vmatprep.subr.mxu0 0.0
        %1558 = vmatpush1.msra.mxu0 0.0
        %1559 = vmatprep.subr.mxu0 0.0
        %1560 = vmatpush1.msra.mxu0 0.0
        %1561 = vmatprep.subr.mxu0 0.0
        %1562 = vmatpush1.msra.mxu0 0.0
        %1563 = vmatprep.subr.mxu0 0.0
        %1564 = vmatpush1.msra.mxu0 0.0
        %1565 = vmatprep.subr.mxu0 0.0
        %1566 = vmatpush1.msra.mxu0 0.0
        %1567 = vmatprep.subr.mxu0 0.0
        %1568 = vmatpush1.msra.mxu0 0.0
        %1569 = vmatprep.subr.mxu0 0.0
        %1570 = vmatpush1.msra.mxu0 0.0
        %1571 = vmatprep.subr.mxu0 0.0
        %1572 = vmatpush1.msra.mxu0 0.0
        %1573 = vmatprep.subr.mxu0 0.0
        %1574 = vmatpush1.msra.mxu0 0.0
        %1575 = vmatprep.subr.mxu0 0.0
        %1576 = vmatpush1.msra.mxu0 0.0
        %1577 = vmatprep.subr.mxu0 0.0
        %1578 = vmatpush1.msra.mxu0 0.0
        %1579 = vmatprep.subr.mxu0 0.0
        %1580 = vmatpush1.msra.mxu0 0.0
        %1581 = vmatprep.subr.mxu0 0.0
        %1582 = vmatpush1.msra.mxu0 0.0
        %1583 = vmatprep.subr.mxu0 0.0
        %1584 = vmatpush1.msra.mxu0 0.0
        %1585 = vmatprep.subr.mxu0 0.0
        %1586 = vmatpush1.msra.mxu0 0.0
        %1587 = vmatprep.mubr.f32.mxu0 0.0
        %1588 = vmatmul.mubr.f32.gmra.mrb[0].mxu0 %v1521
        %v1589 = vpop.f32.mrb[0].mxu0
        %v1590 = vadd.f32 0.0, %v1589
        %v1591 = vpop.f32.mrb[0].mxu0
        %1592 = vdwg.mxu0
        %v1593 = vadd.f32 %v1515, %v1590
        %v1594 = vld [vmem:[%s1125 + $0xb] sm:$0xf]
        %s1595 = scalar_lea.vmem %s1, 208
        %v1596 = vld [vmem:[%s1595] sm:$0xff]
        %v1597 = vld [vmem:[%s1595 + $0x8] sm:$0xff]
        %v1599 = vsel %vm309, %v1594, 0
        %1601 = vmatprep.subr.mxu0 0.0
        %1602 = vmatpush1.msra.mxu0 %v1596
        %1603 = vmatprep.subr.mxu0 0.0
        %1604 = vmatpush1.msra.mxu0 %v1597
        %1605 = vmatprep.subr.mxu0 0.0
        %1606 = vmatpush1.msra.mxu0 0.0
        %1607 = vmatprep.subr.mxu0 0.0
        %1608 = vmatpush1.msra.mxu0 0.0
        %1609 = vmatprep.subr.mxu0 0.0
        %1610 = vmatpush1.msra.mxu0 0.0
        %1611 = vmatprep.subr.mxu0 0.0
        %1612 = vmatpush1.msra.mxu0 0.0
        %1613 = vmatprep.subr.mxu0 0.0
        %1614 = vmatpush1.msra.mxu0 0.0
        %1615 = vmatprep.subr.mxu0 0.0
        %1616 = vmatpush1.msra.mxu0 0.0
        %1617 = vmatprep.subr.mxu0 0.0
        %1618 = vmatpush1.msra.mxu0 0.0
        %1619 = vmatprep.subr.mxu0 0.0
        %1620 = vmatpush1.msra.mxu0 0.0
        %1621 = vmatprep.subr.mxu0 0.0
        %1622 = vmatpush1.msra.mxu0 0.0
        %1623 = vmatprep.subr.mxu0 0.0
        %1624 = vmatpush1.msra.mxu0 0.0
        %1625 = vmatprep.subr.mxu0 0.0
        %1626 = vmatpush1.msra.mxu0 0.0
        %1627 = vmatprep.subr.mxu0 0.0
        %1628 = vmatpush1.msra.mxu0 0.0
        %1629 = vmatprep.subr.mxu0 0.0
        %1630 = vmatpush1.msra.mxu0 0.0
        %1631 = vmatprep.subr.mxu0 0.0
        %1632 = vmatpush1.msra.mxu0 0.0
        %1633 = vmatprep.subr.mxu0 0.0
        %1634 = vmatpush1.msra.mxu0 0.0
        %1635 = vmatprep.subr.mxu0 0.0
        %1636 = vmatpush1.msra.mxu0 0.0
        %1637 = vmatprep.subr.mxu0 0.0
        %1638 = vmatpush1.msra.mxu0 0.0
        %1639 = vmatprep.subr.mxu0 0.0
        %1640 = vmatpush1.msra.mxu0 0.0
        %1641 = vmatprep.subr.mxu0 0.0
        %1642 = vmatpush1.msra.mxu0 0.0
        %1643 = vmatprep.subr.mxu0 0.0
        %1644 = vmatpush1.msra.mxu0 0.0
        %1645 = vmatprep.subr.mxu0 0.0
        %1646 = vmatpush1.msra.mxu0 0.0
        %1647 = vmatprep.subr.mxu0 0.0
        %1648 = vmatpush1.msra.mxu0 0.0
        %1649 = vmatprep.subr.mxu0 0.0
        %1650 = vmatpush1.msra.mxu0 0.0
        %1651 = vmatprep.subr.mxu0 0.0
        %1652 = vmatpush1.msra.mxu0 0.0
        %1653 = vmatprep.subr.mxu0 0.0
        %1654 = vmatpush1.msra.mxu0 0.0
        %1655 = vmatprep.subr.mxu0 0.0
        %1656 = vmatpush1.msra.mxu0 0.0
        %1657 = vmatprep.subr.mxu0 0.0
        %1658 = vmatpush1.msra.mxu0 0.0
        %1659 = vmatprep.subr.mxu0 0.0
        %1660 = vmatpush1.msra.mxu0 0.0
        %1661 = vmatprep.subr.mxu0 0.0
        %1662 = vmatpush1.msra.mxu0 0.0
        %1663 = vmatprep.subr.mxu0 0.0
        %1664 = vmatpush1.msra.mxu0 0.0
        %1665 = vmatprep.mubr.f32.mxu0 0.0
        %1666 = vmatmul.mubr.f32.gmra.mrb[0].mxu0 %v1599
        %v1667 = vpop.f32.mrb[0].mxu0
        %v1668 = vadd.f32 0.0, %v1667
        %v1669 = vpop.f32.mrb[0].mxu0
        %1670 = vdwg.mxu0
        %v1671 = vadd.f32 %v1593, %v1668
        %v1672 = vxor.u32 %v1671, 2147483648
        %v1673 = vmul.f32 %v1672, 1.442695
        %v1674 = vpow.pop %v1673
        %v1675 = vadd.f32 %v1674, 1.0
        %v1676 = vrcp.pop %v1675
        %v1677 = vmul.f32 1.0, %v1676
        %v1678 = vmul.f32 %v1677, 0.33333334
        %s1679 = sld [smem:[#allocation12 + $0x1]]
        %v1680 = vstv %s1679
        %v1681 = vld [vmem:[#allocation3 + $0x5] sm:$0xf]
        %v1682 = vld [vmem:[#allocation9] sm:$0xff]
        %v1683 = vld [vmem:[#allocation9 + $0x8] sm:$0xff]
        %v1685 = vsel %vm309, %v1681, 0
        %1687 = vmatprep.subr.mxu0 0.0
        %1688 = vmatpush1.msra.mxu0 %v1682
        %1689 = vmatprep.subr.mxu0 0.0
        %1690 = vmatpush1.msra.mxu0 %v1683
        %1691 = vmatprep.subr.mxu0 0.0
        %1692 = vmatpush1.msra.mxu0 0.0
        %1693 = vmatprep.subr.mxu0 0.0
        %1694 = vmatpush1.msra.mxu0 0.0
        %1695 = vmatprep.subr.mxu0 0.0
        %1696 = vmatpush1.msra.mxu0 0.0
        %1697 = vmatprep.subr.mxu0 0.0
        %1698 = vmatpush1.msra.mxu0 0.0
        %1699 = vmatprep.subr.mxu0 0.0
        %1700 = vmatpush1.msra.mxu0 0.0
        %1701 = vmatprep.subr.mxu0 0.0
        %1702 = vmatpush1.msra.mxu0 0.0
        %1703 = vmatprep.subr.mxu0 0.0
        %1704 = vmatpush1.msra.mxu0 0.0
        %1705 = vmatprep.subr.mxu0 0.0
        %1706 = vmatpush1.msra.mxu0 0.0
        %1707 = vmatprep.subr.mxu0 0.0
        %1708 = vmatpush1.msra.mxu0 0.0
        %1709 = vmatprep.subr.mxu0 0.0
        %1710 = vmatpush1.msra.mxu0 0.0
        %1711 = vmatprep.subr.mxu0 0.0
        %1712 = vmatpush1.msra.mxu0 0.0
        %1713 = vmatprep.subr.mxu0 0.0
        %1714 = vmatpush1.msra.mxu0 0.0
        %1715 = vmatprep.subr.mxu0 0.0
        %1716 = vmatpush1.msra.mxu0 0.0
        %1717 = vmatprep.subr.mxu0 0.0
        %1718 = vmatpush1.msra.mxu0 0.0
        %1719 = vmatprep.subr.mxu0 0.0
        %1720 = vmatpush1.msra.mxu0 0.0
        %1721 = vmatprep.subr.mxu0 0.0
        %1722 = vmatpush1.msra.mxu0 0.0
        %1723 = vmatprep.subr.mxu0 0.0
        %1724 = vmatpush1.msra.mxu0 0.0
        %1725 = vmatprep.subr.mxu0 0.0
        %1726 = vmatpush1.msra.mxu0 0.0
        %1727 = vmatprep.subr.mxu0 0.0
        %1728 = vmatpush1.msra.mxu0 0.0
        %1729 = vmatprep.subr.mxu0 0.0
        %1730 = vmatpush1.msra.mxu0 0.0
        %1731 = vmatprep.subr.mxu0 0.0
        %1732 = vmatpush1.msra.mxu0 0.0
        %1733 = vmatprep.subr.mxu0 0.0
        %1734 = vmatpush1.msra.mxu0 0.0
        %1735 = vmatprep.subr.mxu0 0.0
        %1736 = vmatpush1.msra.mxu0 0.0
        %1737 = vmatprep.subr.mxu0 0.0
        %1738 = vmatpush1.msra.mxu0 0.0
        %1739 = vmatprep.subr.mxu0 0.0
        %1740 = vmatpush1.msra.mxu0 0.0
        %1741 = vmatprep.subr.mxu0 0.0
        %1742 = vmatpush1.msra.mxu0 0.0
        %1743 = vmatprep.subr.mxu0 0.0
        %1744 = vmatpush1.msra.mxu0 0.0
        %1745 = vmatprep.subr.mxu0 0.0
        %1746 = vmatpush1.msra.mxu0 0.0
        %1747 = vmatprep.subr.mxu0 0.0
        %1748 = vmatpush1.msra.mxu0 0.0
        %1749 = vmatprep.subr.mxu0 0.0
        %1750 = vmatpush1.msra.mxu0 0.0
        %1751 = vmatprep.mubr.f32.mxu0 0.0
        %1752 = vmatmul.mubr.f32.gmra.mrb[0].mxu0 %v1685
        %v1753 = vpop.f32.mrb[0].mxu0
        %v1754 = vadd.f32 0.0, %v1753
        %v1755 = vpop.f32.mrb[0].mxu0
        %1756 = vdwg.mxu0
        %v1757 = vadd.f32 %v1680, %v1754
        %v1758 = vld [vmem:[#allocation3 + $0x6] sm:$0xf]
        %s1759 = scalar_lea.vmem [#allocation9], 16
        %v1760 = vld [vmem:[%s1759] sm:$0xff]
        %v1761 = vld [vmem:[%s1759 + $0x8] sm:$0xff]
        %v1763 = vsel %vm309, %v1758, 0
        %1765 = vmatprep.subr.mxu0 0.0
        %1766 = vmatpush1.msra.mxu0 %v1760
        %1767 = vmatprep.subr.mxu0 0.0
        %1768 = vmatpush1.msra.mxu0 %v1761
        %1769 = vmatprep.subr.mxu0 0.0
        %1770 = vmatpush1.msra.mxu0 0.0
        %1771 = vmatprep.subr.mxu0 0.0
        %1772 = vmatpush1.msra.mxu0 0.0
        %1773 = vmatprep.subr.mxu0 0.0
        %1774 = vmatpush1.msra.mxu0 0.0
        %1775 = vmatprep.subr.mxu0 0.0
        %1776 = vmatpush1.msra.mxu0 0.0
        %1777 = vmatprep.subr.mxu0 0.0
        %1778 = vmatpush1.msra.mxu0 0.0
        %1779 = vmatprep.subr.mxu0 0.0
        %1780 = vmatpush1.msra.mxu0 0.0
        %1781 = vmatprep.subr.mxu0 0.0
        %1782 = vmatpush1.msra.mxu0 0.0
        %1783 = vmatprep.subr.mxu0 0.0
        %1784 = vmatpush1.msra.mxu0 0.0
        %1785 = vmatprep.subr.mxu0 0.0
        %1786 = vmatpush1.msra.mxu0 0.0
        %1787 = vmatprep.subr.mxu0 0.0
        %1788 = vmatpush1.msra.mxu0 0.0
        %1789 = vmatprep.subr.mxu0 0.0
        %1790 = vmatpush1.msra.mxu0 0.0
        %1791 = vmatprep.subr.mxu0 0.0
        %1792 = vmatpush1.msra.mxu0 0.0
        %1793 = vmatprep.subr.mxu0 0.0
        %1794 = vmatpush1.msra.mxu0 0.0
        %1795 = vmatprep.subr.mxu0 0.0
        %1796 = vmatpush1.msra.mxu0 0.0
        %1797 = vmatprep.subr.mxu0 0.0
        %1798 = vmatpush1.msra.mxu0 0.0
        %1799 = vmatprep.subr.mxu0 0.0
        %1800 = vmatpush1.msra.mxu0 0.0
        %1801 = vmatprep.subr.mxu0 0.0
        %1802 = vmatpush1.msra.mxu0 0.0
        %1803 = vmatprep.subr.mxu0 0.0
        %1804 = vmatpush1.msra.mxu0 0.0
        %1805 = vmatprep.subr.mxu0 0.0
        %1806 = vmatpush1.msra.mxu0 0.0
        %1807 = vmatprep.subr.mxu0 0.0
        %1808 = vmatpush1.msra.mxu0 0.0
        %1809 = vmatprep.subr.mxu0 0.0
        %1810 = vmatpush1.msra.mxu0 0.0
        %1811 = vmatprep.subr.mxu0 0.0
        %1812 = vmatpush1.msra.mxu0 0.0
        %1813 = vmatprep.subr.mxu0 0.0
        %1814 = vmatpush1.msra.mxu0 0.0
        %1815 = vmatprep.subr.mxu0 0.0
        %1816 = vmatpush1.msra.mxu0 0.0
        %1817 = vmatprep.subr.mxu0 0.0
        %1818 = vmatpush1.msra.mxu0 0.0
        %1819 = vmatprep.subr.mxu0 0.0
        %1820 = vmatpush1.msra.mxu0 0.0
        %1821 = vmatprep.subr.mxu0 0.0
        %1822 = vmatpush1.msra.mxu0 0.0
        %1823 = vmatprep.subr.mxu0 0.0
        %1824 = vmatpush1.msra.mxu0 0.0
        %1825 = vmatprep.subr.mxu0 0.0
        %1826 = vmatpush1.msra.mxu0 0.0
        %1827 = vmatprep.subr.mxu0 0.0
        %1828 = vmatpush1.msra.mxu0 0.0
        %1829 = vmatprep.mubr.f32.mxu0 0.0
        %1830 = vmatmul.mubr.f32.gmra.mrb[0].mxu0 %v1763
        %v1831 = vpop.f32.mrb[0].mxu0
        %v1832 = vadd.f32 0.0, %v1831
        %v1833 = vpop.f32.mrb[0].mxu0
        %1834 = vdwg.mxu0
        %v1835 = vadd.f32 %v1757, %v1832
        %v1836 = vld [vmem:[#allocation3 + $0x7] sm:$0xf]
        %s1837 = scalar_lea.vmem [#allocation9], 32
        %v1838 = vld [vmem:[%s1837] sm:$0xff]
        %v1839 = vld [vmem:[%s1837 + $0x8] sm:$0xff]
        %v1841 = vsel %vm309, %v1836, 0
        %1843 = vmatprep.subr.mxu0 0.0
        %1844 = vmatpush1.msra.mxu0 %v1838
        %1845 = vmatprep.subr.mxu0 0.0
        %1846 = vmatpush1.msra.mxu0 %v1839
        %1847 = vmatprep.subr.mxu0 0.0
        %1848 = vmatpush1.msra.mxu0 0.0
        %1849 = vmatprep.subr.mxu0 0.0
        %1850 = vmatpush1.msra.mxu0 0.0
        %1851 = vmatprep.subr.mxu0 0.0
        %1852 = vmatpush1.msra.mxu0 0.0
        %1853 = vmatprep.subr.mxu0 0.0
        %1854 = vmatpush1.msra.mxu0 0.0
        %1855 = vmatprep.subr.mxu0 0.0
        %1856 = vmatpush1.msra.mxu0 0.0
        %1857 = vmatprep.subr.mxu0 0.0
        %1858 = vmatpush1.msra.mxu0 0.0
        %1859 = vmatprep.subr.mxu0 0.0
        %1860 = vmatpush1.msra.mxu0 0.0
        %1861 = vmatprep.subr.mxu0 0.0
        %1862 = vmatpush1.msra.mxu0 0.0
        %1863 = vmatprep.subr.mxu0 0.0
        %1864 = vmatpush1.msra.mxu0 0.0
        %1865 = vmatprep.subr.mxu0 0.0
        %1866 = vmatpush1.msra.mxu0 0.0
        %1867 = vmatprep.subr.mxu0 0.0
        %1868 = vmatpush1.msra.mxu0 0.0
        %1869 = vmatprep.subr.mxu0 0.0
        %1870 = vmatpush1.msra.mxu0 0.0
        %1871 = vmatprep.subr.mxu0 0.0
        %1872 = vmatpush1.msra.mxu0 0.0
        %1873 = vmatprep.subr.mxu0 0.0
        %1874 = vmatpush1.msra.mxu0 0.0
        %1875 = vmatprep.subr.mxu0 0.0
        %1876 = vmatpush1.msra.mxu0 0.0
        %1877 = vmatprep.subr.mxu0 0.0
        %1878 = vmatpush1.msra.mxu0 0.0
        %1879 = vmatprep.subr.mxu0 0.0
        %1880 = vmatpush1.msra.mxu0 0.0
        %1881 = vmatprep.subr.mxu0 0.0
        %1882 = vmatpush1.msra.mxu0 0.0
        %1883 = vmatprep.subr.mxu0 0.0
        %1884 = vmatpush1.msra.mxu0 0.0
        %1885 = vmatprep.subr.mxu0 0.0
        %1886 = vmatpush1.msra.mxu0 0.0
        %1887 = vmatprep.subr.mxu0 0.0
        %1888 = vmatpush1.msra.mxu0 0.0
        %1889 = vmatprep.subr.mxu0 0.0
        %1890 = vmatpush1.msra.mxu0 0.0
        %1891 = vmatprep.subr.mxu0 0.0
        %1892 = vmatpush1.msra.mxu0 0.0
        %1893 = vmatprep.subr.mxu0 0.0
        %1894 = vmatpush1.msra.mxu0 0.0
        %1895 = vmatprep.subr.mxu0 0.0
        %1896 = vmatpush1.msra.mxu0 0.0
        %1897 = vmatprep.subr.mxu0 0.0
        %1898 = vmatpush1.msra.mxu0 0.0
        %1899 = vmatprep.subr.mxu0 0.0
        %1900 = vmatpush1.msra.mxu0 0.0
        %1901 = vmatprep.subr.mxu0 0.0
        %1902 = vmatpush1.msra.mxu0 0.0
        %1903 = vmatprep.subr.mxu0 0.0
        %1904 = vmatpush1.msra.mxu0 0.0
        %1905 = vmatprep.subr.mxu0 0.0
        %1906 = vmatpush1.msra.mxu0 0.0
        %1907 = vmatprep.mubr.f32.mxu0 0.0
        %1908 = vmatmul.mubr.f32.gmra.mrb[0].mxu0 %v1841
        %v1909 = vpop.f32.mrb[0].mxu0
        %v1910 = vadd.f32 0.0, %v1909
        %v1911 = vpop.f32.mrb[0].mxu0
        %1912 = vdwg.mxu0
        %v1913 = vadd.f32 %v1835, %v1910
        %v1914 = vld [vmem:[#allocation3 + $0x8] sm:$0xf]
        %s1915 = scalar_lea.vmem [#allocation9], 48
        %v1916 = vld [vmem:[%s1915] sm:$0xff]
        %v1917 = vld [vmem:[%s1915 + $0x8] sm:$0xff]
        %v1919 = vsel %vm309, %v1914, 0
        %1921 = vmatprep.subr.mxu0 0.0
        %1922 = vmatpush1.msra.mxu0 %v1916
        %1923 = vmatprep.subr.mxu0 0.0
        %1924 = vmatpush1.msra.mxu0 %v1917
        %1925 = vmatprep.subr.mxu0 0.0
        %1926 = vmatpush1.msra.mxu0 0.0
        %1927 = vmatprep.subr.mxu0 0.0
        %1928 = vmatpush1.msra.mxu0 0.0
        %1929 = vmatprep.subr.mxu0 0.0
        %1930 = vmatpush1.msra.mxu0 0.0
        %1931 = vmatprep.subr.mxu0 0.0
        %1932 = vmatpush1.msra.mxu0 0.0
        %1933 = vmatprep.subr.mxu0 0.0
        %1934 = vmatpush1.msra.mxu0 0.0
        %1935 = vmatprep.subr.mxu0 0.0
        %1936 = vmatpush1.msra.mxu0 0.0
        %1937 = vmatprep.subr.mxu0 0.0
        %1938 = vmatpush1.msra.mxu0 0.0
        %1939 = vmatprep.subr.mxu0 0.0
        %1940 = vmatpush1.msra.mxu0 0.0
        %1941 = vmatprep.subr.mxu0 0.0
        %1942 = vmatpush1.msra.mxu0 0.0
        %1943 = vmatprep.subr.mxu0 0.0
        %1944 = vmatpush1.msra.mxu0 0.0
        %1945 = vmatprep.subr.mxu0 0.0
        %1946 = vmatpush1.msra.mxu0 0.0
        %1947 = vmatprep.subr.mxu0 0.0
        %1948 = vmatpush1.msra.mxu0 0.0
        %1949 = vmatprep.subr.mxu0 0.0
        %1950 = vmatpush1.msra.mxu0 0.0
        %1951 = vmatprep.subr.mxu0 0.0
        %1952 = vmatpush1.msra.mxu0 0.0
        %1953 = vmatprep.subr.mxu0 0.0
        %1954 = vmatpush1.msra.mxu0 0.0
        %1955 = vmatprep.subr.mxu0 0.0
        %1956 = vmatpush1.msra.mxu0 0.0
        %1957 = vmatprep.subr.mxu0 0.0
        %1958 = vmatpush1.msra.mxu0 0.0
        %1959 = vmatprep.subr.mxu0 0.0
        %1960 = vmatpush1.msra.mxu0 0.0
        %1961 = vmatprep.subr.mxu0 0.0
        %1962 = vmatpush1.msra.mxu0 0.0
        %1963 = vmatprep.subr.mxu0 0.0
        %1964 = vmatpush1.msra.mxu0 0.0
        %1965 = vmatprep.subr.mxu0 0.0
        %1966 = vmatpush1.msra.mxu0 0.0
        %1967 = vmatprep.subr.mxu0 0.0
        %1968 = vmatpush1.msra.mxu0 0.0
        %1969 = vmatprep.subr.mxu0 0.0
        %1970 = vmatpush1.msra.mxu0 0.0
        %1971 = vmatprep.subr.mxu0 0.0
        %1972 = vmatpush1.msra.mxu0 0.0
        %1973 = vmatprep.subr.mxu0 0.0
        %1974 = vmatpush1.msra.mxu0 0.0
        %1975 = vmatprep.subr.mxu0 0.0
        %1976 = vmatpush1.msra.mxu0 0.0
        %1977 = vmatprep.subr.mxu0 0.0
        %1978 = vmatpush1.msra.mxu0 0.0
        %1979 = vmatprep.subr.mxu0 0.0
        %1980 = vmatpush1.msra.mxu0 0.0
        %1981 = vmatprep.subr.mxu0 0.0
        %1982 = vmatpush1.msra.mxu0 0.0
        %1983 = vmatprep.subr.mxu0 0.0
        %1984 = vmatpush1.msra.mxu0 0.0
        %1985 = vmatprep.mubr.f32.mxu0 0.0
        %1986 = vmatmul.mubr.f32.gmra.mrb[0].mxu0 %v1919
        %v1987 = vpop.f32.mrb[0].mxu0
        %v1988 = vadd.f32 0.0, %v1987
        %v1989 = vpop.f32.mrb[0].mxu0
        %1990 = vdwg.mxu0
        %v1991 = vadd.f32 %v1913, %v1988
        %v1992 = vld [vmem:[#allocation3 + $0x9] sm:$0xf]
        %s1993 = scalar_lea.vmem [#allocation9], 64
        %v1994 = vld [vmem:[%s1993] sm:$0xff]
        %v1995 = vld [vmem:[%s1993 + $0x8] sm:$0xff]
        %v1997 = vsel %vm309, %v1992, 0
        %1999 = vmatprep.subr.mxu0 0.0
        %2000 = vmatpush1.msra.mxu0 %v1994
        %2001 = vmatprep.subr.mxu0 0.0
        %2002 = vmatpush1.msra.mxu0 %v1995
        %2003 = vmatprep.subr.mxu0 0.0
        %2004 = vmatpush1.msra.mxu0 0.0
        %2005 = vmatprep.subr.mxu0 0.0
        %2006 = vmatpush1.msra.mxu0 0.0
        %2007 = vmatprep.subr.mxu0 0.0
        %2008 = vmatpush1.msra.mxu0 0.0
        %2009 = vmatprep.subr.mxu0 0.0
        %2010 = vmatpush1.msra.mxu0 0.0
        %2011 = vmatprep.subr.mxu0 0.0
        %2012 = vmatpush1.msra.mxu0 0.0
        %2013 = vmatprep.subr.mxu0 0.0
        %2014 = vmatpush1.msra.mxu0 0.0
        %2015 = vmatprep.subr.mxu0 0.0
        %2016 = vmatpush1.msra.mxu0 0.0
        %2017 = vmatprep.subr.mxu0 0.0
        %2018 = vmatpush1.msra.mxu0 0.0
        %2019 = vmatprep.subr.mxu0 0.0
        %2020 = vmatpush1.msra.mxu0 0.0
        %2021 = vmatprep.subr.mxu0 0.0
        %2022 = vmatpush1.msra.mxu0 0.0
        %2023 = vmatprep.subr.mxu0 0.0
        %2024 = vmatpush1.msra.mxu0 0.0
        %2025 = vmatprep.subr.mxu0 0.0
        %2026 = vmatpush1.msra.mxu0 0.0
        %2027 = vmatprep.subr.mxu0 0.0
        %2028 = vmatpush1.msra.mxu0 0.0
        %2029 = vmatprep.subr.mxu0 0.0
        %2030 = vmatpush1.msra.mxu0 0.0
        %2031 = vmatprep.subr.mxu0 0.0
        %2032 = vmatpush1.msra.mxu0 0.0
        %2033 = vmatprep.subr.mxu0 0.0
        %2034 = vmatpush1.msra.mxu0 0.0
        %2035 = vmatprep.subr.mxu0 0.0
        %2036 = vmatpush1.msra.mxu0 0.0
        %2037 = vmatprep.subr.mxu0 0.0
        %2038 = vmatpush1.msra.mxu0 0.0
        %2039 = vmatprep.subr.mxu0 0.0
        %2040 = vmatpush1.msra.mxu0 0.0
        %2041 = vmatprep.subr.mxu0 0.0
        %2042 = vmatpush1.msra.mxu0 0.0
        %2043 = vmatprep.subr.mxu0 0.0
        %2044 = vmatpush1.msra.mxu0 0.0
        %2045 = vmatprep.subr.mxu0 0.0
        %2046 = vmatpush1.msra.mxu0 0.0
        %2047 = vmatprep.subr.mxu0 0.0
        %2048 = vmatpush1.msra.mxu0 0.0
        %2049 = vmatprep.subr.mxu0 0.0
        %2050 = vmatpush1.msra.mxu0 0.0
        %2051 = vmatprep.subr.mxu0 0.0
        %2052 = vmatpush1.msra.mxu0 0.0
        %2053 = vmatprep.subr.mxu0 0.0
        %2054 = vmatpush1.msra.mxu0 0.0
        %2055 = vmatprep.subr.mxu0 0.0
        %2056 = vmatpush1.msra.mxu0 0.0
        %2057 = vmatprep.subr.mxu0 0.0
        %2058 = vmatpush1.msra.mxu0 0.0
        %2059 = vmatprep.subr.mxu0 0.0
        %2060 = vmatpush1.msra.mxu0 0.0
        %2061 = vmatprep.subr.mxu0 0.0
        %2062 = vmatpush1.msra.mxu0 0.0
        %2063 = vmatprep.mubr.f32.mxu0 0.0
        %2064 = vmatmul.mubr.f32.gmra.mrb[0].mxu0 %v1997
        %v2065 = vpop.f32.mrb[0].mxu0
        %v2066 = vadd.f32 0.0, %v2065
        %v2067 = vpop.f32.mrb[0].mxu0
        %2068 = vdwg.mxu0
        %v2069 = vadd.f32 %v1991, %v2066
        %v2070 = vld [vmem:[#allocation3 + $0xa] sm:$0xf]
        %s2071 = scalar_lea.vmem [#allocation9], 80
        %v2072 = vld [vmem:[%s2071] sm:$0xff]
        %v2073 = vld [vmem:[%s2071 + $0x8] sm:$0xff]
        %v2075 = vsel %vm309, %v2070, 0
        %2077 = vmatprep.subr.mxu0 0.0
        %2078 = vmatpush1.msra.mxu0 %v2072
        %2079 = vmatprep.subr.mxu0 0.0
        %2080 = vmatpush1.msra.mxu0 %v2073
        %2081 = vmatprep.subr.mxu0 0.0
        %2082 = vmatpush1.msra.mxu0 0.0
        %2083 = vmatprep.subr.mxu0 0.0
        %2084 = vmatpush1.msra.mxu0 0.0
        %2085 = vmatprep.subr.mxu0 0.0
        %2086 = vmatpush1.msra.mxu0 0.0
        %2087 = vmatprep.subr.mxu0 0.0
        %2088 = vmatpush1.msra.mxu0 0.0
        %2089 = vmatprep.subr.mxu0 0.0
        %2090 = vmatpush1.msra.mxu0 0.0
        %2091 = vmatprep.subr.mxu0 0.0
        %2092 = vmatpush1.msra.mxu0 0.0
        %2093 = vmatprep.subr.mxu0 0.0
        %2094 = vmatpush1.msra.mxu0 0.0
        %2095 = vmatprep.subr.mxu0 0.0
        %2096 = vmatpush1.msra.mxu0 0.0
        %2097 = vmatprep.subr.mxu0 0.0
        %2098 = vmatpush1.msra.mxu0 0.0
        %2099 = vmatprep.subr.mxu0 0.0
        %2100 = vmatpush1.msra.mxu0 0.0
        %2101 = vmatprep.subr.mxu0 0.0
        %2102 = vmatpush1.msra.mxu0 0.0
        %2103 = vmatprep.subr.mxu0 0.0
        %2104 = vmatpush1.msra.mxu0 0.0
        %2105 = vmatprep.subr.mxu0 0.0
        %2106 = vmatpush1.msra.mxu0 0.0
        %2107 = vmatprep.subr.mxu0 0.0
        %2108 = vmatpush1.msra.mxu0 0.0
        %2109 = vmatprep.subr.mxu0 0.0
        %2110 = vmatpush1.msra.mxu0 0.0
        %2111 = vmatprep.subr.mxu0 0.0
        %2112 = vmatpush1.msra.mxu0 0.0
        %2113 = vmatprep.subr.mxu0 0.0
        %2114 = vmatpush1.msra.mxu0 0.0
        %2115 = vmatprep.subr.mxu0 0.0
        %2116 = vmatpush1.msra.mxu0 0.0
        %2117 = vmatprep.subr.mxu0 0.0
        %2118 = vmatpush1.msra.mxu0 0.0
        %2119 = vmatprep.subr.mxu0 0.0
        %2120 = vmatpush1.msra.mxu0 0.0
        %2121 = vmatprep.subr.mxu0 0.0
        %2122 = vmatpush1.msra.mxu0 0.0
        %2123 = vmatprep.subr.mxu0 0.0
        %2124 = vmatpush1.msra.mxu0 0.0
        %2125 = vmatprep.subr.mxu0 0.0
        %2126 = vmatpush1.msra.mxu0 0.0
        %2127 = vmatprep.subr.mxu0 0.0
        %2128 = vmatpush1.msra.mxu0 0.0
        %2129 = vmatprep.subr.mxu0 0.0
        %2130 = vmatpush1.msra.mxu0 0.0
        %2131 = vmatprep.subr.mxu0 0.0
        %2132 = vmatpush1.msra.mxu0 0.0
        %2133 = vmatprep.subr.mxu0 0.0
        %2134 = vmatpush1.msra.mxu0 0.0
        %2135 = vmatprep.subr.mxu0 0.0
        %2136 = vmatpush1.msra.mxu0 0.0
        %2137 = vmatprep.subr.mxu0 0.0
        %2138 = vmatpush1.msra.mxu0 0.0
        %2139 = vmatprep.subr.mxu0 0.0
        %2140 = vmatpush1.msra.mxu0 0.0
        %2141 = vmatprep.mubr.f32.mxu0 0.0
        %2142 = vmatmul.mubr.f32.gmra.mrb[0].mxu0 %v2075
        %v2143 = vpop.f32.mrb[0].mxu0
        %v2144 = vadd.f32 0.0, %v2143
        %v2145 = vpop.f32.mrb[0].mxu0
        %2146 = vdwg.mxu0
        %v2147 = vadd.f32 %v2069, %v2144
        %v2148 = vld [vmem:[#allocation3 + $0xb] sm:$0xf]
        %s2149 = scalar_lea.vmem [#allocation9], 96
        %v2150 = vld [vmem:[%s2149] sm:$0xff]
        %v2151 = vld [vmem:[%s2149 + $0x8] sm:$0xff]
        %v2153 = vsel %vm309, %v2148, 0
        %2155 = vmatprep.subr.mxu0 0.0
        %2156 = vmatpush1.msra.mxu0 %v2150
        %2157 = vmatprep.subr.mxu0 0.0
        %2158 = vmatpush1.msra.mxu0 %v2151
        %2159 = vmatprep.subr.mxu0 0.0
        %2160 = vmatpush1.msra.mxu0 0.0
        %2161 = vmatprep.subr.mxu0 0.0
        %2162 = vmatpush1.msra.mxu0 0.0
        %2163 = vmatprep.subr.mxu0 0.0
        %2164 = vmatpush1.msra.mxu0 0.0
        %2165 = vmatprep.subr.mxu0 0.0
        %2166 = vmatpush1.msra.mxu0 0.0
        %2167 = vmatprep.subr.mxu0 0.0
        %2168 = vmatpush1.msra.mxu0 0.0
        %2169 = vmatprep.subr.mxu0 0.0
        %2170 = vmatpush1.msra.mxu0 0.0
        %2171 = vmatprep.subr.mxu0 0.0
        %2172 = vmatpush1.msra.mxu0 0.0
        %2173 = vmatprep.subr.mxu0 0.0
        %2174 = vmatpush1.msra.mxu0 0.0
        %2175 = vmatprep.subr.mxu0 0.0
        %2176 = vmatpush1.msra.mxu0 0.0
        %2177 = vmatprep.subr.mxu0 0.0
        %2178 = vmatpush1.msra.mxu0 0.0
        %2179 = vmatprep.subr.mxu0 0.0
        %2180 = vmatpush1.msra.mxu0 0.0
        %2181 = vmatprep.subr.mxu0 0.0
        %2182 = vmatpush1.msra.mxu0 0.0
        %2183 = vmatprep.subr.mxu0 0.0
        %2184 = vmatpush1.msra.mxu0 0.0
        %2185 = vmatprep.subr.mxu0 0.0
        %2186 = vmatpush1.msra.mxu0 0.0
        %2187 = vmatprep.subr.mxu0 0.0
        %2188 = vmatpush1.msra.mxu0 0.0
        %2189 = vmatprep.subr.mxu0 0.0
        %2190 = vmatpush1.msra.mxu0 0.0
        %2191 = vmatprep.subr.mxu0 0.0
        %2192 = vmatpush1.msra.mxu0 0.0
        %2193 = vmatprep.subr.mxu0 0.0
        %2194 = vmatpush1.msra.mxu0 0.0
        %2195 = vmatprep.subr.mxu0 0.0
        %2196 = vmatpush1.msra.mxu0 0.0
        %2197 = vmatprep.subr.mxu0 0.0
        %2198 = vmatpush1.msra.mxu0 0.0
        %2199 = vmatprep.subr.mxu0 0.0
        %2200 = vmatpush1.msra.mxu0 0.0
        %2201 = vmatprep.subr.mxu0 0.0
        %2202 = vmatpush1.msra.mxu0 0.0
        %2203 = vmatprep.subr.mxu0 0.0
        %2204 = vmatpush1.msra.mxu0 0.0
        %2205 = vmatprep.subr.mxu0 0.0
        %2206 = vmatpush1.msra.mxu0 0.0
        %2207 = vmatprep.subr.mxu0 0.0
        %2208 = vmatpush1.msra.mxu0 0.0
        %2209 = vmatprep.subr.mxu0 0.0
        %2210 = vmatpush1.msra.mxu0 0.0
        %2211 = vmatprep.subr.mxu0 0.0
        %2212 = vmatpush1.msra.mxu0 0.0
        %2213 = vmatprep.subr.mxu0 0.0
        %2214 = vmatpush1.msra.mxu0 0.0
        %2215 = vmatprep.subr.mxu0 0.0
        %2216 = vmatpush1.msra.mxu0 0.0
        %2217 = vmatprep.subr.mxu0 0.0
        %2218 = vmatpush1.msra.mxu0 0.0
        %2219 = vmatprep.mubr.f32.mxu0 0.0
        %2220 = vmatmul.mubr.f32.gmra.mrb[0].mxu0 %v2153
        %v2221 = vpop.f32.mrb[0].mxu0
        %v2222 = vadd.f32 0.0, %v2221
        %v2223 = vpop.f32.mrb[0].mxu0
        %2224 = vdwg.mxu0
        %v2225 = vadd.f32 %v2147, %v2222
        %s2226 = scalar_lea.vmem [#allocation3], 16
        %v2227 = vld [vmem:[%s2226 + $0x5] sm:$0xf]
        %s2228 = scalar_lea.vmem [#allocation9], 112
        %v2229 = vld [vmem:[%s2228] sm:$0xff]
        %v2230 = vld [vmem:[%s2228 + $0x8] sm:$0xff]
        %v2232 = vsel %vm309, %v2227, 0
        %2234 = vmatprep.subr.mxu0 0.0
        %2235 = vmatpush1.msra.mxu0 %v2229
        %2236 = vmatprep.subr.mxu0 0.0
        %2237 = vmatpush1.msra.mxu0 %v2230
        %2238 = vmatprep.subr.mxu0 0.0
        %2239 = vmatpush1.msra.mxu0 0.0
        %2240 = vmatprep.subr.mxu0 0.0
        %2241 = vmatpush1.msra.mxu0 0.0
        %2242 = vmatprep.subr.mxu0 0.0
        %2243 = vmatpush1.msra.mxu0 0.0
        %2244 = vmatprep.subr.mxu0 0.0
        %2245 = vmatpush1.msra.mxu0 0.0
        %2246 = vmatprep.subr.mxu0 0.0
        %2247 = vmatpush1.msra.mxu0 0.0
        %2248 = vmatprep.subr.mxu0 0.0
        %2249 = vmatpush1.msra.mxu0 0.0
        %2250 = vmatprep.subr.mxu0 0.0
        %2251 = vmatpush1.msra.mxu0 0.0
        %2252 = vmatprep.subr.mxu0 0.0
        %2253 = vmatpush1.msra.mxu0 0.0
        %2254 = vmatprep.subr.mxu0 0.0
        %2255 = vmatpush1.msra.mxu0 0.0
        %2256 = vmatprep.subr.mxu0 0.0
        %2257 = vmatpush1.msra.mxu0 0.0
        %2258 = vmatprep.subr.mxu0 0.0
        %2259 = vmatpush1.msra.mxu0 0.0
        %2260 = vmatprep.subr.mxu0 0.0
        %2261 = vmatpush1.msra.mxu0 0.0
        %2262 = vmatprep.subr.mxu0 0.0
        %2263 = vmatpush1.msra.mxu0 0.0
        %2264 = vmatprep.subr.mxu0 0.0
        %2265 = vmatpush1.msra.mxu0 0.0
        %2266 = vmatprep.subr.mxu0 0.0
        %2267 = vmatpush1.msra.mxu0 0.0
        %2268 = vmatprep.subr.mxu0 0.0
        %2269 = vmatpush1.msra.mxu0 0.0
        %2270 = vmatprep.subr.mxu0 0.0
        %2271 = vmatpush1.msra.mxu0 0.0
        %2272 = vmatprep.subr.mxu0 0.0
        %2273 = vmatpush1.msra.mxu0 0.0
        %2274 = vmatprep.subr.mxu0 0.0
        %2275 = vmatpush1.msra.mxu0 0.0
        %2276 = vmatprep.subr.mxu0 0.0
        %2277 = vmatpush1.msra.mxu0 0.0
        %2278 = vmatprep.subr.mxu0 0.0
        %2279 = vmatpush1.msra.mxu0 0.0
        %2280 = vmatprep.subr.mxu0 0.0
        %2281 = vmatpush1.msra.mxu0 0.0
        %2282 = vmatprep.subr.mxu0 0.0
        %2283 = vmatpush1.msra.mxu0 0.0
        %2284 = vmatprep.subr.mxu0 0.0
        %2285 = vmatpush1.msra.mxu0 0.0
        %2286 = vmatprep.subr.mxu0 0.0
        %2287 = vmatpush1.msra.mxu0 0.0
        %2288 = vmatprep.subr.mxu0 0.0
        %2289 = vmatpush1.msra.mxu0 0.0
        %2290 = vmatprep.subr.mxu0 0.0
        %2291 = vmatpush1.msra.mxu0 0.0
        %2292 = vmatprep.subr.mxu0 0.0
        %2293 = vmatpush1.msra.mxu0 0.0
        %2294 = vmatprep.subr.mxu0 0.0
        %2295 = vmatpush1.msra.mxu0 0.0
        %2296 = vmatprep.subr.mxu0 0.0
        %2297 = vmatpush1.msra.mxu0 0.0
        %2298 = vmatprep.mubr.f32.mxu0 0.0
        %2299 = vmatmul.mubr.f32.gmra.mrb[0].mxu0 %v2232
        %v2300 = vpop.f32.mrb[0].mxu0
        %v2301 = vadd.f32 0.0, %v2300
        %v2302 = vpop.f32.mrb[0].mxu0
        %2303 = vdwg.mxu0
        %v2304 = vadd.f32 %v2225, %v2301
        %v2305 = vld [vmem:[%s2226 + $0x6] sm:$0xf]
        %s2306 = scalar_lea.vmem [#allocation9], 128
        %v2307 = vld [vmem:[%s2306] sm:$0xff]
        %v2308 = vld [vmem:[%s2306 + $0x8] sm:$0xff]
        %v2310 = vsel %vm309, %v2305, 0
        %2312 = vmatprep.subr.mxu0 0.0
        %2313 = vmatpush1.msra.mxu0 %v2307
        %2314 = vmatprep.subr.mxu0 0.0
        %2315 = vmatpush1.msra.mxu0 %v2308
        %2316 = vmatprep.subr.mxu0 0.0
        %2317 = vmatpush1.msra.mxu0 0.0
        %2318 = vmatprep.subr.mxu0 0.0
        %2319 = vmatpush1.msra.mxu0 0.0
        %2320 = vmatprep.subr.mxu0 0.0
        %2321 = vmatpush1.msra.mxu0 0.0
        %2322 = vmatprep.subr.mxu0 0.0
        %2323 = vmatpush1.msra.mxu0 0.0
        %2324 = vmatprep.subr.mxu0 0.0
        %2325 = vmatpush1.msra.mxu0 0.0
        %2326 = vmatprep.subr.mxu0 0.0
        %2327 = vmatpush1.msra.mxu0 0.0
        %2328 = vmatprep.subr.mxu0 0.0
        %2329 = vmatpush1.msra.mxu0 0.0
        %2330 = vmatprep.subr.mxu0 0.0
        %2331 = vmatpush1.msra.mxu0 0.0
        %2332 = vmatprep.subr.mxu0 0.0
        %2333 = vmatpush1.msra.mxu0 0.0
        %2334 = vmatprep.subr.mxu0 0.0
        %2335 = vmatpush1.msra.mxu0 0.0
        %2336 = vmatprep.subr.mxu0 0.0
        %2337 = vmatpush1.msra.mxu0 0.0
        %2338 = vmatprep.subr.mxu0 0.0
        %2339 = vmatpush1.msra.mxu0 0.0
        %2340 = vmatprep.subr.mxu0 0.0
        %2341 = vmatpush1.msra.mxu0 0.0
        %2342 = vmatprep.subr.mxu0 0.0
        %2343 = vmatpush1.msra.mxu0 0.0
        %2344 = vmatprep.subr.mxu0 0.0
        %2345 = vmatpush1.msra.mxu0 0.0
        %2346 = vmatprep.subr.mxu0 0.0
        %2347 = vmatpush1.msra.mxu0 0.0
        %2348 = vmatprep.subr.mxu0 0.0
        %2349 = vmatpush1.msra.mxu0 0.0
        %2350 = vmatprep.subr.mxu0 0.0
        %2351 = vmatpush1.msra.mxu0 0.0
        %2352 = vmatprep.subr.mxu0 0.0
        %2353 = vmatpush1.msra.mxu0 0.0
        %2354 = vmatprep.subr.mxu0 0.0
        %2355 = vmatpush1.msra.mxu0 0.0
        %2356 = vmatprep.subr.mxu0 0.0
        %2357 = vmatpush1.msra.mxu0 0.0
        %2358 = vmatprep.subr.mxu0 0.0
        %2359 = vmatpush1.msra.mxu0 0.0
        %2360 = vmatprep.subr.mxu0 0.0
        %2361 = vmatpush1.msra.mxu0 0.0
        %2362 = vmatprep.subr.mxu0 0.0
        %2363 = vmatpush1.msra.mxu0 0.0
        %2364 = vmatprep.subr.mxu0 0.0
        %2365 = vmatpush1.msra.mxu0 0.0
        %2366 = vmatprep.subr.mxu0 0.0
        %2367 = vmatpush1.msra.mxu0 0.0
        %2368 = vmatprep.subr.mxu0 0.0
        %2369 = vmatpush1.msra.mxu0 0.0
        %2370 = vmatprep.subr.mxu0 0.0
        %2371 = vmatpush1.msra.mxu0 0.0
        %2372 = vmatprep.subr.mxu0 0.0
        %2373 = vmatpush1.msra.mxu0 0.0
        %2374 = vmatprep.subr.mxu0 0.0
        %2375 = vmatpush1.msra.mxu0 0.0
        %2376 = vmatprep.mubr.f32.mxu0 0.0
        %2377 = vmatmul.mubr.f32.gmra.mrb[0].mxu0 %v2310
        %v2378 = vpop.f32.mrb[0].mxu0
        %v2379 = vadd.f32 0.0, %v2378
        %v2380 = vpop.f32.mrb[0].mxu0
        %2381 = vdwg.mxu0
        %v2382 = vadd.f32 %v2304, %v2379
        %v2383 = vld [vmem:[%s2226 + $0x7] sm:$0xf]
        %s2384 = scalar_lea.vmem [#allocation9], 144
        %v2385 = vld [vmem:[%s2384] sm:$0xff]
        %v2386 = vld [vmem:[%s2384 + $0x8] sm:$0xff]
        %v2388 = vsel %vm309, %v2383, 0
        %2390 = vmatprep.subr.mxu0 0.0
        %2391 = vmatpush1.msra.mxu0 %v2385
        %2392 = vmatprep.subr.mxu0 0.0
        %2393 = vmatpush1.msra.mxu0 %v2386
        %2394 = vmatprep.subr.mxu0 0.0
        %2395 = vmatpush1.msra.mxu0 0.0
        %2396 = vmatprep.subr.mxu0 0.0
        %2397 = vmatpush1.msra.mxu0 0.0
        %2398 = vmatprep.subr.mxu0 0.0
        %2399 = vmatpush1.msra.mxu0 0.0
        %2400 = vmatprep.subr.mxu0 0.0
        %2401 = vmatpush1.msra.mxu0 0.0
        %2402 = vmatprep.subr.mxu0 0.0
        %2403 = vmatpush1.msra.mxu0 0.0
        %2404 = vmatprep.subr.mxu0 0.0
        %2405 = vmatpush1.msra.mxu0 0.0
        %2406 = vmatprep.subr.mxu0 0.0
        %2407 = vmatpush1.msra.mxu0 0.0
        %2408 = vmatprep.subr.mxu0 0.0
        %2409 = vmatpush1.msra.mxu0 0.0
        %2410 = vmatprep.subr.mxu0 0.0
        %2411 = vmatpush1.msra.mxu0 0.0
        %2412 = vmatprep.subr.mxu0 0.0
        %2413 = vmatpush1.msra.mxu0 0.0
        %2414 = vmatprep.subr.mxu0 0.0
        %2415 = vmatpush1.msra.mxu0 0.0
        %2416 = vmatprep.subr.mxu0 0.0
        %2417 = vmatpush1.msra.mxu0 0.0
        %2418 = vmatprep.subr.mxu0 0.0
        %2419 = vmatpush1.msra.mxu0 0.0
        %2420 = vmatprep.subr.mxu0 0.0
        %2421 = vmatpush1.msra.mxu0 0.0
        %2422 = vmatprep.subr.mxu0 0.0
        %2423 = vmatpush1.msra.mxu0 0.0
        %2424 = vmatprep.subr.mxu0 0.0
        %2425 = vmatpush1.msra.mxu0 0.0
        %2426 = vmatprep.subr.mxu0 0.0
        %2427 = vmatpush1.msra.mxu0 0.0
        %2428 = vmatprep.subr.mxu0 0.0
        %2429 = vmatpush1.msra.mxu0 0.0
        %2430 = vmatprep.subr.mxu0 0.0
        %2431 = vmatpush1.msra.mxu0 0.0
        %2432 = vmatprep.subr.mxu0 0.0
        %2433 = vmatpush1.msra.mxu0 0.0
        %2434 = vmatprep.subr.mxu0 0.0
        %2435 = vmatpush1.msra.mxu0 0.0
        %2436 = vmatprep.subr.mxu0 0.0
        %2437 = vmatpush1.msra.mxu0 0.0
        %2438 = vmatprep.subr.mxu0 0.0
        %2439 = vmatpush1.msra.mxu0 0.0
        %2440 = vmatprep.subr.mxu0 0.0
        %2441 = vmatpush1.msra.mxu0 0.0
        %2442 = vmatprep.subr.mxu0 0.0
        %2443 = vmatpush1.msra.mxu0 0.0
        %2444 = vmatprep.subr.mxu0 0.0
        %2445 = vmatpush1.msra.mxu0 0.0
        %2446 = vmatprep.subr.mxu0 0.0
        %2447 = vmatpush1.msra.mxu0 0.0
        %2448 = vmatprep.subr.mxu0 0.0
        %2449 = vmatpush1.msra.mxu0 0.0
        %2450 = vmatprep.subr.mxu0 0.0
        %2451 = vmatpush1.msra.mxu0 0.0
        %2452 = vmatprep.subr.mxu0 0.0
        %2453 = vmatpush1.msra.mxu0 0.0
        %2454 = vmatprep.mubr.f32.mxu0 0.0
        %2455 = vmatmul.mubr.f32.gmra.mrb[0].mxu0 %v2388
        %v2456 = vpop.f32.mrb[0].mxu0
        %v2457 = vadd.f32 0.0, %v2456
        %v2458 = vpop.f32.mrb[0].mxu0
        %2459 = vdwg.mxu0
        %v2460 = vadd.f32 %v2382, %v2457
        %v2461 = vld [vmem:[%s2226 + $0x8] sm:$0xf]
        %s2462 = scalar_lea.vmem [#allocation9], 160
        %v2463 = vld [vmem:[%s2462] sm:$0xff]
        %v2464 = vld [vmem:[%s2462 + $0x8] sm:$0xff]
        %v2466 = vsel %vm309, %v2461, 0
        %2468 = vmatprep.subr.mxu0 0.0
        %2469 = vmatpush1.msra.mxu0 %v2463
        %2470 = vmatprep.subr.mxu0 0.0
        %2471 = vmatpush1.msra.mxu0 %v2464
        %2472 = vmatprep.subr.mxu0 0.0
        %2473 = vmatpush1.msra.mxu0 0.0
        %2474 = vmatprep.subr.mxu0 0.0
        %2475 = vmatpush1.msra.mxu0 0.0
        %2476 = vmatprep.subr.mxu0 0.0
        %2477 = vmatpush1.msra.mxu0 0.0
        %2478 = vmatprep.subr.mxu0 0.0
        %2479 = vmatpush1.msra.mxu0 0.0
        %2480 = vmatprep.subr.mxu0 0.0
        %2481 = vmatpush1.msra.mxu0 0.0
        %2482 = vmatprep.subr.mxu0 0.0
        %2483 = vmatpush1.msra.mxu0 0.0
        %2484 = vmatprep.subr.mxu0 0.0
        %2485 = vmatpush1.msra.mxu0 0.0
        %2486 = vmatprep.subr.mxu0 0.0
        %2487 = vmatpush1.msra.mxu0 0.0
        %2488 = vmatprep.subr.mxu0 0.0
        %2489 = vmatpush1.msra.mxu0 0.0
        %2490 = vmatprep.subr.mxu0 0.0
        %2491 = vmatpush1.msra.mxu0 0.0
        %2492 = vmatprep.subr.mxu0 0.0
        %2493 = vmatpush1.msra.mxu0 0.0
        %2494 = vmatprep.subr.mxu0 0.0
        %2495 = vmatpush1.msra.mxu0 0.0
        %2496 = vmatprep.subr.mxu0 0.0
        %2497 = vmatpush1.msra.mxu0 0.0
        %2498 = vmatprep.subr.mxu0 0.0
        %2499 = vmatpush1.msra.mxu0 0.0
        %2500 = vmatprep.subr.mxu0 0.0
        %2501 = vmatpush1.msra.mxu0 0.0
        %2502 = vmatprep.subr.mxu0 0.0
        %2503 = vmatpush1.msra.mxu0 0.0
        %2504 = vmatprep.subr.mxu0 0.0
        %2505 = vmatpush1.msra.mxu0 0.0
        %2506 = vmatprep.subr.mxu0 0.0
        %2507 = vmatpush1.msra.mxu0 0.0
        %2508 = vmatprep.subr.mxu0 0.0
        %2509 = vmatpush1.msra.mxu0 0.0
        %2510 = vmatprep.subr.mxu0 0.0
        %2511 = vmatpush1.msra.mxu0 0.0
        %2512 = vmatprep.subr.mxu0 0.0
        %2513 = vmatpush1.msra.mxu0 0.0
        %2514 = vmatprep.subr.mxu0 0.0
        %2515 = vmatpush1.msra.mxu0 0.0
        %2516 = vmatprep.subr.mxu0 0.0
        %2517 = vmatpush1.msra.mxu0 0.0
        %2518 = vmatprep.subr.mxu0 0.0
        %2519 = vmatpush1.msra.mxu0 0.0
        %2520 = vmatprep.subr.mxu0 0.0
        %2521 = vmatpush1.msra.mxu0 0.0
        %2522 = vmatprep.subr.mxu0 0.0
        %2523 = vmatpush1.msra.mxu0 0.0
        %2524 = vmatprep.subr.mxu0 0.0
        %2525 = vmatpush1.msra.mxu0 0.0
        %2526 = vmatprep.subr.mxu0 0.0
        %2527 = vmatpush1.msra.mxu0 0.0
        %2528 = vmatprep.subr.mxu0 0.0
        %2529 = vmatpush1.msra.mxu0 0.0
        %2530 = vmatprep.subr.mxu0 0.0
        %2531 = vmatpush1.msra.mxu0 0.0
        %2532 = vmatprep.mubr.f32.mxu0 0.0
        %2533 = vmatmul.mubr.f32.gmra.mrb[0].mxu0 %v2466
        %v2534 = vpop.f32.mrb[0].mxu0
        %v2535 = vadd.f32 0.0, %v2534
        %v2536 = vpop.f32.mrb[0].mxu0
        %2537 = vdwg.mxu0
        %v2538 = vadd.f32 %v2460, %v2535
        %v2539 = vld [vmem:[%s2226 + $0x9] sm:$0xf]
        %s2540 = scalar_lea.vmem [#allocation9], 176
        %v2541 = vld [vmem:[%s2540] sm:$0xff]
        %v2542 = vld [vmem:[%s2540 + $0x8] sm:$0xff]
        %v2544 = vsel %vm309, %v2539, 0
        %2546 = vmatprep.subr.mxu0 0.0
        %2547 = vmatpush1.msra.mxu0 %v2541
        %2548 = vmatprep.subr.mxu0 0.0
        %2549 = vmatpush1.msra.mxu0 %v2542
        %2550 = vmatprep.subr.mxu0 0.0
        %2551 = vmatpush1.msra.mxu0 0.0
        %2552 = vmatprep.subr.mxu0 0.0
        %2553 = vmatpush1.msra.mxu0 0.0
        %2554 = vmatprep.subr.mxu0 0.0
        %2555 = vmatpush1.msra.mxu0 0.0
        %2556 = vmatprep.subr.mxu0 0.0
        %2557 = vmatpush1.msra.mxu0 0.0
        %2558 = vmatprep.subr.mxu0 0.0
        %2559 = vmatpush1.msra.mxu0 0.0
        %2560 = vmatprep.subr.mxu0 0.0
        %2561 = vmatpush1.msra.mxu0 0.0
        %2562 = vmatprep.subr.mxu0 0.0
        %2563 = vmatpush1.msra.mxu0 0.0
        %2564 = vmatprep.subr.mxu0 0.0
        %2565 = vmatpush1.msra.mxu0 0.0
        %2566 = vmatprep.subr.mxu0 0.0
        %2567 = vmatpush1.msra.mxu0 0.0
        %2568 = vmatprep.subr.mxu0 0.0
        %2569 = vmatpush1.msra.mxu0 0.0
        %2570 = vmatprep.subr.mxu0 0.0
        %2571 = vmatpush1.msra.mxu0 0.0
        %2572 = vmatprep.subr.mxu0 0.0
        %2573 = vmatpush1.msra.mxu0 0.0
        %2574 = vmatprep.subr.mxu0 0.0
        %2575 = vmatpush1.msra.mxu0 0.0
        %2576 = vmatprep.subr.mxu0 0.0
        %2577 = vmatpush1.msra.mxu0 0.0
        %2578 = vmatprep.subr.mxu0 0.0
        %2579 = vmatpush1.msra.mxu0 0.0
        %2580 = vmatprep.subr.mxu0 0.0
        %2581 = vmatpush1.msra.mxu0 0.0
        %2582 = vmatprep.subr.mxu0 0.0
        %2583 = vmatpush1.msra.mxu0 0.0
        %2584 = vmatprep.subr.mxu0 0.0
        %2585 = vmatpush1.msra.mxu0 0.0
        %2586 = vmatprep.subr.mxu0 0.0
        %2587 = vmatpush1.msra.mxu0 0.0
        %2588 = vmatprep.subr.mxu0 0.0
        %2589 = vmatpush1.msra.mxu0 0.0
        %2590 = vmatprep.subr.mxu0 0.0
        %2591 = vmatpush1.msra.mxu0 0.0
        %2592 = vmatprep.subr.mxu0 0.0
        %2593 = vmatpush1.msra.mxu0 0.0
        %2594 = vmatprep.subr.mxu0 0.0
        %2595 = vmatpush1.msra.mxu0 0.0
        %2596 = vmatprep.subr.mxu0 0.0
        %2597 = vmatpush1.msra.mxu0 0.0
        %2598 = vmatprep.subr.mxu0 0.0
        %2599 = vmatpush1.msra.mxu0 0.0
        %2600 = vmatprep.subr.mxu0 0.0
        %2601 = vmatpush1.msra.mxu0 0.0
        %2602 = vmatprep.subr.mxu0 0.0
        %2603 = vmatpush1.msra.mxu0 0.0
        %2604 = vmatprep.subr.mxu0 0.0
        %2605 = vmatpush1.msra.mxu0 0.0
        %2606 = vmatprep.subr.mxu0 0.0
        %2607 = vmatpush1.msra.mxu0 0.0
        %2608 = vmatprep.subr.mxu0 0.0
        %2609 = vmatpush1.msra.mxu0 0.0
        %2610 = vmatprep.mubr.f32.mxu0 0.0
        %2611 = vmatmul.mubr.f32.gmra.mrb[0].mxu0 %v2544
        %v2612 = vpop.f32.mrb[0].mxu0
        %v2613 = vadd.f32 0.0, %v2612
        %v2614 = vpop.f32.mrb[0].mxu0
        %2615 = vdwg.mxu0
        %v2616 = vadd.f32 %v2538, %v2613
        %v2617 = vld [vmem:[%s2226 + $0xa] sm:$0xf]
        %s2618 = scalar_lea.vmem [#allocation9], 192
        %v2619 = vld [vmem:[%s2618] sm:$0xff]
        %v2620 = vld [vmem:[%s2618 + $0x8] sm:$0xff]
        %v2622 = vsel %vm309, %v2617, 0
        %2624 = vmatprep.subr.mxu0 0.0
        %2625 = vmatpush1.msra.mxu0 %v2619
        %2626 = vmatprep.subr.mxu0 0.0
        %2627 = vmatpush1.msra.mxu0 %v2620
        %2628 = vmatprep.subr.mxu0 0.0
        %2629 = vmatpush1.msra.mxu0 0.0
        %2630 = vmatprep.subr.mxu0 0.0
        %2631 = vmatpush1.msra.mxu0 0.0
        %2632 = vmatprep.subr.mxu0 0.0
        %2633 = vmatpush1.msra.mxu0 0.0
        %2634 = vmatprep.subr.mxu0 0.0
        %2635 = vmatpush1.msra.mxu0 0.0
        %2636 = vmatprep.subr.mxu0 0.0
        %2637 = vmatpush1.msra.mxu0 0.0
        %2638 = vmatprep.subr.mxu0 0.0
        %2639 = vmatpush1.msra.mxu0 0.0
        %2640 = vmatprep.subr.mxu0 0.0
        %2641 = vmatpush1.msra.mxu0 0.0
        %2642 = vmatprep.subr.mxu0 0.0
        %2643 = vmatpush1.msra.mxu0 0.0
        %2644 = vmatprep.subr.mxu0 0.0
        %2645 = vmatpush1.msra.mxu0 0.0
        %2646 = vmatprep.subr.mxu0 0.0
        %2647 = vmatpush1.msra.mxu0 0.0
        %2648 = vmatprep.subr.mxu0 0.0
        %2649 = vmatpush1.msra.mxu0 0.0
        %2650 = vmatprep.subr.mxu0 0.0
        %2651 = vmatpush1.msra.mxu0 0.0
        %2652 = vmatprep.subr.mxu0 0.0
        %2653 = vmatpush1.msra.mxu0 0.0
        %2654 = vmatprep.subr.mxu0 0.0
        %2655 = vmatpush1.msra.mxu0 0.0
        %2656 = vmatprep.subr.mxu0 0.0
        %2657 = vmatpush1.msra.mxu0 0.0
        %2658 = vmatprep.subr.mxu0 0.0
        %2659 = vmatpush1.msra.mxu0 0.0
        %2660 = vmatprep.subr.mxu0 0.0
        %2661 = vmatpush1.msra.mxu0 0.0
        %2662 = vmatprep.subr.mxu0 0.0
        %2663 = vmatpush1.msra.mxu0 0.0
        %2664 = vmatprep.subr.mxu0 0.0
        %2665 = vmatpush1.msra.mxu0 0.0
        %2666 = vmatprep.subr.mxu0 0.0
        %2667 = vmatpush1.msra.mxu0 0.0
        %2668 = vmatprep.subr.mxu0 0.0
        %2669 = vmatpush1.msra.mxu0 0.0
        %2670 = vmatprep.subr.mxu0 0.0
        %2671 = vmatpush1.msra.mxu0 0.0
        %2672 = vmatprep.subr.mxu0 0.0
        %2673 = vmatpush1.msra.mxu0 0.0
        %2674 = vmatprep.subr.mxu0 0.0
        %2675 = vmatpush1.msra.mxu0 0.0
        %2676 = vmatprep.subr.mxu0 0.0
        %2677 = vmatpush1.msra.mxu0 0.0
        %2678 = vmatprep.subr.mxu0 0.0
        %2679 = vmatpush1.msra.mxu0 0.0
        %2680 = vmatprep.subr.mxu0 0.0
        %2681 = vmatpush1.msra.mxu0 0.0
        %2682 = vmatprep.subr.mxu0 0.0
        %2683 = vmatpush1.msra.mxu0 0.0
        %2684 = vmatprep.subr.mxu0 0.0
        %2685 = vmatpush1.msra.mxu0 0.0
        %2686 = vmatprep.subr.mxu0 0.0
        %2687 = vmatpush1.msra.mxu0 0.0
        %2688 = vmatprep.mubr.f32.mxu0 0.0
        %2689 = vmatmul.mubr.f32.gmra.mrb[0].mxu0 %v2622
        %v2690 = vpop.f32.mrb[0].mxu0
        %v2691 = vadd.f32 0.0, %v2690
        %v2692 = vpop.f32.mrb[0].mxu0
        %2693 = vdwg.mxu0
        %v2694 = vadd.f32 %v2616, %v2691
        %v2695 = vld [vmem:[%s2226 + $0xb] sm:$0xf]
        %s2696 = scalar_lea.vmem [#allocation9], 208
        %v2697 = vld [vmem:[%s2696] sm:$0xff]
        %v2698 = vld [vmem:[%s2696 + $0x8] sm:$0xff]
        %v2700 = vsel %vm309, %v2695, 0
        %2702 = vmatprep.subr.mxu0 0.0
        %2703 = vmatpush1.msra.mxu0 %v2697
        %2704 = vmatprep.subr.mxu0 0.0
        %2705 = vmatpush1.msra.mxu0 %v2698
        %2706 = vmatprep.subr.mxu0 0.0
        %2707 = vmatpush1.msra.mxu0 0.0
        %2708 = vmatprep.subr.mxu0 0.0
        %2709 = vmatpush1.msra.mxu0 0.0
        %2710 = vmatprep.subr.mxu0 0.0
        %2711 = vmatpush1.msra.mxu0 0.0
        %2712 = vmatprep.subr.mxu0 0.0
        %2713 = vmatpush1.msra.mxu0 0.0
        %2714 = vmatprep.subr.mxu0 0.0
        %2715 = vmatpush1.msra.mxu0 0.0
        %2716 = vmatprep.subr.mxu0 0.0
        %2717 = vmatpush1.msra.mxu0 0.0
        %2718 = vmatprep.subr.mxu0 0.0
        %2719 = vmatpush1.msra.mxu0 0.0
        %2720 = vmatprep.subr.mxu0 0.0
        %2721 = vmatpush1.msra.mxu0 0.0
        %2722 = vmatprep.subr.mxu0 0.0
        %2723 = vmatpush1.msra.mxu0 0.0
        %2724 = vmatprep.subr.mxu0 0.0
        %2725 = vmatpush1.msra.mxu0 0.0
        %2726 = vmatprep.subr.mxu0 0.0
        %2727 = vmatpush1.msra.mxu0 0.0
        %2728 = vmatprep.subr.mxu0 0.0
        %2729 = vmatpush1.msra.mxu0 0.0
        %2730 = vmatprep.subr.mxu0 0.0
        %2731 = vmatpush1.msra.mxu0 0.0
        %2732 = vmatprep.subr.mxu0 0.0
        %2733 = vmatpush1.msra.mxu0 0.0
        %2734 = vmatprep.subr.mxu0 0.0
        %2735 = vmatpush1.msra.mxu0 0.0
        %2736 = vmatprep.subr.mxu0 0.0
        %2737 = vmatpush1.msra.mxu0 0.0
        %2738 = vmatprep.subr.mxu0 0.0
        %2739 = vmatpush1.msra.mxu0 0.0
        %2740 = vmatprep.subr.mxu0 0.0
        %2741 = vmatpush1.msra.mxu0 0.0
        %2742 = vmatprep.subr.mxu0 0.0
        %2743 = vmatpush1.msra.mxu0 0.0
        %2744 = vmatprep.subr.mxu0 0.0
        %2745 = vmatpush1.msra.mxu0 0.0
        %2746 = vmatprep.subr.mxu0 0.0
        %2747 = vmatpush1.msra.mxu0 0.0
        %2748 = vmatprep.subr.mxu0 0.0
        %2749 = vmatpush1.msra.mxu0 0.0
        %2750 = vmatprep.subr.mxu0 0.0
        %2751 = vmatpush1.msra.mxu0 0.0
        %2752 = vmatprep.subr.mxu0 0.0
        %2753 = vmatpush1.msra.mxu0 0.0
        %2754 = vmatprep.subr.mxu0 0.0
        %2755 = vmatpush1.msra.mxu0 0.0
        %2756 = vmatprep.subr.mxu0 0.0
        %2757 = vmatpush1.msra.mxu0 0.0
        %2758 = vmatprep.subr.mxu0 0.0
        %2759 = vmatpush1.msra.mxu0 0.0
        %2760 = vmatprep.subr.mxu0 0.0
        %2761 = vmatpush1.msra.mxu0 0.0
        %2762 = vmatprep.subr.mxu0 0.0
        %2763 = vmatpush1.msra.mxu0 0.0
        %2764 = vmatprep.subr.mxu0 0.0
        %2765 = vmatpush1.msra.mxu0 0.0
        %2766 = vmatprep.mubr.f32.mxu0 0.0
        %2767 = vmatmul.mubr.f32.gmra.mrb[0].mxu0 %v2700
        %v2768 = vpop.f32.mrb[0].mxu0
        %v2769 = vadd.f32 0.0, %v2768
        %v2770 = vpop.f32.mrb[0].mxu0
        %2771 = vdwg.mxu0
        %v2772 = vadd.f32 %v2694, %v2769
        %v2773 = vxor.u32 %v2772, 2147483648
        %v2774 = vmul.f32 %v2773, 1.442695
        %v2775 = vpow.pop %v2774
        %v2776 = vadd.f32 %v2775, 1.0
        %v2777 = vrcp.pop %v2776
        %v2778 = vmul.f32 1.0, %v2777
        %v2779 = vmul.f32 %v2778, 0.33333334
        %s2780 = sld [smem:[#allocation12 + $0x2]]
        %v2781 = vstv %s2780
        %v2782 = vld [vmem:[#allocation4 + $0x5] sm:$0xff]
        %v2783 = vld [vmem:[#allocation4 + $0xd] sm:$0xff]
        %v2784 = vld [vmem:[#allocation11] sm:$0xff]
        %v2785 = vld [vmem:[#allocation11 + $0x8] sm:$0xff]
        %v2787 = vsel %vm309, %v2782, 0
        %v2790 = vsel %vm309, %v2783, 0
        %2792 = vmatprep.subr.mxu0 0.0
        %2793 = vmatpush1.msra.mxu0 %v2784
        %2794 = vmatprep.subr.mxu0 0.0
        %2795 = vmatpush1.msra.mxu0 %v2785
        %2796 = vmatprep.subr.mxu0 0.0
        %2797 = vmatpush1.msra.mxu0 0.0
        %2798 = vmatprep.subr.mxu0 0.0
        %2799 = vmatpush1.msra.mxu0 0.0
        %2800 = vmatprep.subr.mxu0 0.0
        %2801 = vmatpush1.msra.mxu0 0.0
        %2802 = vmatprep.subr.mxu0 0.0
        %2803 = vmatpush1.msra.mxu0 0.0
        %2804 = vmatprep.subr.mxu0 0.0
        %2805 = vmatpush1.msra.mxu0 0.0
        %2806 = vmatprep.subr.mxu0 0.0
        %2807 = vmatpush1.msra.mxu0 0.0
        %2808 = vmatprep.subr.mxu0 0.0
        %2809 = vmatpush1.msra.mxu0 0.0
        %2810 = vmatprep.subr.mxu0 0.0
        %2811 = vmatpush1.msra.mxu0 0.0
        %2812 = vmatprep.subr.mxu0 0.0
        %2813 = vmatpush1.msra.mxu0 0.0
        %2814 = vmatprep.subr.mxu0 0.0
        %2815 = vmatpush1.msra.mxu0 0.0
        %2816 = vmatprep.subr.mxu0 0.0
        %2817 = vmatpush1.msra.mxu0 0.0
        %2818 = vmatprep.subr.mxu0 0.0
        %2819 = vmatpush1.msra.mxu0 0.0
        %2820 = vmatprep.subr.mxu0 0.0
        %2821 = vmatpush1.msra.mxu0 0.0
        %2822 = vmatprep.subr.mxu0 0.0
        %2823 = vmatpush1.msra.mxu0 0.0
        %2824 = vmatprep.subr.mxu0 0.0
        %2825 = vmatpush1.msra.mxu0 0.0
        %2826 = vmatprep.subr.mxu0 0.0
        %2827 = vmatpush1.msra.mxu0 0.0
        %2828 = vmatprep.subr.mxu0 0.0
        %2829 = vmatpush1.msra.mxu0 0.0
        %2830 = vmatprep.subr.mxu0 0.0
        %2831 = vmatpush1.msra.mxu0 0.0
        %2832 = vmatprep.subr.mxu0 0.0
        %2833 = vmatpush1.msra.mxu0 0.0
        %2834 = vmatprep.subr.mxu0 0.0
        %2835 = vmatpush1.msra.mxu0 0.0
        %2836 = vmatprep.subr.mxu0 0.0
        %2837 = vmatpush1.msra.mxu0 0.0
        %2838 = vmatprep.subr.mxu0 0.0
        %2839 = vmatpush1.msra.mxu0 0.0
        %2840 = vmatprep.subr.mxu0 0.0
        %2841 = vmatpush1.msra.mxu0 0.0
        %2842 = vmatprep.subr.mxu0 0.0
        %2843 = vmatpush1.msra.mxu0 0.0
        %2844 = vmatprep.subr.mxu0 0.0
        %2845 = vmatpush1.msra.mxu0 0.0
        %2846 = vmatprep.subr.mxu0 0.0
        %2847 = vmatpush1.msra.mxu0 0.0
        %2848 = vmatprep.subr.mxu0 0.0
        %2849 = vmatpush1.msra.mxu0 0.0
        %2850 = vmatprep.subr.mxu0 0.0
        %2851 = vmatpush1.msra.mxu0 0.0
        %2852 = vmatprep.subr.mxu0 0.0
        %2853 = vmatpush1.msra.mxu0 0.0
        %2854 = vmatprep.subr.mxu0 0.0
        %2855 = vmatpush1.msra.mxu0 0.0
        %2856 = vmatprep.mubr.f32.mxu0 0.0
        %2857 = vmatmul.mubr.f32.gmra.mrb[0].mxu0 %v2787
        %v2858 = vpop.f32.mrb[0].mxu0
        %v2859 = vadd.f32 0.0, %v2858
        %v2860 = vpop.f32.mrb[0].mxu0
        %2861 = vmatprep.mubr.f32.mxu0 0.0
        %2862 = vmatmul.mubr.f32.gmra.mrb[0].mxu0 %v2790
        %v2863 = vpop.f32.mrb[0].mxu0
        %v2864 = vadd.f32 0.0, %v2863
        %v2865 = vpop.f32.mrb[0].mxu0
        %2866 = vdwg.mxu0
        %v2867 = vadd.f32 %v2781, %v2859
        %v2868 = vadd.f32 %v2781, %v2864
        %v2869 = vld [vmem:[#allocation4 + $0x6] sm:$0xff]
        %v2870 = vld [vmem:[#allocation4 + $0xe] sm:$0xff]
        %s2871 = scalar_lea.vmem [#allocation11], 16
        %v2872 = vld [vmem:[%s2871] sm:$0xff]
        %v2873 = vld [vmem:[%s2871 + $0x8] sm:$0xff]
        %v2875 = vsel %vm309, %v2869, 0
        %v2878 = vsel %vm309, %v2870, 0
        %2880 = vmatprep.subr.mxu0 0.0
        %2881 = vmatpush1.msra.mxu0 %v2872
        %2882 = vmatprep.subr.mxu0 0.0
        %2883 = vmatpush1.msra.mxu0 %v2873
        %2884 = vmatprep.subr.mxu0 0.0
        %2885 = vmatpush1.msra.mxu0 0.0
        %2886 = vmatprep.subr.mxu0 0.0
        %2887 = vmatpush1.msra.mxu0 0.0
        %2888 = vmatprep.subr.mxu0 0.0
        %2889 = vmatpush1.msra.mxu0 0.0
        %2890 = vmatprep.subr.mxu0 0.0
        %2891 = vmatpush1.msra.mxu0 0.0
        %2892 = vmatprep.subr.mxu0 0.0
        %2893 = vmatpush1.msra.mxu0 0.0
        %2894 = vmatprep.subr.mxu0 0.0
        %2895 = vmatpush1.msra.mxu0 0.0
        %2896 = vmatprep.subr.mxu0 0.0
        %2897 = vmatpush1.msra.mxu0 0.0
        %2898 = vmatprep.subr.mxu0 0.0
        %2899 = vmatpush1.msra.mxu0 0.0
        %2900 = vmatprep.subr.mxu0 0.0
        %2901 = vmatpush1.msra.mxu0 0.0
        %2902 = vmatprep.subr.mxu0 0.0
        %2903 = vmatpush1.msra.mxu0 0.0
        %2904 = vmatprep.subr.mxu0 0.0
        %2905 = vmatpush1.msra.mxu0 0.0
        %2906 = vmatprep.subr.mxu0 0.0
        %2907 = vmatpush1.msra.mxu0 0.0
        %2908 = vmatprep.subr.mxu0 0.0
        %2909 = vmatpush1.msra.mxu0 0.0
        %2910 = vmatprep.subr.mxu0 0.0
        %2911 = vmatpush1.msra.mxu0 0.0
        %2912 = vmatprep.subr.mxu0 0.0
        %2913 = vmatpush1.msra.mxu0 0.0
        %2914 = vmatprep.subr.mxu0 0.0
        %2915 = vmatpush1.msra.mxu0 0.0
        %2916 = vmatprep.subr.mxu0 0.0
        %2917 = vmatpush1.msra.mxu0 0.0
        %2918 = vmatprep.subr.mxu0 0.0
        %2919 = vmatpush1.msra.mxu0 0.0
        %2920 = vmatprep.subr.mxu0 0.0
        %2921 = vmatpush1.msra.mxu0 0.0
        %2922 = vmatprep.subr.mxu0 0.0
        %2923 = vmatpush1.msra.mxu0 0.0
        %2924 = vmatprep.subr.mxu0 0.0
        %2925 = vmatpush1.msra.mxu0 0.0
        %2926 = vmatprep.subr.mxu0 0.0
        %2927 = vmatpush1.msra.mxu0 0.0
        %2928 = vmatprep.subr.mxu0 0.0
        %2929 = vmatpush1.msra.mxu0 0.0
        %2930 = vmatprep.subr.mxu0 0.0
        %2931 = vmatpush1.msra.mxu0 0.0
        %2932 = vmatprep.subr.mxu0 0.0
        %2933 = vmatpush1.msra.mxu0 0.0
        %2934 = vmatprep.subr.mxu0 0.0
        %2935 = vmatpush1.msra.mxu0 0.0
        %2936 = vmatprep.subr.mxu0 0.0
        %2937 = vmatpush1.msra.mxu0 0.0
        %2938 = vmatprep.subr.mxu0 0.0
        %2939 = vmatpush1.msra.mxu0 0.0
        %2940 = vmatprep.subr.mxu0 0.0
        %2941 = vmatpush1.msra.mxu0 0.0
        %2942 = vmatprep.subr.mxu0 0.0
        %2943 = vmatpush1.msra.mxu0 0.0
        %2944 = vmatprep.mubr.f32.mxu0 0.0
        %2945 = vmatmul.mubr.f32.gmra.mrb[0].mxu0 %v2875
        %v2946 = vpop.f32.mrb[0].mxu0
        %v2947 = vadd.f32 0.0, %v2946
        %v2948 = vpop.f32.mrb[0].mxu0
        %2949 = vmatprep.mubr.f32.mxu0 0.0
        %2950 = vmatmul.mubr.f32.gmra.mrb[0].mxu0 %v2878
        %v2951 = vpop.f32.mrb[0].mxu0
        %v2952 = vadd.f32 0.0, %v2951
        %v2953 = vpop.f32.mrb[0].mxu0
        %2954 = vdwg.mxu0
        %v2955 = vadd.f32 %v2867, %v2947
        %v2956 = vadd.f32 %v2868, %v2952
        %v2957 = vld [vmem:[#allocation4 + $0x7] sm:$0xff]
        %v2958 = vld [vmem:[#allocation4 + $0xf] sm:$0xff]
        %s2959 = scalar_lea.vmem [#allocation11], 32
        %v2960 = vld [vmem:[%s2959] sm:$0xff]
        %v2961 = vld [vmem:[%s2959 + $0x8] sm:$0xff]
        %v2963 = vsel %vm309, %v2957, 0
        %v2966 = vsel %vm309, %v2958, 0
        %2968 = vmatprep.subr.mxu0 0.0
        %2969 = vmatpush1.msra.mxu0 %v2960
        %2970 = vmatprep.subr.mxu0 0.0
        %2971 = vmatpush1.msra.mxu0 %v2961
        %2972 = vmatprep.subr.mxu0 0.0
        %2973 = vmatpush1.msra.mxu0 0.0
        %2974 = vmatprep.subr.mxu0 0.0
        %2975 = vmatpush1.msra.mxu0 0.0
        %2976 = vmatprep.subr.mxu0 0.0
        %2977 = vmatpush1.msra.mxu0 0.0
        %2978 = vmatprep.subr.mxu0 0.0
        %2979 = vmatpush1.msra.mxu0 0.0
        %2980 = vmatprep.subr.mxu0 0.0
        %2981 = vmatpush1.msra.mxu0 0.0
        %2982 = vmatprep.subr.mxu0 0.0
        %2983 = vmatpush1.msra.mxu0 0.0
        %2984 = vmatprep.subr.mxu0 0.0
        %2985 = vmatpush1.msra.mxu0 0.0
        %2986 = vmatprep.subr.mxu0 0.0
        %2987 = vmatpush1.msra.mxu0 0.0
        %2988 = vmatprep.subr.mxu0 0.0
        %2989 = vmatpush1.msra.mxu0 0.0
        %2990 = vmatprep.subr.mxu0 0.0
        %2991 = vmatpush1.msra.mxu0 0.0
        %2992 = vmatprep.subr.mxu0 0.0
        %2993 = vmatpush1.msra.mxu0 0.0
        %2994 = vmatprep.subr.mxu0 0.0
        %2995 = vmatpush1.msra.mxu0 0.0
        %2996 = vmatprep.subr.mxu0 0.0
        %2997 = vmatpush1.msra.mxu0 0.0
        %2998 = vmatprep.subr.mxu0 0.0
        %2999 = vmatpush1.msra.mxu0 0.0
        %3000 = vmatprep.subr.mxu0 0.0
        %3001 = vmatpush1.msra.mxu0 0.0
        %3002 = vmatprep.subr.mxu0 0.0
        %3003 = vmatpush1.msra.mxu0 0.0
        %3004 = vmatprep.subr.mxu0 0.0
        %3005 = vmatpush1.msra.mxu0 0.0
        %3006 = vmatprep.subr.mxu0 0.0
        %3007 = vmatpush1.msra.mxu0 0.0
        %3008 = vmatprep.subr.mxu0 0.0
        %3009 = vmatpush1.msra.mxu0 0.0
        %3010 = vmatprep.subr.mxu0 0.0
        %3011 = vmatpush1.msra.mxu0 0.0
        %3012 = vmatprep.subr.mxu0 0.0
        %3013 = vmatpush1.msra.mxu0 0.0
        %3014 = vmatprep.subr.mxu0 0.0
        %3015 = vmatpush1.msra.mxu0 0.0
        %3016 = vmatprep.subr.mxu0 0.0
        %3017 = vmatpush1.msra.mxu0 0.0
        %3018 = vmatprep.subr.mxu0 0.0
        %3019 = vmatpush1.msra.mxu0 0.0
        %3020 = vmatprep.subr.mxu0 0.0
        %3021 = vmatpush1.msra.mxu0 0.0
        %3022 = vmatprep.subr.mxu0 0.0
        %3023 = vmatpush1.msra.mxu0 0.0
        %3024 = vmatprep.subr.mxu0 0.0
        %3025 = vmatpush1.msra.mxu0 0.0
        %3026 = vmatprep.subr.mxu0 0.0
        %3027 = vmatpush1.msra.mxu0 0.0
        %3028 = vmatprep.subr.mxu0 0.0
        %3029 = vmatpush1.msra.mxu0 0.0
        %3030 = vmatprep.subr.mxu0 0.0
        %3031 = vmatpush1.msra.mxu0 0.0
        %3032 = vmatprep.mubr.f32.mxu0 0.0
        %3033 = vmatmul.mubr.f32.gmra.mrb[0].mxu0 %v2963
        %v3034 = vpop.f32.mrb[0].mxu0
        %v3035 = vadd.f32 0.0, %v3034
        %v3036 = vpop.f32.mrb[0].mxu0
        %3037 = vmatprep.mubr.f32.mxu0 0.0
        %3038 = vmatmul.mubr.f32.gmra.mrb[0].mxu0 %v2966
        %v3039 = vpop.f32.mrb[0].mxu0
        %v3040 = vadd.f32 0.0, %v3039
        %v3041 = vpop.f32.mrb[0].mxu0
        %3042 = vdwg.mxu0
        %v3043 = vadd.f32 %v2955, %v3035
        %v3044 = vadd.f32 %v2956, %v3040
        %v3045 = vld [vmem:[#allocation4 + $0x8] sm:$0xff]
        %v3046 = vld [vmem:[#allocation4 + $0x10] sm:$0xff]
        %s3047 = scalar_lea.vmem [#allocation11], 48
        %v3048 = vld [vmem:[%s3047] sm:$0xff]
        %v3049 = vld [vmem:[%s3047 + $0x8] sm:$0xff]
        %v3051 = vsel %vm309, %v3045, 0
        %v3054 = vsel %vm309, %v3046, 0
        %3056 = vmatprep.subr.mxu0 0.0
        %3057 = vmatpush1.msra.mxu0 %v3048
        %3058 = vmatprep.subr.mxu0 0.0
        %3059 = vmatpush1.msra.mxu0 %v3049
        %3060 = vmatprep.subr.mxu0 0.0
        %3061 = vmatpush1.msra.mxu0 0.0
        %3062 = vmatprep.subr.mxu0 0.0
        %3063 = vmatpush1.msra.mxu0 0.0
        %3064 = vmatprep.subr.mxu0 0.0
        %3065 = vmatpush1.msra.mxu0 0.0
        %3066 = vmatprep.subr.mxu0 0.0
        %3067 = vmatpush1.msra.mxu0 0.0
        %3068 = vmatprep.subr.mxu0 0.0
        %3069 = vmatpush1.msra.mxu0 0.0
        %3070 = vmatprep.subr.mxu0 0.0
        %3071 = vmatpush1.msra.mxu0 0.0
        %3072 = vmatprep.subr.mxu0 0.0
        %3073 = vmatpush1.msra.mxu0 0.0
        %3074 = vmatprep.subr.mxu0 0.0
        %3075 = vmatpush1.msra.mxu0 0.0
        %3076 = vmatprep.subr.mxu0 0.0
        %3077 = vmatpush1.msra.mxu0 0.0
        %3078 = vmatprep.subr.mxu0 0.0
        %3079 = vmatpush1.msra.mxu0 0.0
        %3080 = vmatprep.subr.mxu0 0.0
        %3081 = vmatpush1.msra.mxu0 0.0
        %3082 = vmatprep.subr.mxu0 0.0
        %3083 = vmatpush1.msra.mxu0 0.0
        %3084 = vmatprep.subr.mxu0 0.0
        %3085 = vmatpush1.msra.mxu0 0.0
        %3086 = vmatprep.subr.mxu0 0.0
        %3087 = vmatpush1.msra.mxu0 0.0
        %3088 = vmatprep.subr.mxu0 0.0
        %3089 = vmatpush1.msra.mxu0 0.0
        %3090 = vmatprep.subr.mxu0 0.0
        %3091 = vmatpush1.msra.mxu0 0.0
        %3092 = vmatprep.subr.mxu0 0.0
        %3093 = vmatpush1.msra.mxu0 0.0
        %3094 = vmatprep.subr.mxu0 0.0
        %3095 = vmatpush1.msra.mxu0 0.0
        %3096 = vmatprep.subr.mxu0 0.0
        %3097 = vmatpush1.msra.mxu0 0.0
        %3098 = vmatprep.subr.mxu0 0.0
        %3099 = vmatpush1.msra.mxu0 0.0
        %3100 = vmatprep.subr.mxu0 0.0
        %3101 = vmatpush1.msra.mxu0 0.0
        %3102 = vmatprep.subr.mxu0 0.0
        %3103 = vmatpush1.msra.mxu0 0.0
        %3104 = vmatprep.subr.mxu0 0.0
        %3105 = vmatpush1.msra.mxu0 0.0
        %3106 = vmatprep.subr.mxu0 0.0
        %3107 = vmatpush1.msra.mxu0 0.0
        %3108 = vmatprep.subr.mxu0 0.0
        %3109 = vmatpush1.msra.mxu0 0.0
        %3110 = vmatprep.subr.mxu0 0.0
        %3111 = vmatpush1.msra.mxu0 0.0
        %3112 = vmatprep.subr.mxu0 0.0
        %3113 = vmatpush1.msra.mxu0 0.0
        %3114 = vmatprep.subr.mxu0 0.0
        %3115 = vmatpush1.msra.mxu0 0.0
        %3116 = vmatprep.subr.mxu0 0.0
        %3117 = vmatpush1.msra.mxu0 0.0
        %3118 = vmatprep.subr.mxu0 0.0
        %3119 = vmatpush1.msra.mxu0 0.0
        %3120 = vmatprep.mubr.f32.mxu0 0.0
        %3121 = vmatmul.mubr.f32.gmra.mrb[0].mxu0 %v3051
        %v3122 = vpop.f32.mrb[0].mxu0
        %v3123 = vadd.f32 0.0, %v3122
        %v3124 = vpop.f32.mrb[0].mxu0
        %3125 = vmatprep.mubr.f32.mxu0 0.0
        %3126 = vmatmul.mubr.f32.gmra.mrb[0].mxu0 %v3054
        %v3127 = vpop.f32.mrb[0].mxu0
        %v3128 = vadd.f32 0.0, %v3127
        %v3129 = vpop.f32.mrb[0].mxu0
        %3130 = vdwg.mxu0
        %v3131 = vadd.f32 %v3043, %v3123
        %v3132 = vadd.f32 %v3044, %v3128
        %v3133 = vld [vmem:[#allocation4 + $0x9] sm:$0xff]
        %v3134 = vld [vmem:[#allocation4 + $0x11] sm:$0xff]
        %s3135 = scalar_lea.vmem [#allocation11], 64
        %v3136 = vld [vmem:[%s3135] sm:$0xff]
        %v3137 = vld [vmem:[%s3135 + $0x8] sm:$0xff]
        %v3139 = vsel %vm309, %v3133, 0
        %v3142 = vsel %vm309, %v3134, 0
        %3144 = vmatprep.subr.mxu0 0.0
        %3145 = vmatpush1.msra.mxu0 %v3136
        %3146 = vmatprep.subr.mxu0 0.0
        %3147 = vmatpush1.msra.mxu0 %v3137
        %3148 = vmatprep.subr.mxu0 0.0
        %3149 = vmatpush1.msra.mxu0 0.0
        %3150 = vmatprep.subr.mxu0 0.0
        %3151 = vmatpush1.msra.mxu0 0.0
        %3152 = vmatprep.subr.mxu0 0.0
        %3153 = vmatpush1.msra.mxu0 0.0
        %3154 = vmatprep.subr.mxu0 0.0
        %3155 = vmatpush1.msra.mxu0 0.0
        %3156 = vmatprep.subr.mxu0 0.0
        %3157 = vmatpush1.msra.mxu0 0.0
        %3158 = vmatprep.subr.mxu0 0.0
        %3159 = vmatpush1.msra.mxu0 0.0
        %3160 = vmatprep.subr.mxu0 0.0
        %3161 = vmatpush1.msra.mxu0 0.0
        %3162 = vmatprep.subr.mxu0 0.0
        %3163 = vmatpush1.msra.mxu0 0.0
        %3164 = vmatprep.subr.mxu0 0.0
        %3165 = vmatpush1.msra.mxu0 0.0
        %3166 = vmatprep.subr.mxu0 0.0
        %3167 = vmatpush1.msra.mxu0 0.0
        %3168 = vmatprep.subr.mxu0 0.0
        %3169 = vmatpush1.msra.mxu0 0.0
        %3170 = vmatprep.subr.mxu0 0.0
        %3171 = vmatpush1.msra.mxu0 0.0
        %3172 = vmatprep.subr.mxu0 0.0
        %3173 = vmatpush1.msra.mxu0 0.0
        %3174 = vmatprep.subr.mxu0 0.0
        %3175 = vmatpush1.msra.mxu0 0.0
        %3176 = vmatprep.subr.mxu0 0.0
        %3177 = vmatpush1.msra.mxu0 0.0
        %3178 = vmatprep.subr.mxu0 0.0
        %3179 = vmatpush1.msra.mxu0 0.0
        %3180 = vmatprep.subr.mxu0 0.0
        %3181 = vmatpush1.msra.mxu0 0.0
        %3182 = vmatprep.subr.mxu0 0.0
        %3183 = vmatpush1.msra.mxu0 0.0
        %3184 = vmatprep.subr.mxu0 0.0
        %3185 = vmatpush1.msra.mxu0 0.0
        %3186 = vmatprep.subr.mxu0 0.0
        %3187 = vmatpush1.msra.mxu0 0.0
        %3188 = vmatprep.subr.mxu0 0.0
        %3189 = vmatpush1.msra.mxu0 0.0
        %3190 = vmatprep.subr.mxu0 0.0
        %3191 = vmatpush1.msra.mxu0 0.0
        %3192 = vmatprep.subr.mxu0 0.0
        %3193 = vmatpush1.msra.mxu0 0.0
        %3194 = vmatprep.subr.mxu0 0.0
        %3195 = vmatpush1.msra.mxu0 0.0
        %3196 = vmatprep.subr.mxu0 0.0
        %3197 = vmatpush1.msra.mxu0 0.0
        %3198 = vmatprep.subr.mxu0 0.0
        %3199 = vmatpush1.msra.mxu0 0.0
        %3200 = vmatprep.subr.mxu0 0.0
        %3201 = vmatpush1.msra.mxu0 0.0
        %3202 = vmatprep.subr.mxu0 0.0
        %3203 = vmatpush1.msra.mxu0 0.0
        %3204 = vmatprep.subr.mxu0 0.0
        %3205 = vmatpush1.msra.mxu0 0.0
        %3206 = vmatprep.subr.mxu0 0.0
        %3207 = vmatpush1.msra.mxu0 0.0
        %3208 = vmatprep.mubr.f32.mxu0 0.0
        %3209 = vmatmul.mubr.f32.gmra.mrb[0].mxu0 %v3139
        %v3210 = vpop.f32.mrb[0].mxu0
        %v3211 = vadd.f32 0.0, %v3210
        %v3212 = vpop.f32.mrb[0].mxu0
        %3213 = vmatprep.mubr.f32.mxu0 0.0
        %3214 = vmatmul.mubr.f32.gmra.mrb[0].mxu0 %v3142
        %v3215 = vpop.f32.mrb[0].mxu0
        %v3216 = vadd.f32 0.0, %v3215
        %v3217 = vpop.f32.mrb[0].mxu0
        %3218 = vdwg.mxu0
        %v3219 = vadd.f32 %v3131, %v3211
        %v3220 = vadd.f32 %v3132, %v3216
        %v3221 = vld [vmem:[#allocation4 + $0xa] sm:$0xff]
        %v3222 = vld [vmem:[#allocation4 + $0x12] sm:$0xff]
        %s3223 = scalar_lea.vmem [#allocation11], 80
        %v3224 = vld [vmem:[%s3223] sm:$0xff]
        %v3225 = vld [vmem:[%s3223 + $0x8] sm:$0xff]
        %v3227 = vsel %vm309, %v3221, 0
        %v3230 = vsel %vm309, %v3222, 0
        %3232 = vmatprep.subr.mxu0 0.0
        %3233 = vmatpush1.msra.mxu0 %v3224
        %3234 = vmatprep.subr.mxu0 0.0
        %3235 = vmatpush1.msra.mxu0 %v3225
        %3236 = vmatprep.subr.mxu0 0.0
        %3237 = vmatpush1.msra.mxu0 0.0
        %3238 = vmatprep.subr.mxu0 0.0
        %3239 = vmatpush1.msra.mxu0 0.0
        %3240 = vmatprep.subr.mxu0 0.0
        %3241 = vmatpush1.msra.mxu0 0.0
        %3242 = vmatprep.subr.mxu0 0.0
        %3243 = vmatpush1.msra.mxu0 0.0
        %3244 = vmatprep.subr.mxu0 0.0
        %3245 = vmatpush1.msra.mxu0 0.0
        %3246 = vmatprep.subr.mxu0 0.0
        %3247 = vmatpush1.msra.mxu0 0.0
        %3248 = vmatprep.subr.mxu0 0.0
        %3249 = vmatpush1.msra.mxu0 0.0
        %3250 = vmatprep.subr.mxu0 0.0
        %3251 = vmatpush1.msra.mxu0 0.0
        %3252 = vmatprep.subr.mxu0 0.0
        %3253 = vmatpush1.msra.mxu0 0.0
        %3254 = vmatprep.subr.mxu0 0.0
        %3255 = vmatpush1.msra.mxu0 0.0
        %3256 = vmatprep.subr.mxu0 0.0
        %3257 = vmatpush1.msra.mxu0 0.0
        %3258 = vmatprep.subr.mxu0 0.0
        %3259 = vmatpush1.msra.mxu0 0.0
        %3260 = vmatprep.subr.mxu0 0.0
        %3261 = vmatpush1.msra.mxu0 0.0
        %3262 = vmatprep.subr.mxu0 0.0
        %3263 = vmatpush1.msra.mxu0 0.0
        %3264 = vmatprep.subr.mxu0 0.0
        %3265 = vmatpush1.msra.mxu0 0.0
        %3266 = vmatprep.subr.mxu0 0.0
        %3267 = vmatpush1.msra.mxu0 0.0
        %3268 = vmatprep.subr.mxu0 0.0
        %3269 = vmatpush1.msra.mxu0 0.0
        %3270 = vmatprep.subr.mxu0 0.0
        %3271 = vmatpush1.msra.mxu0 0.0
        %3272 = vmatprep.subr.mxu0 0.0
        %3273 = vmatpush1.msra.mxu0 0.0
        %3274 = vmatprep.subr.mxu0 0.0
        %3275 = vmatpush1.msra.mxu0 0.0
        %3276 = vmatprep.subr.mxu0 0.0
        %3277 = vmatpush1.msra.mxu0 0.0
        %3278 = vmatprep.subr.mxu0 0.0
        %3279 = vmatpush1.msra.mxu0 0.0
        %3280 = vmatprep.subr.mxu0 0.0
        %3281 = vmatpush1.msra.mxu0 0.0
        %3282 = vmatprep.subr.mxu0 0.0
        %3283 = vmatpush1.msra.mxu0 0.0
        %3284 = vmatprep.subr.mxu0 0.0
        %3285 = vmatpush1.msra.mxu0 0.0
        %3286 = vmatprep.subr.mxu0 0.0
        %3287 = vmatpush1.msra.mxu0 0.0
        %3288 = vmatprep.subr.mxu0 0.0
        %3289 = vmatpush1.msra.mxu0 0.0
        %3290 = vmatprep.subr.mxu0 0.0
        %3291 = vmatpush1.msra.mxu0 0.0
        %3292 = vmatprep.subr.mxu0 0.0
        %3293 = vmatpush1.msra.mxu0 0.0
        %3294 = vmatprep.subr.mxu0 0.0
        %3295 = vmatpush1.msra.mxu0 0.0
        %3296 = vmatprep.mubr.f32.mxu0 0.0
        %3297 = vmatmul.mubr.f32.gmra.mrb[0].mxu0 %v3227
        %v3298 = vpop.f32.mrb[0].mxu0
        %v3299 = vadd.f32 0.0, %v3298
        %v3300 = vpop.f32.mrb[0].mxu0
        %3301 = vmatprep.mubr.f32.mxu0 0.0
        %3302 = vmatmul.mubr.f32.gmra.mrb[0].mxu0 %v3230
        %v3303 = vpop.f32.mrb[0].mxu0
        %v3304 = vadd.f32 0.0, %v3303
        %v3305 = vpop.f32.mrb[0].mxu0
        %3306 = vdwg.mxu0
        %v3307 = vadd.f32 %v3219, %v3299
        %v3308 = vadd.f32 %v3220, %v3304
        %v3309 = vld [vmem:[#allocation4 + $0xb] sm:$0xff]
        %v3310 = vld [vmem:[#allocation4 + $0x13] sm:$0xff]
        %s3311 = scalar_lea.vmem [#allocation11], 96
        %v3312 = vld [vmem:[%s3311] sm:$0xff]
        %v3313 = vld [vmem:[%s3311 + $0x8] sm:$0xff]
        %v3315 = vsel %vm309, %v3309, 0
        %v3318 = vsel %vm309, %v3310, 0
        %3320 = vmatprep.subr.mxu0 0.0
        %3321 = vmatpush1.msra.mxu0 %v3312
        %3322 = vmatprep.subr.mxu0 0.0
        %3323 = vmatpush1.msra.mxu0 %v3313
        %3324 = vmatprep.subr.mxu0 0.0
        %3325 = vmatpush1.msra.mxu0 0.0
        %3326 = vmatprep.subr.mxu0 0.0
        %3327 = vmatpush1.msra.mxu0 0.0
        %3328 = vmatprep.subr.mxu0 0.0
        %3329 = vmatpush1.msra.mxu0 0.0
        %3330 = vmatprep.subr.mxu0 0.0
        %3331 = vmatpush1.msra.mxu0 0.0
        %3332 = vmatprep.subr.mxu0 0.0
        %3333 = vmatpush1.msra.mxu0 0.0
        %3334 = vmatprep.subr.mxu0 0.0
        %3335 = vmatpush1.msra.mxu0 0.0
        %3336 = vmatprep.subr.mxu0 0.0
        %3337 = vmatpush1.msra.mxu0 0.0
        %3338 = vmatprep.subr.mxu0 0.0
        %3339 = vmatpush1.msra.mxu0 0.0
        %3340 = vmatprep.subr.mxu0 0.0
        %3341 = vmatpush1.msra.mxu0 0.0
        %3342 = vmatprep.subr.mxu0 0.0
        %3343 = vmatpush1.msra.mxu0 0.0
        %3344 = vmatprep.subr.mxu0 0.0
        %3345 = vmatpush1.msra.mxu0 0.0
        %3346 = vmatprep.subr.mxu0 0.0
        %3347 = vmatpush1.msra.mxu0 0.0
        %3348 = vmatprep.subr.mxu0 0.0
        %3349 = vmatpush1.msra.mxu0 0.0
        %3350 = vmatprep.subr.mxu0 0.0
        %3351 = vmatpush1.msra.mxu0 0.0
        %3352 = vmatprep.subr.mxu0 0.0
        %3353 = vmatpush1.msra.mxu0 0.0
        %3354 = vmatprep.subr.mxu0 0.0
        %3355 = vmatpush1.msra.mxu0 0.0
        %3356 = vmatprep.subr.mxu0 0.0
        %3357 = vmatpush1.msra.mxu0 0.0
        %3358 = vmatprep.subr.mxu0 0.0
        %3359 = vmatpush1.msra.mxu0 0.0
        %3360 = vmatprep.subr.mxu0 0.0
        %3361 = vmatpush1.msra.mxu0 0.0
        %3362 = vmatprep.subr.mxu0 0.0
        %3363 = vmatpush1.msra.mxu0 0.0
        %3364 = vmatprep.subr.mxu0 0.0
        %3365 = vmatpush1.msra.mxu0 0.0
        %3366 = vmatprep.subr.mxu0 0.0
        %3367 = vmatpush1.msra.mxu0 0.0
        %3368 = vmatprep.subr.mxu0 0.0
        %3369 = vmatpush1.msra.mxu0 0.0
        %3370 = vmatprep.subr.mxu0 0.0
        %3371 = vmatpush1.msra.mxu0 0.0
        %3372 = vmatprep.subr.mxu0 0.0
        %3373 = vmatpush1.msra.mxu0 0.0
        %3374 = vmatprep.subr.mxu0 0.0
        %3375 = vmatpush1.msra.mxu0 0.0
        %3376 = vmatprep.subr.mxu0 0.0
        %3377 = vmatpush1.msra.mxu0 0.0
        %3378 = vmatprep.subr.mxu0 0.0
        %3379 = vmatpush1.msra.mxu0 0.0
        %3380 = vmatprep.subr.mxu0 0.0
        %3381 = vmatpush1.msra.mxu0 0.0
        %3382 = vmatprep.subr.mxu0 0.0
        %3383 = vmatpush1.msra.mxu0 0.0
        %3384 = vmatprep.mubr.f32.mxu0 0.0
        %3385 = vmatmul.mubr.f32.gmra.mrb[0].mxu0 %v3315
        %v3386 = vpop.f32.mrb[0].mxu0
        %v3387 = vadd.f32 0.0, %v3386
        %v3388 = vpop.f32.mrb[0].mxu0
        %3389 = vmatprep.mubr.f32.mxu0 0.0
        %3390 = vmatmul.mubr.f32.gmra.mrb[0].mxu0 %v3318
        %v3391 = vpop.f32.mrb[0].mxu0
        %v3392 = vadd.f32 0.0, %v3391
        %v3393 = vpop.f32.mrb[0].mxu0
        %3394 = vdwg.mxu0
        %v3395 = vadd.f32 %v3307, %v3387
        %v3396 = vadd.f32 %v3308, %v3392
        %v3397 = vld [vmem:[%s575 + $0x5] sm:$0xff]
        %v3398 = vld [vmem:[%s575 + $0xd] sm:$0xff]
        %s3399 = scalar_lea.vmem [#allocation11], 112
        %v3400 = vld [vmem:[%s3399] sm:$0xff]
        %v3401 = vld [vmem:[%s3399 + $0x8] sm:$0xff]
        %v3403 = vsel %vm309, %v3397, 0
        %v3406 = vsel %vm309, %v3398, 0
        %3408 = vmatprep.subr.mxu0 0.0
        %3409 = vmatpush1.msra.mxu0 %v3400
        %3410 = vmatprep.subr.mxu0 0.0
        %3411 = vmatpush1.msra.mxu0 %v3401
        %3412 = vmatprep.subr.mxu0 0.0
        %3413 = vmatpush1.msra.mxu0 0.0
        %3414 = vmatprep.subr.mxu0 0.0
        %3415 = vmatpush1.msra.mxu0 0.0
        %3416 = vmatprep.subr.mxu0 0.0
        %3417 = vmatpush1.msra.mxu0 0.0
        %3418 = vmatprep.subr.mxu0 0.0
        %3419 = vmatpush1.msra.mxu0 0.0
        %3420 = vmatprep.subr.mxu0 0.0
        %3421 = vmatpush1.msra.mxu0 0.0
        %3422 = vmatprep.subr.mxu0 0.0
        %3423 = vmatpush1.msra.mxu0 0.0
        %3424 = vmatprep.subr.mxu0 0.0
        %3425 = vmatpush1.msra.mxu0 0.0
        %3426 = vmatprep.subr.mxu0 0.0
        %3427 = vmatpush1.msra.mxu0 0.0
        %3428 = vmatprep.subr.mxu0 0.0
        %3429 = vmatpush1.msra.mxu0 0.0
        %3430 = vmatprep.subr.mxu0 0.0
        %3431 = vmatpush1.msra.mxu0 0.0
        %3432 = vmatprep.subr.mxu0 0.0
        %3433 = vmatpush1.msra.mxu0 0.0
        %3434 = vmatprep.subr.mxu0 0.0
        %3435 = vmatpush1.msra.mxu0 0.0
        %3436 = vmatprep.subr.mxu0 0.0
        %3437 = vmatpush1.msra.mxu0 0.0
        %3438 = vmatprep.subr.mxu0 0.0
        %3439 = vmatpush1.msra.mxu0 0.0
        %3440 = vmatprep.subr.mxu0 0.0
        %3441 = vmatpush1.msra.mxu0 0.0
        %3442 = vmatprep.subr.mxu0 0.0
        %3443 = vmatpush1.msra.mxu0 0.0
        %3444 = vmatprep.subr.mxu0 0.0
        %3445 = vmatpush1.msra.mxu0 0.0
        %3446 = vmatprep.subr.mxu0 0.0
        %3447 = vmatpush1.msra.mxu0 0.0
        %3448 = vmatprep.subr.mxu0 0.0
        %3449 = vmatpush1.msra.mxu0 0.0
        %3450 = vmatprep.subr.mxu0 0.0
        %3451 = vmatpush1.msra.mxu0 0.0
        %3452 = vmatprep.subr.mxu0 0.0
        %3453 = vmatpush1.msra.mxu0 0.0
        %3454 = vmatprep.subr.mxu0 0.0
        %3455 = vmatpush1.msra.mxu0 0.0
        %3456 = vmatprep.subr.mxu0 0.0
        %3457 = vmatpush1.msra.mxu0 0.0
        %3458 = vmatprep.subr.mxu0 0.0
        %3459 = vmatpush1.msra.mxu0 0.0
        %3460 = vmatprep.subr.mxu0 0.0
        %3461 = vmatpush1.msra.mxu0 0.0
        %3462 = vmatprep.subr.mxu0 0.0
        %3463 = vmatpush1.msra.mxu0 0.0
        %3464 = vmatprep.subr.mxu0 0.0
        %3465 = vmatpush1.msra.mxu0 0.0
        %3466 = vmatprep.subr.mxu0 0.0
        %3467 = vmatpush1.msra.mxu0 0.0
        %3468 = vmatprep.subr.mxu0 0.0
        %3469 = vmatpush1.msra.mxu0 0.0
        %3470 = vmatprep.subr.mxu0 0.0
        %3471 = vmatpush1.msra.mxu0 0.0
        %3472 = vmatprep.mubr.f32.mxu0 0.0
        %3473 = vmatmul.mubr.f32.gmra.mrb[0].mxu0 %v3403
        %v3474 = vpop.f32.mrb[0].mxu0
        %v3475 = vadd.f32 0.0, %v3474
        %v3476 = vpop.f32.mrb[0].mxu0
        %3477 = vmatprep.mubr.f32.mxu0 0.0
        %3478 = vmatmul.mubr.f32.gmra.mrb[0].mxu0 %v3406
        %v3479 = vpop.f32.mrb[0].mxu0
        %v3480 = vadd.f32 0.0, %v3479
        %v3481 = vpop.f32.mrb[0].mxu0
        %3482 = vdwg.mxu0
        %v3483 = vadd.f32 %v3395, %v3475
        %v3484 = vadd.f32 %v3396, %v3480
        %v3485 = vld [vmem:[%s575 + $0x6] sm:$0xff]
        %v3486 = vld [vmem:[%s575 + $0xe] sm:$0xff]
        %s3487 = scalar_lea.vmem [#allocation11], 128
        %v3488 = vld [vmem:[%s3487] sm:$0xff]
        %v3489 = vld [vmem:[%s3487 + $0x8] sm:$0xff]
        %v3491 = vsel %vm309, %v3485, 0
        %v3494 = vsel %vm309, %v3486, 0
        %3496 = vmatprep.subr.mxu0 0.0
        %3497 = vmatpush1.msra.mxu0 %v3488
        %3498 = vmatprep.subr.mxu0 0.0
        %3499 = vmatpush1.msra.mxu0 %v3489
        %3500 = vmatprep.subr.mxu0 0.0
        %3501 = vmatpush1.msra.mxu0 0.0
        %3502 = vmatprep.subr.mxu0 0.0
        %3503 = vmatpush1.msra.mxu0 0.0
        %3504 = vmatprep.subr.mxu0 0.0
        %3505 = vmatpush1.msra.mxu0 0.0
        %3506 = vmatprep.subr.mxu0 0.0
        %3507 = vmatpush1.msra.mxu0 0.0
        %3508 = vmatprep.subr.mxu0 0.0
        %3509 = vmatpush1.msra.mxu0 0.0
        %3510 = vmatprep.subr.mxu0 0.0
        %3511 = vmatpush1.msra.mxu0 0.0
        %3512 = vmatprep.subr.mxu0 0.0
        %3513 = vmatpush1.msra.mxu0 0.0
        %3514 = vmatprep.subr.mxu0 0.0
        %3515 = vmatpush1.msra.mxu0 0.0
        %3516 = vmatprep.subr.mxu0 0.0
        %3517 = vmatpush1.msra.mxu0 0.0
        %3518 = vmatprep.subr.mxu0 0.0
        %3519 = vmatpush1.msra.mxu0 0.0
        %3520 = vmatprep.subr.mxu0 0.0
        %3521 = vmatpush1.msra.mxu0 0.0
        %3522 = vmatprep.subr.mxu0 0.0
        %3523 = vmatpush1.msra.mxu0 0.0
        %3524 = vmatprep.subr.mxu0 0.0
        %3525 = vmatpush1.msra.mxu0 0.0
        %3526 = vmatprep.subr.mxu0 0.0
        %3527 = vmatpush1.msra.mxu0 0.0
        %3528 = vmatprep.subr.mxu0 0.0
        %3529 = vmatpush1.msra.mxu0 0.0
        %3530 = vmatprep.subr.mxu0 0.0
        %3531 = vmatpush1.msra.mxu0 0.0
        %3532 = vmatprep.subr.mxu0 0.0
        %3533 = vmatpush1.msra.mxu0 0.0
        %3534 = vmatprep.subr.mxu0 0.0
        %3535 = vmatpush1.msra.mxu0 0.0
        %3536 = vmatprep.subr.mxu0 0.0
        %3537 = vmatpush1.msra.mxu0 0.0
        %3538 = vmatprep.subr.mxu0 0.0
        %3539 = vmatpush1.msra.mxu0 0.0
        %3540 = vmatprep.subr.mxu0 0.0
        %3541 = vmatpush1.msra.mxu0 0.0
        %3542 = vmatprep.subr.mxu0 0.0
        %3543 = vmatpush1.msra.mxu0 0.0
        %3544 = vmatprep.subr.mxu0 0.0
        %3545 = vmatpush1.msra.mxu0 0.0
        %3546 = vmatprep.subr.mxu0 0.0
        %3547 = vmatpush1.msra.mxu0 0.0
        %3548 = vmatprep.subr.mxu0 0.0
        %3549 = vmatpush1.msra.mxu0 0.0
        %3550 = vmatprep.subr.mxu0 0.0
        %3551 = vmatpush1.msra.mxu0 0.0
        %3552 = vmatprep.subr.mxu0 0.0
        %3553 = vmatpush1.msra.mxu0 0.0
        %3554 = vmatprep.subr.mxu0 0.0
        %3555 = vmatpush1.msra.mxu0 0.0
        %3556 = vmatprep.subr.mxu0 0.0
        %3557 = vmatpush1.msra.mxu0 0.0
        %3558 = vmatprep.subr.mxu0 0.0
        %3559 = vmatpush1.msra.mxu0 0.0
        %3560 = vmatprep.mubr.f32.mxu0 0.0
        %3561 = vmatmul.mubr.f32.gmra.mrb[0].mxu0 %v3491
        %v3562 = vpop.f32.mrb[0].mxu0
        %v3563 = vadd.f32 0.0, %v3562
        %v3564 = vpop.f32.mrb[0].mxu0
        %3565 = vmatprep.mubr.f32.mxu0 0.0
        %3566 = vmatmul.mubr.f32.gmra.mrb[0].mxu0 %v3494
        %v3567 = vpop.f32.mrb[0].mxu0
        %v3568 = vadd.f32 0.0, %v3567
        %v3569 = vpop.f32.mrb[0].mxu0
        %3570 = vdwg.mxu0
        %v3571 = vadd.f32 %v3483, %v3563
        %v3572 = vadd.f32 %v3484, %v3568
        %v3573 = vld [vmem:[%s575 + $0x7] sm:$0xff]
        %v3574 = vld [vmem:[%s575 + $0xf] sm:$0xff]
        %s3575 = scalar_lea.vmem [#allocation11], 144
        %v3576 = vld [vmem:[%s3575] sm:$0xff]
        %v3577 = vld [vmem:[%s3575 + $0x8] sm:$0xff]
        %v3579 = vsel %vm309, %v3573, 0
        %v3582 = vsel %vm309, %v3574, 0
        %3584 = vmatprep.subr.mxu0 0.0
        %3585 = vmatpush1.msra.mxu0 %v3576
        %3586 = vmatprep.subr.mxu0 0.0
        %3587 = vmatpush1.msra.mxu0 %v3577
        %3588 = vmatprep.subr.mxu0 0.0
        %3589 = vmatpush1.msra.mxu0 0.0
        %3590 = vmatprep.subr.mxu0 0.0
        %3591 = vmatpush1.msra.mxu0 0.0
        %3592 = vmatprep.subr.mxu0 0.0
        %3593 = vmatpush1.msra.mxu0 0.0
        %3594 = vmatprep.subr.mxu0 0.0
        %3595 = vmatpush1.msra.mxu0 0.0
        %3596 = vmatprep.subr.mxu0 0.0
        %3597 = vmatpush1.msra.mxu0 0.0
        %3598 = vmatprep.subr.mxu0 0.0
        %3599 = vmatpush1.msra.mxu0 0.0
        %3600 = vmatprep.subr.mxu0 0.0
        %3601 = vmatpush1.msra.mxu0 0.0
        %3602 = vmatprep.subr.mxu0 0.0
        %3603 = vmatpush1.msra.mxu0 0.0
        %3604 = vmatprep.subr.mxu0 0.0
        %3605 = vmatpush1.msra.mxu0 0.0
        %3606 = vmatprep.subr.mxu0 0.0
        %3607 = vmatpush1.msra.mxu0 0.0
        %3608 = vmatprep.subr.mxu0 0.0
        %3609 = vmatpush1.msra.mxu0 0.0
        %3610 = vmatprep.subr.mxu0 0.0
        %3611 = vmatpush1.msra.mxu0 0.0
        %3612 = vmatprep.subr.mxu0 0.0
        %3613 = vmatpush1.msra.mxu0 0.0
        %3614 = vmatprep.subr.mxu0 0.0
        %3615 = vmatpush1.msra.mxu0 0.0
        %3616 = vmatprep.subr.mxu0 0.0
        %3617 = vmatpush1.msra.mxu0 0.0
        %3618 = vmatprep.subr.mxu0 0.0
        %3619 = vmatpush1.msra.mxu0 0.0
        %3620 = vmatprep.subr.mxu0 0.0
        %3621 = vmatpush1.msra.mxu0 0.0
        %3622 = vmatprep.subr.mxu0 0.0
        %3623 = vmatpush1.msra.mxu0 0.0
        %3624 = vmatprep.subr.mxu0 0.0
        %3625 = vmatpush1.msra.mxu0 0.0
        %3626 = vmatprep.subr.mxu0 0.0
        %3627 = vmatpush1.msra.mxu0 0.0
        %3628 = vmatprep.subr.mxu0 0.0
        %3629 = vmatpush1.msra.mxu0 0.0
        %3630 = vmatprep.subr.mxu0 0.0
        %3631 = vmatpush1.msra.mxu0 0.0
        %3632 = vmatprep.subr.mxu0 0.0
        %3633 = vmatpush1.msra.mxu0 0.0
        %3634 = vmatprep.subr.mxu0 0.0
        %3635 = vmatpush1.msra.mxu0 0.0
        %3636 = vmatprep.subr.mxu0 0.0
        %3637 = vmatpush1.msra.mxu0 0.0
        %3638 = vmatprep.subr.mxu0 0.0
        %3639 = vmatpush1.msra.mxu0 0.0
        %3640 = vmatprep.subr.mxu0 0.0
        %3641 = vmatpush1.msra.mxu0 0.0
        %3642 = vmatprep.subr.mxu0 0.0
        %3643 = vmatpush1.msra.mxu0 0.0
        %3644 = vmatprep.subr.mxu0 0.0
        %3645 = vmatpush1.msra.mxu0 0.0
        %3646 = vmatprep.subr.mxu0 0.0
        %3647 = vmatpush1.msra.mxu0 0.0
        %3648 = vmatprep.mubr.f32.mxu0 0.0
        %3649 = vmatmul.mubr.f32.gmra.mrb[0].mxu0 %v3579
        %v3650 = vpop.f32.mrb[0].mxu0
        %v3651 = vadd.f32 0.0, %v3650
        %v3652 = vpop.f32.mrb[0].mxu0
        %3653 = vmatprep.mubr.f32.mxu0 0.0
        %3654 = vmatmul.mubr.f32.gmra.mrb[0].mxu0 %v3582
        %v3655 = vpop.f32.mrb[0].mxu0
        %v3656 = vadd.f32 0.0, %v3655
        %v3657 = vpop.f32.mrb[0].mxu0
        %3658 = vdwg.mxu0
        %v3659 = vadd.f32 %v3571, %v3651
        %v3660 = vadd.f32 %v3572, %v3656
        %v3661 = vld [vmem:[%s575 + $0x8] sm:$0xff]
        %v3662 = vld [vmem:[%s575 + $0x10] sm:$0xff]
        %s3663 = scalar_lea.vmem [#allocation11], 160
        %v3664 = vld [vmem:[%s3663] sm:$0xff]
        %v3665 = vld [vmem:[%s3663 + $0x8] sm:$0xff]
        %v3667 = vsel %vm309, %v3661, 0
        %v3670 = vsel %vm309, %v3662, 0
        %3672 = vmatprep.subr.mxu0 0.0
        %3673 = vmatpush1.msra.mxu0 %v3664
        %3674 = vmatprep.subr.mxu0 0.0
        %3675 = vmatpush1.msra.mxu0 %v3665
        %3676 = vmatprep.subr.mxu0 0.0
        %3677 = vmatpush1.msra.mxu0 0.0
        %3678 = vmatprep.subr.mxu0 0.0
        %3679 = vmatpush1.msra.mxu0 0.0
        %3680 = vmatprep.subr.mxu0 0.0
        %3681 = vmatpush1.msra.mxu0 0.0
        %3682 = vmatprep.subr.mxu0 0.0
        %3683 = vmatpush1.msra.mxu0 0.0
        %3684 = vmatprep.subr.mxu0 0.0
        %3685 = vmatpush1.msra.mxu0 0.0
        %3686 = vmatprep.subr.mxu0 0.0
        %3687 = vmatpush1.msra.mxu0 0.0
        %3688 = vmatprep.subr.mxu0 0.0
        %3689 = vmatpush1.msra.mxu0 0.0
        %3690 = vmatprep.subr.mxu0 0.0
        %3691 = vmatpush1.msra.mxu0 0.0
        %3692 = vmatprep.subr.mxu0 0.0
        %3693 = vmatpush1.msra.mxu0 0.0
        %3694 = vmatprep.subr.mxu0 0.0
        %3695 = vmatpush1.msra.mxu0 0.0
        %3696 = vmatprep.subr.mxu0 0.0
        %3697 = vmatpush1.msra.mxu0 0.0
        %3698 = vmatprep.subr.mxu0 0.0
        %3699 = vmatpush1.msra.mxu0 0.0
        %3700 = vmatprep.subr.mxu0 0.0
        %3701 = vmatpush1.msra.mxu0 0.0
        %3702 = vmatprep.subr.mxu0 0.0
        %3703 = vmatpush1.msra.mxu0 0.0
        %3704 = vmatprep.subr.mxu0 0.0
        %3705 = vmatpush1.msra.mxu0 0.0
        %3706 = vmatprep.subr.mxu0 0.0
        %3707 = vmatpush1.msra.mxu0 0.0
        %3708 = vmatprep.subr.mxu0 0.0
        %3709 = vmatpush1.msra.mxu0 0.0
        %3710 = vmatprep.subr.mxu0 0.0
        %3711 = vmatpush1.msra.mxu0 0.0
        %3712 = vmatprep.subr.mxu0 0.0
        %3713 = vmatpush1.msra.mxu0 0.0
        %3714 = vmatprep.subr.mxu0 0.0
        %3715 = vmatpush1.msra.mxu0 0.0
        %3716 = vmatprep.subr.mxu0 0.0
        %3717 = vmatpush1.msra.mxu0 0.0
        %3718 = vmatprep.subr.mxu0 0.0
        %3719 = vmatpush1.msra.mxu0 0.0
        %3720 = vmatprep.subr.mxu0 0.0
        %3721 = vmatpush1.msra.mxu0 0.0
        %3722 = vmatprep.subr.mxu0 0.0
        %3723 = vmatpush1.msra.mxu0 0.0
        %3724 = vmatprep.subr.mxu0 0.0
        %3725 = vmatpush1.msra.mxu0 0.0
        %3726 = vmatprep.subr.mxu0 0.0
        %3727 = vmatpush1.msra.mxu0 0.0
        %3728 = vmatprep.subr.mxu0 0.0
        %3729 = vmatpush1.msra.mxu0 0.0
        %3730 = vmatprep.subr.mxu0 0.0
        %3731 = vmatpush1.msra.mxu0 0.0
        %3732 = vmatprep.subr.mxu0 0.0
        %3733 = vmatpush1.msra.mxu0 0.0
        %3734 = vmatprep.subr.mxu0 0.0
        %3735 = vmatpush1.msra.mxu0 0.0
        %3736 = vmatprep.mubr.f32.mxu0 0.0
        %3737 = vmatmul.mubr.f32.gmra.mrb[0].mxu0 %v3667
        %v3738 = vpop.f32.mrb[0].mxu0
        %v3739 = vadd.f32 0.0, %v3738
        %v3740 = vpop.f32.mrb[0].mxu0
        %3741 = vmatprep.mubr.f32.mxu0 0.0
        %3742 = vmatmul.mubr.f32.gmra.mrb[0].mxu0 %v3670
        %v3743 = vpop.f32.mrb[0].mxu0
        %v3744 = vadd.f32 0.0, %v3743
        %v3745 = vpop.f32.mrb[0].mxu0
        %3746 = vdwg.mxu0
        %v3747 = vadd.f32 %v3659, %v3739
        %v3748 = vadd.f32 %v3660, %v3744
        %v3749 = vld [vmem:[%s575 + $0x9] sm:$0xff]
        %v3750 = vld [vmem:[%s575 + $0x11] sm:$0xff]
        %s3751 = scalar_lea.vmem [#allocation11], 176
        %v3752 = vld [vmem:[%s3751] sm:$0xff]
        %v3753 = vld [vmem:[%s3751 + $0x8] sm:$0xff]
        %v3755 = vsel %vm309, %v3749, 0
        %v3758 = vsel %vm309, %v3750, 0
        %3760 = vmatprep.subr.mxu0 0.0
        %3761 = vmatpush1.msra.mxu0 %v3752
        %3762 = vmatprep.subr.mxu0 0.0
        %3763 = vmatpush1.msra.mxu0 %v3753
        %3764 = vmatprep.subr.mxu0 0.0
        %3765 = vmatpush1.msra.mxu0 0.0
        %3766 = vmatprep.subr.mxu0 0.0
        %3767 = vmatpush1.msra.mxu0 0.0
        %3768 = vmatprep.subr.mxu0 0.0
        %3769 = vmatpush1.msra.mxu0 0.0
        %3770 = vmatprep.subr.mxu0 0.0
        %3771 = vmatpush1.msra.mxu0 0.0
        %3772 = vmatprep.subr.mxu0 0.0
        %3773 = vmatpush1.msra.mxu0 0.0
        %3774 = vmatprep.subr.mxu0 0.0
        %3775 = vmatpush1.msra.mxu0 0.0
        %3776 = vmatprep.subr.mxu0 0.0
        %3777 = vmatpush1.msra.mxu0 0.0
        %3778 = vmatprep.subr.mxu0 0.0
        %3779 = vmatpush1.msra.mxu0 0.0
        %3780 = vmatprep.subr.mxu0 0.0
        %3781 = vmatpush1.msra.mxu0 0.0
        %3782 = vmatprep.subr.mxu0 0.0
        %3783 = vmatpush1.msra.mxu0 0.0
        %3784 = vmatprep.subr.mxu0 0.0
        %3785 = vmatpush1.msra.mxu0 0.0
        %3786 = vmatprep.subr.mxu0 0.0
        %3787 = vmatpush1.msra.mxu0 0.0
        %3788 = vmatprep.subr.mxu0 0.0
        %3789 = vmatpush1.msra.mxu0 0.0
        %3790 = vmatprep.subr.mxu0 0.0
        %3791 = vmatpush1.msra.mxu0 0.0
        %3792 = vmatprep.subr.mxu0 0.0
        %3793 = vmatpush1.msra.mxu0 0.0
        %3794 = vmatprep.subr.mxu0 0.0
        %3795 = vmatpush1.msra.mxu0 0.0
        %3796 = vmatprep.subr.mxu0 0.0
        %3797 = vmatpush1.msra.mxu0 0.0
        %3798 = vmatprep.subr.mxu0 0.0
        %3799 = vmatpush1.msra.mxu0 0.0
        %3800 = vmatprep.subr.mxu0 0.0
        %3801 = vmatpush1.msra.mxu0 0.0
        %3802 = vmatprep.subr.mxu0 0.0
        %3803 = vmatpush1.msra.mxu0 0.0
        %3804 = vmatprep.subr.mxu0 0.0
        %3805 = vmatpush1.msra.mxu0 0.0
        %3806 = vmatprep.subr.mxu0 0.0
        %3807 = vmatpush1.msra.mxu0 0.0
        %3808 = vmatprep.subr.mxu0 0.0
        %3809 = vmatpush1.msra.mxu0 0.0
        %3810 = vmatprep.subr.mxu0 0.0
        %3811 = vmatpush1.msra.mxu0 0.0
        %3812 = vmatprep.subr.mxu0 0.0
        %3813 = vmatpush1.msra.mxu0 0.0
        %3814 = vmatprep.subr.mxu0 0.0
        %3815 = vmatpush1.msra.mxu0 0.0
        %3816 = vmatprep.subr.mxu0 0.0
        %3817 = vmatpush1.msra.mxu0 0.0
        %3818 = vmatprep.subr.mxu0 0.0
        %3819 = vmatpush1.msra.mxu0 0.0
        %3820 = vmatprep.subr.mxu0 0.0
        %3821 = vmatpush1.msra.mxu0 0.0
        %3822 = vmatprep.subr.mxu0 0.0
        %3823 = vmatpush1.msra.mxu0 0.0
        %3824 = vmatprep.mubr.f32.mxu0 0.0
        %3825 = vmatmul.mubr.f32.gmra.mrb[0].mxu0 %v3755
        %v3826 = vpop.f32.mrb[0].mxu0
        %v3827 = vadd.f32 0.0, %v3826
        %v3828 = vpop.f32.mrb[0].mxu0
        %3829 = vmatprep.mubr.f32.mxu0 0.0
        %3830 = vmatmul.mubr.f32.gmra.mrb[0].mxu0 %v3758
        %v3831 = vpop.f32.mrb[0].mxu0
        %v3832 = vadd.f32 0.0, %v3831
        %v3833 = vpop.f32.mrb[0].mxu0
        %3834 = vdwg.mxu0
        %v3835 = vadd.f32 %v3747, %v3827
        %v3836 = vadd.f32 %v3748, %v3832
        %v3837 = vld [vmem:[%s575 + $0xa] sm:$0xff]
        %v3838 = vld [vmem:[%s575 + $0x12] sm:$0xff]
        %s3839 = scalar_lea.vmem [#allocation11], 192
        %v3840 = vld [vmem:[%s3839] sm:$0xff]
        %v3841 = vld [vmem:[%s3839 + $0x8] sm:$0xff]
        %v3843 = vsel %vm309, %v3837, 0
        %v3846 = vsel %vm309, %v3838, 0
        %3848 = vmatprep.subr.mxu0 0.0
        %3849 = vmatpush1.msra.mxu0 %v3840
        %3850 = vmatprep.subr.mxu0 0.0
        %3851 = vmatpush1.msra.mxu0 %v3841
        %3852 = vmatprep.subr.mxu0 0.0
        %3853 = vmatpush1.msra.mxu0 0.0
        %3854 = vmatprep.subr.mxu0 0.0
        %3855 = vmatpush1.msra.mxu0 0.0
        %3856 = vmatprep.subr.mxu0 0.0
        %3857 = vmatpush1.msra.mxu0 0.0
        %3858 = vmatprep.subr.mxu0 0.0
        %3859 = vmatpush1.msra.mxu0 0.0
        %3860 = vmatprep.subr.mxu0 0.0
        %3861 = vmatpush1.msra.mxu0 0.0
        %3862 = vmatprep.subr.mxu0 0.0
        %3863 = vmatpush1.msra.mxu0 0.0
        %3864 = vmatprep.subr.mxu0 0.0
        %3865 = vmatpush1.msra.mxu0 0.0
        %3866 = vmatprep.subr.mxu0 0.0
        %3867 = vmatpush1.msra.mxu0 0.0
        %3868 = vmatprep.subr.mxu0 0.0
        %3869 = vmatpush1.msra.mxu0 0.0
        %3870 = vmatprep.subr.mxu0 0.0
        %3871 = vmatpush1.msra.mxu0 0.0
        %3872 = vmatprep.subr.mxu0 0.0
        %3873 = vmatpush1.msra.mxu0 0.0
        %3874 = vmatprep.subr.mxu0 0.0
        %3875 = vmatpush1.msra.mxu0 0.0
        %3876 = vmatprep.subr.mxu0 0.0
        %3877 = vmatpush1.msra.mxu0 0.0
        %3878 = vmatprep.subr.mxu0 0.0
        %3879 = vmatpush1.msra.mxu0 0.0
        %3880 = vmatprep.subr.mxu0 0.0
        %3881 = vmatpush1.msra.mxu0 0.0
        %3882 = vmatprep.subr.mxu0 0.0
        %3883 = vmatpush1.msra.mxu0 0.0
        %3884 = vmatprep.subr.mxu0 0.0
        %3885 = vmatpush1.msra.mxu0 0.0
        %3886 = vmatprep.subr.mxu0 0.0
        %3887 = vmatpush1.msra.mxu0 0.0
        %3888 = vmatprep.subr.mxu0 0.0
        %3889 = vmatpush1.msra.mxu0 0.0
        %3890 = vmatprep.subr.mxu0 0.0
        %3891 = vmatpush1.msra.mxu0 0.0
        %3892 = vmatprep.subr.mxu0 0.0
        %3893 = vmatpush1.msra.mxu0 0.0
        %3894 = vmatprep.subr.mxu0 0.0
        %3895 = vmatpush1.msra.mxu0 0.0
        %3896 = vmatprep.subr.mxu0 0.0
        %3897 = vmatpush1.msra.mxu0 0.0
        %3898 = vmatprep.subr.mxu0 0.0
        %3899 = vmatpush1.msra.mxu0 0.0
        %3900 = vmatprep.subr.mxu0 0.0
        %3901 = vmatpush1.msra.mxu0 0.0
        %3902 = vmatprep.subr.mxu0 0.0
        %3903 = vmatpush1.msra.mxu0 0.0
        %3904 = vmatprep.subr.mxu0 0.0
        %3905 = vmatpush1.msra.mxu0 0.0
        %3906 = vmatprep.subr.mxu0 0.0
        %3907 = vmatpush1.msra.mxu0 0.0
        %3908 = vmatprep.subr.mxu0 0.0
        %3909 = vmatpush1.msra.mxu0 0.0
        %3910 = vmatprep.subr.mxu0 0.0
        %3911 = vmatpush1.msra.mxu0 0.0
        %3912 = vmatprep.mubr.f32.mxu0 0.0
        %3913 = vmatmul.mubr.f32.gmra.mrb[0].mxu0 %v3843
        %v3914 = vpop.f32.mrb[0].mxu0
        %v3915 = vadd.f32 0.0, %v3914
        %v3916 = vpop.f32.mrb[0].mxu0
        %3917 = vmatprep.mubr.f32.mxu0 0.0
        %3918 = vmatmul.mubr.f32.gmra.mrb[0].mxu0 %v3846
        %v3919 = vpop.f32.mrb[0].mxu0
        %v3920 = vadd.f32 0.0, %v3919
        %v3921 = vpop.f32.mrb[0].mxu0
        %3922 = vdwg.mxu0
        %v3923 = vadd.f32 %v3835, %v3915
        %v3924 = vadd.f32 %v3836, %v3920
        %v3925 = vld [vmem:[%s575 + $0xb] sm:$0xff]
        %v3926 = vld [vmem:[%s575 + $0x13] sm:$0xff]
        %s3927 = scalar_lea.vmem [#allocation11], 208
        %v3928 = vld [vmem:[%s3927] sm:$0xff]
        %v3929 = vld [vmem:[%s3927 + $0x8] sm:$0xff]
        %v3931 = vsel %vm309, %v3925, 0
        %v3934 = vsel %vm309, %v3926, 0
        %3936 = vmatprep.subr.mxu0 0.0
        %3937 = vmatpush1.msra.mxu0 %v3928
        %3938 = vmatprep.subr.mxu0 0.0
        %3939 = vmatpush1.msra.mxu0 %v3929
        %3940 = vmatprep.subr.mxu0 0.0
        %3941 = vmatpush1.msra.mxu0 0.0
        %3942 = vmatprep.subr.mxu0 0.0
        %3943 = vmatpush1.msra.mxu0 0.0
        %3944 = vmatprep.subr.mxu0 0.0
        %3945 = vmatpush1.msra.mxu0 0.0
        %3946 = vmatprep.subr.mxu0 0.0
        %3947 = vmatpush1.msra.mxu0 0.0
        %3948 = vmatprep.subr.mxu0 0.0
        %3949 = vmatpush1.msra.mxu0 0.0
        %3950 = vmatprep.subr.mxu0 0.0
        %3951 = vmatpush1.msra.mxu0 0.0
        %3952 = vmatprep.subr.mxu0 0.0
        %3953 = vmatpush1.msra.mxu0 0.0
        %3954 = vmatprep.subr.mxu0 0.0
        %3955 = vmatpush1.msra.mxu0 0.0
        %3956 = vmatprep.subr.mxu0 0.0
        %3957 = vmatpush1.msra.mxu0 0.0
        %3958 = vmatprep.subr.mxu0 0.0
        %3959 = vmatpush1.msra.mxu0 0.0
        %3960 = vmatprep.subr.mxu0 0.0
        %3961 = vmatpush1.msra.mxu0 0.0
        %3962 = vmatprep.subr.mxu0 0.0
        %3963 = vmatpush1.msra.mxu0 0.0
        %3964 = vmatprep.subr.mxu0 0.0
        %3965 = vmatpush1.msra.mxu0 0.0
        %3966 = vmatprep.subr.mxu0 0.0
        %3967 = vmatpush1.msra.mxu0 0.0
        %3968 = vmatprep.subr.mxu0 0.0
        %3969 = vmatpush1.msra.mxu0 0.0
        %3970 = vmatprep.subr.mxu0 0.0
        %3971 = vmatpush1.msra.mxu0 0.0
        %3972 = vmatprep.subr.mxu0 0.0
        %3973 = vmatpush1.msra.mxu0 0.0
        %3974 = vmatprep.subr.mxu0 0.0
        %3975 = vmatpush1.msra.mxu0 0.0
        %3976 = vmatprep.subr.mxu0 0.0
        %3977 = vmatpush1.msra.mxu0 0.0
        %3978 = vmatprep.subr.mxu0 0.0
        %3979 = vmatpush1.msra.mxu0 0.0
        %3980 = vmatprep.subr.mxu0 0.0
        %3981 = vmatpush1.msra.mxu0 0.0
        %3982 = vmatprep.subr.mxu0 0.0
        %3983 = vmatpush1.msra.mxu0 0.0
        %3984 = vmatprep.subr.mxu0 0.0
        %3985 = vmatpush1.msra.mxu0 0.0
        %3986 = vmatprep.subr.mxu0 0.0
        %3987 = vmatpush1.msra.mxu0 0.0
        %3988 = vmatprep.subr.mxu0 0.0
        %3989 = vmatpush1.msra.mxu0 0.0
        %3990 = vmatprep.subr.mxu0 0.0
        %3991 = vmatpush1.msra.mxu0 0.0
        %3992 = vmatprep.subr.mxu0 0.0
        %3993 = vmatpush1.msra.mxu0 0.0
        %3994 = vmatprep.subr.mxu0 0.0
        %3995 = vmatpush1.msra.mxu0 0.0
        %3996 = vmatprep.subr.mxu0 0.0
        %3997 = vmatpush1.msra.mxu0 0.0
        %3998 = vmatprep.subr.mxu0 0.0
        %3999 = vmatpush1.msra.mxu0 0.0
        %4000 = vmatprep.mubr.f32.mxu0 0.0
        %4001 = vmatmul.mubr.f32.gmra.mrb[0].mxu0 %v3931
        %v4002 = vpop.f32.mrb[0].mxu0
        %v4003 = vadd.f32 0.0, %v4002
        %v4004 = vpop.f32.mrb[0].mxu0
        %4005 = vmatprep.mubr.f32.mxu0 0.0
        %4006 = vmatmul.mubr.f32.gmra.mrb[0].mxu0 %v3934
        %v4007 = vpop.f32.mrb[0].mxu0
        %v4008 = vadd.f32 0.0, %v4007
        %v4009 = vpop.f32.mrb[0].mxu0
        %4010 = vdwg.mxu0
        %v4011 = vadd.f32 %v3923, %v4003
        %v4012 = vadd.f32 %v3924, %v4008
        %v4013 = vxor.u32 %v4011, 2147483648
        %v4014 = vxor.u32 %v4012, 2147483648
        %v4015 = vmul.f32 %v4013, 1.442695
        %v4016 = vpow.pop %v4015
        %v4017 = vmul.f32 %v4014, 1.442695
        %v4018 = vpow.pop %v4017
        %v4019 = vadd.f32 %v4016, 1.0
        %v4020 = vadd.f32 %v4018, 1.0
        %v4021 = vrcp.pop %v4019
        %v4022 = vmul.f32 1.0, %v4021
        %v4023 = vrcp.pop %v4020
        %v4024 = vmul.f32 1.0, %v4023
        %v4025 = vmul.f32 %v4022, 0.33333334
        %v4026 = vmul.f32 %v4024, 0.33333334
        %v4027 = vlaneseq
        %v4028 = vshrl.u32 %v4027, 7
        %v4029 = vadd.s32 %v4028, 8
        %vm4030 = vcmp.eq.s32.totalorder %v4028, %v452
        %vm4031 = vcmp.eq.s32.totalorder %v4029, %v452
        %v4032 = vsel %vm4030, 1, 0
        %v4033 = vsel %vm4031, 1, 0
        %v4034 = vcvt.s32.f32 %v4032
        %v4035 = vcvt.s32.f32 %v4033
        %v4037 = vsel %vm309, %v4034, 0
        %v4040 = vsel %vm309, %v4035, 0
        %v4043 = vsel %vm309, %v2779, 0
        %4045 = vmatprep.subr.mxu0 0.0
        %4046 = vmatpush1.xpose.msra.mxu0 %v4043
        %4047 = vmatprep.subr.mxu0 0.0
        %4048 = vmatpush1.xpose.msra.mxu0 0.0
        %4049 = vmatprep.subr.mxu0 0.0
        %4050 = vmatpush1.xpose.msra.mxu0 0.0
        %4051 = vmatprep.subr.mxu0 0.0
        %4052 = vmatpush1.xpose.msra.mxu0 0.0
        %4053 = vmatprep.subr.mxu0 0.0
        %4054 = vmatpush1.xpose.msra.mxu0 0.0
        %4055 = vmatprep.subr.mxu0 0.0
        %4056 = vmatpush1.xpose.msra.mxu0 0.0
        %4057 = vmatprep.subr.mxu0 0.0
        %4058 = vmatpush1.xpose.msra.mxu0 0.0
        %4059 = vmatprep.subr.mxu0 0.0
        %4060 = vmatpush1.xpose.msra.mxu0 0.0
        %4061 = vmatprep.subr.mxu0 0.0
        %4062 = vmatpush1.xpose.msra.mxu0 0.0
        %4063 = vmatprep.subr.mxu0 0.0
        %4064 = vmatpush1.xpose.msra.mxu0 0.0
        %4065 = vmatprep.subr.mxu0 0.0
        %4066 = vmatpush1.xpose.msra.mxu0 0.0
        %4067 = vmatprep.subr.mxu0 0.0
        %4068 = vmatpush1.xpose.msra.mxu0 0.0
        %4069 = vmatprep.subr.mxu0 0.0
        %4070 = vmatpush1.xpose.msra.mxu0 0.0
        %4071 = vmatprep.subr.mxu0 0.0
        %4072 = vmatpush1.xpose.msra.mxu0 0.0
        %4073 = vmatprep.subr.mxu0 0.0
        %4074 = vmatpush1.xpose.msra.mxu0 0.0
        %4075 = vmatprep.subr.mxu0 0.0
        %4076 = vmatpush1.xpose.msra.mxu0 0.0
        %4077 = vmatprep.subr.mxu0 0.0
        %4078 = vmatpush1.xpose.msra.mxu0 0.0
        %4079 = vmatprep.subr.mxu0 0.0
        %4080 = vmatpush1.xpose.msra.mxu0 0.0
        %4081 = vmatprep.subr.mxu0 0.0
        %4082 = vmatpush1.xpose.msra.mxu0 0.0
        %4083 = vmatprep.subr.mxu0 0.0
        %4084 = vmatpush1.xpose.msra.mxu0 0.0
        %4085 = vmatprep.subr.mxu0 0.0
        %4086 = vmatpush1.xpose.msra.mxu0 0.0
        %4087 = vmatprep.subr.mxu0 0.0
        %4088 = vmatpush1.xpose.msra.mxu0 0.0
        %4089 = vmatprep.subr.mxu0 0.0
        %4090 = vmatpush1.xpose.msra.mxu0 0.0
        %4091 = vmatprep.subr.mxu0 0.0
        %4092 = vmatpush1.xpose.msra.mxu0 0.0
        %4093 = vmatprep.subr.mxu0 0.0
        %4094 = vmatpush1.xpose.msra.mxu0 0.0
        %4095 = vmatprep.subr.mxu0 0.0
        %4096 = vmatpush1.xpose.msra.mxu0 0.0
        %4097 = vmatprep.subr.mxu0 0.0
        %4098 = vmatpush1.xpose.msra.mxu0 0.0
        %4099 = vmatprep.subr.mxu0 0.0
        %4100 = vmatpush1.xpose.msra.mxu0 0.0
        %4101 = vmatprep.subr.mxu0 0.0
        %4102 = vmatpush1.xpose.msra.mxu0 0.0
        %4103 = vmatprep.subr.mxu0 0.0
        %4104 = vmatpush1.xpose.msra.mxu0 0.0
        %4105 = vmatprep.subr.mxu0 0.0
        %4106 = vmatpush1.xpose.msra.mxu0 0.0
        %4107 = vmatprep.subr.mxu0 0.0
        %4108 = vmatpush1.xpose.msra.mxu0 0.0
        %4109 = vmatprep.mubr.f32.mxu0 0.0
        %4110 = vmatmul.mubr.f32.gmra.mrb[0].mxu0 %v4037
        %v4111 = vpop.f32.mrb[0].mxu0
        %v4112 = vadd.f32 0.0, %v4111
        %v4113 = vpop.f32.mrb[0].mxu0
        %4114 = vmatprep.mubr.f32.mxu0 0.0
        %4115 = vmatmul.mubr.f32.gmra.mrb[0].mxu0 %v4040
        %v4116 = vpop.f32.mrb[0].mxu0
        %v4117 = vadd.f32 0.0, %v4116
        %v4118 = vpop.f32.mrb[0].mxu0
        %4119 = vdwg.mxu0
        %v4120 = vld [vmem:[%s246] sm:$0xff]
        %v4121 = vld [vmem:[%s246 + $0x8] sm:$0xff]
        %v4122 = vlaneseq
        %v4123 = vshrl.u32 %v4122, 7
        %v4124 = vsub.s32 0, %v4123
        %v4125 = vrot.slane %v1678, %v4124
        %v4126 = vadd.f32 %v4025, %v4125
        %v4127 = vadd.f32 %v4026, %v4125
        %4129 = vset.pattern.permute.xlu0 0
        %4130 = vperm.xlu0 %4129, %v4112
        %v4131 = vpop.permute.xlu0 %4130
        %4134 = vset.pattern.permute.xlu0 0
        %4135 = vperm.xlu0 %4134, %v4117
        %v4136 = vpop.permute.xlu0 %4135
        %v4138 = vadd.f32 %v4126, %v4131
        %v4139 = vadd.f32 %v4127, %v4136
        %v4140 = vmul.f32 %v4120, %v4138
        %v4141 = vmul.f32 %v4121, %v4139
        %4142 = vst.msk [vmem:[%s285] sm:$0xff] %vm309, %v4140
        %4143 = vst.msk [vmem:[%s285 + $0x8] sm:$0xff] %vm309, %v4141
        %s4144 = scalar_lea.vmem %s246, 16 [#allocation5]
        %v4145 = vld [vmem:[%s4144] sm:$0xff]
        %v4146 = vld [vmem:[%s4144 + $0x8] sm:$0xff]
        %v4147 = vlaneseq
        %v4148 = vshrl.u32 %v4147, 7
        %v4149 = vsub.s32 1, %v4148
        %v4150 = vrot.slane %v1678, %v4149
        %v4151 = vadd.f32 %v4025, %v4150
        %v4152 = vadd.f32 %v4026, %v4150
        %4153 = vset.pattern.permute.xlu0 1
        %4154 = vperm.xlu0 %4153, %v4112
        %v4155 = vpop.permute.xlu0 %4154
        %4157 = vset.pattern.permute.xlu0 1
        %4158 = vperm.xlu0 %4157, %v4117
        %v4159 = vpop.permute.xlu0 %4158
        %v4161 = vadd.f32 %v4151, %v4155
        %v4162 = vadd.f32 %v4152, %v4159
        %v4163 = vmul.f32 %v4145, %v4161
        %v4164 = vmul.f32 %v4146, %v4162
        %s4165 = scalar_lea.vmem %s285, 16 [#allocation13]
        %4166 = vst.msk [vmem:[%s4165] sm:$0xff] %vm309, %v4163
        %4167 = vst.msk [vmem:[%s4165 + $0x8] sm:$0xff] %vm309, %v4164
        %s4168 = scalar_lea.vmem %s246, 32 [#allocation5]
        %v4169 = vld [vmem:[%s4168] sm:$0xff]
        %v4170 = vld [vmem:[%s4168 + $0x8] sm:$0xff]
        %v4171 = vlaneseq
        %v4172 = vshrl.u32 %v4171, 7
        %v4173 = vsub.s32 2, %v4172
        %v4174 = vrot.slane %v1678, %v4173
        %v4175 = vadd.f32 %v4025, %v4174
        %v4176 = vadd.f32 %v4026, %v4174
        %4177 = vset.pattern.permute.xlu0 2
        %4178 = vperm.xlu0 %4177, %v4112
        %v4179 = vpop.permute.xlu0 %4178
        %4181 = vset.pattern.permute.xlu0 2
        %4182 = vperm.xlu0 %4181, %v4117
        %v4183 = vpop.permute.xlu0 %4182
        %v4185 = vadd.f32 %v4175, %v4179
        %v4186 = vadd.f32 %v4176, %v4183
        %v4187 = vmul.f32 %v4169, %v4185
        %v4188 = vmul.f32 %v4170, %v4186
        %s4189 = scalar_lea.vmem %s285, 32 [#allocation13]
        %4190 = vst.msk [vmem:[%s4189] sm:$0xff] %vm309, %v4187
        %4191 = vst.msk [vmem:[%s4189 + $0x8] sm:$0xff] %vm309, %v4188
        %s4192 = scalar_lea.vmem %s246, 48 [#allocation5]
        %v4193 = vld [vmem:[%s4192] sm:$0xff]
        %v4194 = vld [vmem:[%s4192 + $0x8] sm:$0xff]
        %v4195 = vlaneseq
        %v4196 = vshrl.u32 %v4195, 7
        %v4197 = vsub.s32 3, %v4196
        %v4198 = vrot.slane %v1678, %v4197
        %v4199 = vadd.f32 %v4025, %v4198
        %v4200 = vadd.f32 %v4026, %v4198
        %4201 = vset.pattern.permute.xlu0 3
        %4202 = vperm.xlu0 %4201, %v4112
        %v4203 = vpop.permute.xlu0 %4202
        %4205 = vset.pattern.permute.xlu0 3
        %4206 = vperm.xlu0 %4205, %v4117
        %v4207 = vpop.permute.xlu0 %4206
        %v4209 = vadd.f32 %v4199, %v4203
        %v4210 = vadd.f32 %v4200, %v4207
        %v4211 = vmul.f32 %v4193, %v4209
        %v4212 = vmul.f32 %v4194, %v4210
        %s4213 = scalar_lea.vmem %s285, 48 [#allocation13]
        %4214 = vst.msk [vmem:[%s4213] sm:$0xff] %vm309, %v4211
        %4215 = vst.msk [vmem:[%s4213 + $0x8] sm:$0xff] %vm309, %v4212
        %s4216 = sand.u32 %s142, 1
        %s4217 = scalar_lea.sflag [#allocation7], %s4216
        %s4218 = sand.u32 %s142, 1
        %s4219 = smul.addr %s4218, 64
        %s4220 = scalar_lea.vmem [#allocation13], %s4219
        // Predicated region
        $region57: #{tpu_custom_call.1} parent=39 // pred_check
          %p4221 = pneg %p152
        $region58: #{tpu_custom_call.1} parent=39 // pred_check_branch
          %4223 = sbr.rel (%p4221) target = $region60
        $region59: #{tpu_custom_call.1} parent=39 // pred_region
          %s4225 = ssub.s32 1024, 1024
          %4226 = vsyncadd %s4217, %s4225
          %s4227 = smul.addr %s24, 8
          %s4228 = smul.addr %s4227, 128
          %s4229 = scalar_lea.hbm %s5, %s4228
          %s4230 = sshll.u32 %s4220, 4
          %s4231 = int_to_ptr.vmem [resolvable:$true] %s4230
          %4236 = dma.vmem_to_hbm [thread:$0]  %s4231, 1024, %s4229, %s4217, 128, 128, 8
        $region60: #{tpu_custom_call.1} parent=39 // pred_fallthru
          _
      $region40: #{tpu_custom_call.1} parent=5 // pred_fallthru
        _
      %p4237 = scmp.le.s32.totalorder 2, %s19
      // Predicated region
      $region61: #{tpu_custom_call.1} parent=5 // pred_check
        %p4238 = pneg %p4237
      $region62: #{tpu_custom_call.1} parent=5 // pred_check_branch
        %4240 = sbr.rel (%p4238) target = $region64
      $region63: #{tpu_custom_call.1} parent=5 // pred_region
        %s4241 = ssub.s32 %s19, 2
        // Predicated region
        $region65: #{tpu_custom_call.1} parent=63 // pred_check
          %p4242 = pneg %p158
        $region66: #{tpu_custom_call.1} parent=63 // pred_check_branch
          %4244 = sbr.rel (%p4242) target = $region68
        $region67: #{tpu_custom_call.1} parent=63 // pred_region
          %s4245 = sand.u32 %s143, 1
          %s4246 = scalar_lea.sflag [#allocation7], %s4245
          %s4247 = sand.u32 %s143, 1
          %s4248 = smul.addr %s4247, 64
          %s4249 = scalar_lea.vmem [#allocation13], %s4248
          %4250 = dma.done %s4246, 1024
        $region68: #{tpu_custom_call.1} parent=63 // pred_fallthru
          _
      $region64: #{tpu_custom_call.1} parent=5 // pred_fallthru
        _
    $region6: #{tpu_custom_call.1} parent=1 // loop_footer
      %s23 = sadd.s32 1, %s19
    $region7: #{tpu_custom_call.1} parent=1 // loop_footer_branch
      %18 = sbr.rel target = $region3
    $region8: #{tpu_custom_call.1} parent=1 // loop_exit
      _
    %4251 = vsyncpa [#allocation6], 1
    %s4252 = scalar_lea.sflag [#allocation6], 1
    %4253 = vsyncpa %s4252, 1
    %4254 = vsyncpa [#allocation10], 1
    %4255 = vsyncpa [#allocation7], 1
    %s4256 = scalar_lea.sflag [#allocation7], 1
    %4257 = vsyncpa %s4256, 1
    %4258 = vsyncpa [#allocation8], 1
    %s4259 = scalar_lea.sflag [#allocation8], 1
    %4260 = vsyncpa %s4259, 1

</llo_original>
